<compile_context>
chip_gen: v6e
topology: v6e:2x2x1
jax: 0.10.0
libtpu: 0.0.40
codegen_flags: <defaults>
</compile_context>

<pallas_src>
import math

import jax
import jax.numpy as jnp
from jax.experimental import pallas as pl
from jax.experimental.pallas import tpu as pltpu


def _vmem_spec():
    return pl.BlockSpec(memory_space=pltpu.MemorySpace.VMEM)


# ---------------------------------------------------------------------------
# Fused forward kernel (factory closes over the static config)
# ---------------------------------------------------------------------------
def make_invariant_lstm_kernel(cfg):
    S = cfg['history_size']
    H = cfg['dim_hidden'][0]
    L = cfg['num_layers']
    G = 4 * H

    def kernel(x_ref, small_ref, inv_ref,
               mw0, mb0, mw1, mb1, mw2, mb2, mw3, mb3,
               *rest):
        # rest = [ (w_ih, w_hh, b) * L , w_lin_lstm, w_lin_small, b_lin, logits, sig ]
        lstm_refs = [(rest[3 * l], rest[3 * l + 1], rest[3 * l + 2]) for l in range(L)]
        wl_lstm_ref = rest[3 * L]
        wl_small_ref = rest[3 * L + 1]
        blin_ref = rest[3 * L + 2]
        logits_ref, sig_ref = rest[3 * L + 3], rest[3 * L + 4]

        B = small_ref.shape[0]
        f32 = jnp.float32

        # ---- fused (block-diagonal) Embedding MLPs: one matmul per depth level -----
        h = small_ref[...]                                   # (B, enc+pos+F*mask)
        mlp = [(mw0, mb0), (mw1, mb1), (mw2, mb2), (mw3, mb3)]
        for i, (w, b) in enumerate(mlp):
            h = jnp.dot(h, w[...], preferred_element_type=f32) + b[...]
            if i < len(mlp) - 1:
                h = jnp.maximum(h, 0.0)
        branch_out = h                                       # (B, 6) = [enc | pos | mask(F)]

        # small-feature contribution to the final linear (single dot, bias folded here)
        small_cat = jnp.concatenate([branch_out, inv_ref[...]], axis=1)   # (B, 12)
        acc = (jnp.dot(small_cat, wl_small_ref[...], preferred_element_type=f32)
               + blin_ref[...])                              # (B, OUT)

        # ---- layer-major stacked LSTM ----------------------------------------------
        # hoisted lane constants: sigmoid(z) = 0.5*tanh(0.5 z)+0.5 on i/f/o lanes,
        # plain tanh on the g lanes -> one EUP pass per cell covers all four gates.
        lane = jax.lax.broadcasted_iota(jnp.int32, (B, G), 1)
        g_lanes = (lane >= 2 * H) & (lane < 3 * H)
        gscale = jnp.where(g_lanes, jnp.float32(1.0), jnp.float32(0.5))
        goff = jnp.where(g_lanes, jnp.float32(0.0), jnp.float32(0.5))

        layer_in = x_ref[...]                                # (S*B, in_dim), time-major
        outs = None
        for l in range(L):
            w_ih = lstm_refs[l][0][...]
            w_hh = lstm_refs[l][1][...]
            b = lstm_refs[l][2][...]
            # batched input projection for all timesteps, bias folded in (off the
            # serial recurrence path)
            gx = jnp.dot(layer_in, w_ih, preferred_element_type=f32) + b    # (S*B, 4H)

            h_t = jnp.zeros((B, H), f32)
            c_t = jnp.zeros((B, H), f32)
            outs = []
            for t in range(S):                               # static unroll (S small)
                gates = gx[t * B:(t + 1) * B, :] + jnp.dot(
                    h_t, w_hh, preferred_element_type=f32)   # (B, 4H)
                act = jnp.tanh(gates * gscale) * gscale + goff
                i_g = act[:, 0 * H:1 * H]
                f_g = act[:, 1 * H:2 * H]
                g_g = act[:, 2 * H:3 * H]
                o_g = act[:, 3 * H:4 * H]
                c_t = f_g * c_t + i_g * g_g
                h_t = o_g * jnp.tanh(c_t)
                outs.append(h_t)
            if l < L - 1:
                layer_in = jnp.concatenate(outs, axis=0)     # (S*B, H), time-major

        # h_flat[:, t*H:(t+1)*H] = h_t  -> matches lstm_out.reshape(B, S*H)
        h_flat = jnp.concatenate(outs, axis=1)               # (B, S*H)
        acc = acc + jnp.dot(h_flat, wl_lstm_ref[...], preferred_element_type=f32)

        logits_ref[...] = acc.astype(logits_ref.dtype)
        sig_ref[...] = (1.0 / (1.0 + jnp.exp(-acc))).astype(sig_ref.dtype)

    return kernel


# ---------------------------------------------------------------------------
# Wrapper: layout plumbing + parameter packing outside the kernel
# ---------------------------------------------------------------------------
def _block_diag(blocks):
    rows = sum(b.shape[0] for b in blocks)
    cols = sum(b.shape[1] for b in blocks)
    out = jnp.zeros((rows, cols), jnp.float32)
    r = c = 0
    for blk in blocks:
        out = out.at[r:r + blk.shape[0], c:c + blk.shape[1]].set(blk)
        r += blk.shape[0]
        c += blk.shape[1]
    return out


def _pack_mlps(params):
    """Block-diagonalize ffn1/ffn2/ffn3 so each MLP depth level is one matmul."""
    depth = len(params['ffn1'])
    packed = []
    for d in range(depth):
        ws = [params[name][d][0] for name in ('ffn1', 'ffn2', 'ffn3')]
        bs = [params[name][d][1] for name in ('ffn1', 'ffn2', 'ffn3')]
        packed.append((_block_diag(ws), jnp.concatenate(bs, axis=1)))
    return packed


def invariant_lstm_forward(params, cfg, x, tgt, enc, pos_enc, masks, mat_inv, soc_inv):
    """Mirrors InvariantLSTM.forward; `tgt` is accepted but unused (as in the module)."""
    del tgt
    B = x.shape[0]
    S, F, MD = cfg['history_size'], cfg['n_features'], cfg['mask_dim']
    OUT = cfg['out_features'] * cfg['out_seq_len']

    # layout plumbing done once, outside the kernel
    x_tm = jnp.transpose(x, (1, 0, 2)).reshape(S * B, F)      # time-major rows
    mask_flat = masks.reshape(B, F * MD)                      # masks.view(-1, F*mask_dim)
    small_in = jnp.concatenate([enc, pos_enc, mask_flat], axis=1)
    inv = jnp.concatenate([mat_inv, soc_inv], axis=1)

    mlp_packed = _pack_mlps(params)
    w_small = jnp.concatenate([params['w_lin_enc'], params['w_lin_pos'],
                               params['w_lin_mask'], params['w_lin_mat'],
                               params['w_lin_soc']], axis=0)  # (2 + F + 2K, OUT)

    args = [x_tm, small_in, inv]
    for (w, b) in mlp_packed:
        args += [w, b]
    for (w_ih, w_hh, b) in params['lstm']:
        args += [w_ih, w_hh, b]
    args += [params['w_lin_lstm'], w_small, params['b_lin']]

    kernel = make_invariant_lstm_kernel(cfg)
    logits, sig = pl.pallas_call(
        kernel,
        out_shape=(jax.ShapeDtypeStruct((B, OUT), jnp.float32),
                   jax.ShapeDtypeStruct((B, OUT), jnp.float32)),
        in_specs=[_vmem_spec()] * len(args),
        out_specs=(_vmem_spec(), _vmem_spec()),
    )(*args)
    out = sig.reshape(-1, cfg['out_seq_len'])                 # x.view(-1, out_seq)
    return logits, out


# ---------------------------------------------------------------------------
# Parameter init (deterministic, PyTorch-style uniform bounds)
# ---------------------------------------------------------------------------
def _uniform(key, shape, bound):
    return jax.random.uniform(key, shape, jnp.float32, -bound, bound)


def init_embedding(key, n_in, n_out, layer_size):
    dims = [n_in] + list(layer_size) + [n_out]
    ks = jax.random.split(key, 2 * (len(dims) - 1))
    weights = []
    for i in range(len(dims) - 1):
        bound = 1.0 / math.sqrt(dims[i])
        weights.append((_uniform(ks[2 * i], (dims[i], dims[i + 1]), bound),
                        _uniform(ks[2 * i + 1], (1, dims[i + 1]), bound)))
    return weights


def init_lstm(key, n_features, H, L):
    ks = jax.random.split(key, 4 * L)
    bound = 1.0 / math.sqrt(H)
    layers = []
    for l in range(L):
        in_dim = n_features if l == 0 else H
        w_ih = _uniform(ks[4 * l + 0], (in_dim, 4 * H), bound)
        w_hh = _uniform(ks[4 * l + 1], (H, 4 * H), bound)
        b = (_uniform(ks[4 * l + 2], (1, 4 * H), bound)
             + _uniform(ks[4 * l + 3], (1, 4 * H), bound))    # b_ih + b_hh folded
        layers.append((w_ih, w_hh, b))
    return layers


def init_final_linear(key, cfg):
    S, H = cfg['history_size'], cfg['dim_hidden'][0]
    F, K = cfg['n_features'], cfg['out_invar']
    OUT = cfg['out_features'] * cfg['out_seq_len']
    final_in_dim = H * S + F + 2 * K + 2
    bound = 1.0 / math.sqrt(final_in_dim)
    ks = jax.random.split(key, 7)
    return dict(
        w_lin_lstm=_uniform(ks[0], (S * H, OUT), bound),
        w_lin_enc=_uniform(ks[1], (1, OUT), bound),
        w_lin_pos=_uniform(ks[2], (1, OUT), bound),
        w_lin_mask=_uniform(ks[3], (F, OUT), bound),
        w_lin_mat=_uniform(ks[4], (K, OUT), bound),
        w_lin_soc=_uniform(ks[5], (K, OUT), bound),
        b_lin=_uniform(ks[6], (1, OUT), bound),
    )


# ---------------------------------------------------------------------------
# Pure-JAX reference for correctness check
# ---------------------------------------------------------------------------
def _ref_embedding(x, weights):
    n = len(weights)
    for i, (w, b) in enumerate(weights):
        x = x @ w + b
        if i < n - 1:
            x = jnp.maximum(x, 0.0)
    return x


def _ref_lstm(x, layers, H, L):
    B, S, _ = x.shape
    h = [jnp.zeros((B, H), jnp.float32) for _ in range(L)]
    c = [jnp.zeros((B, H), jnp.float32) for _ in range(L)]
    outs = []
    for t in range(S):
        inp = x[:, t, :]
        for l in range(L):
            w_ih, w_hh, b = layers[l]
            gates = inp @ w_ih + h[l] @ w_hh + b
            i_g = jax.nn.sigmoid(gates[:, 0 * H:1 * H])
            f_g = jax.nn.sigmoid(gates[:, 1 * H:2 * H])
            g_g = jnp.tanh(gates[:, 2 * H:3 * H])
            o_g = jax.nn.sigmoid(gates[:, 3 * H:4 * H])
            c[l] = f_g * c[l] + i_g * g_g
            h[l] = o_g * jnp.tanh(c[l])
            inp = h[l]
        outs.append(h[L - 1])
    return jnp.stack(outs, axis=1)


def _ref_forward(params, cfg, x, tgt, enc, pos_enc, masks, mat_inv, soc_inv):
    del tgt
    B = x.shape[0]
    H, L = cfg['dim_hidden'][0], cfg['num_layers']
    F, MD = cfg['n_features'], cfg['mask_dim']
    lstm_out = _ref_lstm(x, params['lstm'], H, L)
    x_flat = lstm_out.reshape(B, -1)
    mask_flat = masks.reshape(B, F * MD)
    enc_logits = _ref_embedding(enc, params['ffn1'])
    mat_logits = _ref_embedding(pos_enc, params['ffn2'])
    mask_logits = _ref_embedding(mask_flat, params['ffn3'])
    out_cat = jnp.concatenate(
        [x_flat, enc_logits, mat_logits, mask_logits, mat_inv, soc_inv], axis=1)
    W = jnp.concatenate(
        [params['w_lin_lstm'], params['w_lin_enc'], params['w_lin_pos'],
         params['w_lin_mask'], params['w_lin_mat'], params['w_lin_soc']], axis=0)
    logits = out_cat @ W + params['b_lin']
    out = jax.nn.sigmoid(logits).reshape(-1, cfg['out_seq_len'])
    return logits, out


# ---------------------------------------------------------------------------
if __name__ == "__main__":
    hparams = {
        'n_features': 4,
        'history_size': 8,       # seq_len
        'dim_hidden': [32],      # n_hidden = 32  ->  4H = 128 (one full lane-tile)
        'num_layers': 2,
        'out_seq_len': 4,
        'out_features': 2,
        'enc_dim': 6,
        'pos_enc': 5,
        'mask_dim': 4,
        'out_invar': 3,          # width of mat_inv / soc_inv
    }
    B = 2
    S, F = hparams['history_size'], hparams['n_features']
    H, L = hparams['dim_hidden'][0], hparams['num_layers']
    OUT = hparams['out_features'] * hparams['out_seq_len']

    key = jax.random.PRNGKey(0)
    (k_par, k_x, k_tgt, k_enc, k_pos, k_mask, k_mat, k_soc) = jax.random.split(key, 8)
    kp = jax.random.split(k_par, 5)

    params = {
        'ffn1': init_embedding(kp[0], hparams['enc_dim'], 1, [8, 16, 32]),
        'ffn2': init_embedding(kp[1], hparams['pos_enc'], 1, [8, 16, 32]),
        'ffn3': init_embedding(kp[2], F * hparams['mask_dim'], F, [128, 64, 32]),
        'lstm': init_lstm(kp[3], F, H, L),
    }
    params.update(init_final_linear(kp[4], hparams))

    x       = jax.random.normal(k_x, (B, S, F), jnp.float32)
    tgt     = jax.random.normal(k_tgt, (B, hparams['out_seq_len']), jnp.float32)  # unused
    enc     = jax.random.normal(k_enc, (B, hparams['enc_dim']), jnp.float32)
    pos_enc = jax.random.normal(k_pos, (B, hparams['pos_enc']), jnp.float32)
    masks   = (jax.random.uniform(k_mask, (B, F, hparams['mask_dim'])) > 0.5).astype(jnp.float32)
    mat_inv = jax.random.normal(k_mat, (B, hparams['out_invar']), jnp.float32)
    soc_inv = jax.random.normal(k_soc, (B, hparams['out_invar']), jnp.float32)

    logits, out = invariant_lstm_forward(params, hparams, x, tgt, enc, pos_enc,
                                         masks, mat_inv, soc_inv)
    logits = jax.block_until_ready(logits)
    out = jax.block_until_ready(out)

    ref_logits, ref_out = _ref_forward(params, hparams, x, tgt, enc, pos_enc,
                                       masks, mat_inv, soc_inv)

    assert logits.shape == (B, OUT), logits.shape
    assert out.shape == (B * hparams['out_features'], hparams['out_seq_len']), out.shape
    assert jnp.allclose(logits, ref_logits, atol=1e-4, rtol=1e-4), (logits, ref_logits)
    assert jnp.allclose(out, ref_out, atol=1e-5, rtol=1e-4), (out, ref_out)
    print("KERNEL_OK")
</pallas_src>

<mosaic_0001>
module attributes {stable_mosaic.version = 11 : i64} {
  func.func @kernel(%arg0: memref<16x4xf32, #tpu.memory_space<vmem>>, %arg1: memref<2x27xf32, #tpu.memory_space<vmem>>, %arg2: memref<2x6xf32, #tpu.memory_space<vmem>>, %arg3: memref<27x144xf32, #tpu.memory_space<vmem>>, %arg4: memref<1x144xf32, #tpu.memory_space<vmem>>, %arg5: memref<144x96xf32, #tpu.memory_space<vmem>>, %arg6: memref<1x96xf32, #tpu.memory_space<vmem>>, %arg7: memref<96x96xf32, #tpu.memory_space<vmem>>, %arg8: memref<1x96xf32, #tpu.memory_space<vmem>>, %arg9: memref<96x6xf32, #tpu.memory_space<vmem>>, %arg10: memref<1x6xf32, #tpu.memory_space<vmem>>, %arg11: memref<4x128xf32, #tpu.memory_space<vmem>>, %arg12: memref<32x128xf32, #tpu.memory_space<vmem>>, %arg13: memref<1x128xf32, #tpu.memory_space<vmem>>, %arg14: memref<32x128xf32, #tpu.memory_space<vmem>>, %arg15: memref<32x128xf32, #tpu.memory_space<vmem>>, %arg16: memref<1x128xf32, #tpu.memory_space<vmem>>, %arg17: memref<256x8xf32, #tpu.memory_space<vmem>>, %arg18: memref<12x8xf32, #tpu.memory_space<vmem>>, %arg19: memref<1x8xf32, #tpu.memory_space<vmem>>, %arg20: memref<2x8xf32, #tpu.memory_space<vmem>>, %arg21: memref<2x8xf32, #tpu.memory_space<vmem>>) attributes {dimension_semantics = [], scalar_prefetch = 0 : i64, scratch_operands = 0 : i64, tpu.core_type = #tpu.core_type<tc>} {
    %c0 = arith.constant 0 : index
    %c0_0 = arith.constant 0 : index
    %0 = vector.load %arg1[%c0, %c0_0] : memref<2x27xf32, #tpu.memory_space<vmem>>, vector<2x27xf32>
    %c0_1 = arith.constant 0 : index
    %c0_2 = arith.constant 0 : index
    %1 = vector.load %arg3[%c0_1, %c0_2] : memref<27x144xf32, #tpu.memory_space<vmem>>, vector<27x144xf32>
    %cst = arith.constant dense<0.000000e+00> : vector<2x144xf32>
    %2 = tpu.matmul %0, %1, %cst {dimension_numbers = #tpu.dot_dimension_numbers<[1], [0], [0], [1], [0, 0, 1, 1], [], []>} : vector<2x27xf32>, vector<27x144xf32>, vector<2x144xf32> -> vector<2x144xf32>
    %c0_3 = arith.constant 0 : index
    %c0_4 = arith.constant 0 : index
    %3 = vector.load %arg4[%c0_3, %c0_4] : memref<1x144xf32, #tpu.memory_space<vmem>>, vector<1x144xf32>
    %4 = vector.broadcast %3 : vector<1x144xf32> to vector<2x144xf32>
    %5 = arith.addf %2, %4 : vector<2x144xf32>
    %cst_5 = arith.constant 0.000000e+00 : f32
    %6 = vector.broadcast %cst_5 : f32 to vector<2x144xf32>
    %7 = arith.maximumf %5, %6 : vector<2x144xf32>
    %c0_6 = arith.constant 0 : index
    %c0_7 = arith.constant 0 : index
    %8 = vector.load %arg5[%c0_6, %c0_7] : memref<144x96xf32, #tpu.memory_space<vmem>>, vector<144x96xf32>
    %cst_8 = arith.constant dense<0.000000e+00> : vector<2x96xf32>
    %9 = tpu.matmul %7, %8, %cst_8 {dimension_numbers = #tpu.dot_dimension_numbers<[1], [0], [0], [1], [0, 0, 1, 1], [], []>} : vector<2x144xf32>, vector<144x96xf32>, vector<2x96xf32> -> vector<2x96xf32>
    %c0_9 = arith.constant 0 : index
    %c0_10 = arith.constant 0 : index
    %10 = vector.load %arg6[%c0_9, %c0_10] : memref<1x96xf32, #tpu.memory_space<vmem>>, vector<1x96xf32>
    %11 = vector.broadcast %10 : vector<1x96xf32> to vector<2x96xf32>
    %12 = arith.addf %9, %11 : vector<2x96xf32>
    %cst_11 = arith.constant 0.000000e+00 : f32
    %13 = vector.broadcast %cst_11 : f32 to vector<2x96xf32>
    %14 = arith.maximumf %12, %13 : vector<2x96xf32>
    %c0_12 = arith.constant 0 : index
    %c0_13 = arith.constant 0 : index
    %15 = vector.load %arg7[%c0_12, %c0_13] : memref<96x96xf32, #tpu.memory_space<vmem>>, vector<96x96xf32>
    %cst_14 = arith.constant dense<0.000000e+00> : vector<2x96xf32>
    %16 = tpu.matmul %14, %15, %cst_14 {dimension_numbers = #tpu.dot_dimension_numbers<[1], [0], [0], [1], [0, 0, 1, 1], [], []>} : vector<2x96xf32>, vector<96x96xf32>, vector<2x96xf32> -> vector<2x96xf32>
    %c0_15 = arith.constant 0 : index
    %c0_16 = arith.constant 0 : index
    %17 = vector.load %arg8[%c0_15, %c0_16] : memref<1x96xf32, #tpu.memory_space<vmem>>, vector<1x96xf32>
    %18 = vector.broadcast %17 : vector<1x96xf32> to vector<2x96xf32>
    %19 = arith.addf %16, %18 : vector<2x96xf32>
    %cst_17 = arith.constant 0.000000e+00 : f32
    %20 = vector.broadcast %cst_17 : f32 to vector<2x96xf32>
    %21 = arith.maximumf %19, %20 : vector<2x96xf32>
    %c0_18 = arith.constant 0 : index
    %c0_19 = arith.constant 0 : index
    %22 = vector.load %arg9[%c0_18, %c0_19] : memref<96x6xf32, #tpu.memory_space<vmem>>, vector<96x6xf32>
    %cst_20 = arith.constant dense<0.000000e+00> : vector<2x6xf32>
    %23 = tpu.matmul %21, %22, %cst_20 {dimension_numbers = #tpu.dot_dimension_numbers<[1], [0], [0], [1], [0, 0, 1, 1], [], []>} : vector<2x96xf32>, vector<96x6xf32>, vector<2x6xf32> -> vector<2x6xf32>
    %c0_21 = arith.constant 0 : index
    %c0_22 = arith.constant 0 : index
    %24 = vector.load %arg10[%c0_21, %c0_22] : memref<1x6xf32, #tpu.memory_space<vmem>>, vector<1x6xf32>
    %25 = vector.broadcast %24 : vector<1x6xf32> to vector<2x6xf32>
    %26 = arith.addf %23, %25 : vector<2x6xf32>
    %c0_23 = arith.constant 0 : index
    %c0_24 = arith.constant 0 : index
    %27 = vector.load %arg2[%c0_23, %c0_24] : memref<2x6xf32, #tpu.memory_space<vmem>>, vector<2x6xf32>
    %28 = tpu.concatenate %26, %27 in 1 : vector<2x6xf32>, vector<2x6xf32> -> vector<2x12xf32>
    %c0_25 = arith.constant 0 : index
    %c0_26 = arith.constant 0 : index
    %29 = vector.load %arg18[%c0_25, %c0_26] : memref<12x8xf32, #tpu.memory_space<vmem>>, vector<12x8xf32>
    %cst_27 = arith.constant dense<0.000000e+00> : vector<2x8xf32>
    %30 = tpu.matmul %28, %29, %cst_27 {dimension_numbers = #tpu.dot_dimension_numbers<[1], [0], [0], [1], [0, 0, 1, 1], [], []>} : vector<2x12xf32>, vector<12x8xf32>, vector<2x8xf32> -> vector<2x8xf32>
    %c0_28 = arith.constant 0 : index
    %c0_29 = arith.constant 0 : index
    %31 = vector.load %arg19[%c0_28, %c0_29] : memref<1x8xf32, #tpu.memory_space<vmem>>, vector<1x8xf32>
    %32 = vector.broadcast %31 : vector<1x8xf32> to vector<2x8xf32>
    %33 = arith.addf %30, %32 : vector<2x8xf32>
    %34 = tpu.iota {dimensions = array<i32: 1>} : vector<2x128xi32>
    %c64_i32 = arith.constant 64 : i32
    %35 = vector.broadcast %c64_i32 : i32 to vector<2x128xi32>
    %36 = arith.cmpi sge, %34, %35 : vector<2x128xi32>
    %c96_i32 = arith.constant 96 : i32
    %37 = vector.broadcast %c96_i32 : i32 to vector<2x128xi32>
    %38 = arith.cmpi slt, %34, %37 : vector<2x128xi32>
    %39 = arith.andi %36, %38 : vector<2x128xi1>
    %cst_30 = arith.constant 1.000000e+00 : f32
    %cst_31 = arith.constant 5.000000e-01 : f32
    %40 = vector.broadcast %cst_30 : f32 to vector<2x128xf32>
    %41 = vector.broadcast %cst_31 : f32 to vector<2x128xf32>
    %42 = arith.select %39, %40, %41 : vector<2x128xi1>, vector<2x128xf32>
    %cst_32 = arith.constant 0.000000e+00 : f32
    %cst_33 = arith.constant 5.000000e-01 : f32
    %43 = vector.broadcast %cst_32 : f32 to vector<2x128xf32>
    %44 = vector.broadcast %cst_33 : f32 to vector<2x128xf32>
    %45 = arith.select %39, %43, %44 : vector<2x128xi1>, vector<2x128xf32>
    %c0_34 = arith.constant 0 : index
    %c0_35 = arith.constant 0 : index
    %46 = vector.load %arg0[%c0_34, %c0_35] : memref<16x4xf32, #tpu.memory_space<vmem>>, vector<16x4xf32>
    %c0_36 = arith.constant 0 : index
    %c0_37 = arith.constant 0 : index
    %47 = vector.load %arg11[%c0_36, %c0_37] : memref<4x128xf32, #tpu.memory_space<vmem>>, vector<4x128xf32>
    %c0_38 = arith.constant 0 : index
    %c0_39 = arith.constant 0 : index
    %48 = vector.load %arg12[%c0_38, %c0_39] : memref<32x128xf32, #tpu.memory_space<vmem>>, vector<32x128xf32>
    %c0_40 = arith.constant 0 : index
    %c0_41 = arith.constant 0 : index
    %49 = vector.load %arg13[%c0_40, %c0_41] : memref<1x128xf32, #tpu.memory_space<vmem>>, vector<1x128xf32>
    %cst_42 = arith.constant dense<0.000000e+00> : vector<16x128xf32>
    %50 = tpu.matmul %46, %47, %cst_42 {dimension_numbers = #tpu.dot_dimension_numbers<[1], [0], [0], [1], [0, 0, 1, 1], [], []>} : vector<16x4xf32>, vector<4x128xf32>, vector<16x128xf32> -> vector<16x128xf32>
    %51 = vector.broadcast %49 : vector<1x128xf32> to vector<16x128xf32>
    %52 = arith.addf %50, %51 : vector<16x128xf32>
    %cst_43 = arith.constant 0.000000e+00 : f32
    %53 = vector.broadcast %cst_43 : f32 to vector<2x32xf32>
    %cst_44 = arith.constant 0.000000e+00 : f32
    %54 = vector.broadcast %cst_44 : f32 to vector<2x32xf32>
    %55 = vector.extract_strided_slice %52 {offsets = [0, 0], sizes = [2, 128], strides = [1, 1]} : vector<16x128xf32> to vector<2x128xf32>
    %cst_45 = arith.constant dense<0.000000e+00> : vector<2x128xf32>
    %56 = tpu.matmul %53, %48, %cst_45 {dimension_numbers = #tpu.dot_dimension_numbers<[1], [0], [0], [1], [0, 0, 1, 1], [], []>} : vector<2x32xf32>, vector<32x128xf32>, vector<2x128xf32> -> vector<2x128xf32>
    %57 = arith.addf %55, %56 : vector<2x128xf32>
    %58 = arith.mulf %57, %42 : vector<2x128xf32>
    %59 = math.tanh %58 : vector<2x128xf32>
    %60 = arith.mulf %59, %42 : vector<2x128xf32>
    %61 = arith.addf %60, %45 : vector<2x128xf32>
    %62 = vector.extract_strided_slice %61 {offsets = [0, 0], sizes = [2, 32], strides = [1, 1]} : vector<2x128xf32> to vector<2x32xf32>
    %63 = vector.extract_strided_slice %61 {offsets = [0, 32], sizes = [2, 32], strides = [1, 1]} : vector<2x128xf32> to vector<2x32xf32>
    %64 = vector.extract_strided_slice %61 {offsets = [0, 64], sizes = [2, 32], strides = [1, 1]} : vector<2x128xf32> to vector<2x32xf32>
    %65 = vector.extract_strided_slice %61 {offsets = [0, 96], sizes = [2, 32], strides = [1, 1]} : vector<2x128xf32> to vector<2x32xf32>
    %66 = arith.mulf %63, %54 : vector<2x32xf32>
    %67 = arith.mulf %62, %64 : vector<2x32xf32>
    %68 = arith.addf %66, %67 : vector<2x32xf32>
    %69 = math.tanh %68 : vector<2x32xf32>
    %70 = arith.mulf %65, %69 : vector<2x32xf32>
    %71 = vector.extract_strided_slice %52 {offsets = [2, 0], sizes = [2, 128], strides = [1, 1]} : vector<16x128xf32> to vector<2x128xf32>
    %cst_46 = arith.constant dense<0.000000e+00> : vector<2x128xf32>
    %72 = tpu.matmul %70, %48, %cst_46 {dimension_numbers = #tpu.dot_dimension_numbers<[1], [0], [0], [1], [0, 0, 1, 1], [], []>} : vector<2x32xf32>, vector<32x128xf32>, vector<2x128xf32> -> vector<2x128xf32>
    %73 = arith.addf %71, %72 : vector<2x128xf32>
    %74 = arith.mulf %73, %42 : vector<2x128xf32>
    %75 = math.tanh %74 : vector<2x128xf32>
    %76 = arith.mulf %75, %42 : vector<2x128xf32>
    %77 = arith.addf %76, %45 : vector<2x128xf32>
    %78 = vector.extract_strided_slice %77 {offsets = [0, 0], sizes = [2, 32], strides = [1, 1]} : vector<2x128xf32> to vector<2x32xf32>
    %79 = vector.extract_strided_slice %77 {offsets = [0, 32], sizes = [2, 32], strides = [1, 1]} : vector<2x128xf32> to vector<2x32xf32>
    %80 = vector.extract_strided_slice %77 {offsets = [0, 64], sizes = [2, 32], strides = [1, 1]} : vector<2x128xf32> to vector<2x32xf32>
    %81 = vector.extract_strided_slice %77 {offsets = [0, 96], sizes = [2, 32], strides = [1, 1]} : vector<2x128xf32> to vector<2x32xf32>
    %82 = arith.mulf %79, %68 : vector<2x32xf32>
    %83 = arith.mulf %78, %80 : vector<2x32xf32>
    %84 = arith.addf %82, %83 : vector<2x32xf32>
    %85 = math.tanh %84 : vector<2x32xf32>
    %86 = arith.mulf %81, %85 : vector<2x32xf32>
    %87 = vector.extract_strided_slice %52 {offsets = [4, 0], sizes = [2, 128], strides = [1, 1]} : vector<16x128xf32> to vector<2x128xf32>
    %cst_47 = arith.constant dense<0.000000e+00> : vector<2x128xf32>
    %88 = tpu.matmul %86, %48, %cst_47 {dimension_numbers = #tpu.dot_dimension_numbers<[1], [0], [0], [1], [0, 0, 1, 1], [], []>} : vector<2x32xf32>, vector<32x128xf32>, vector<2x128xf32> -> vector<2x128xf32>
    %89 = arith.addf %87, %88 : vector<2x128xf32>
    %90 = arith.mulf %89, %42 : vector<2x128xf32>
    %91 = math.tanh %90 : vector<2x128xf32>
    %92 = arith.mulf %91, %42 : vector<2x128xf32>
    %93 = arith.addf %92, %45 : vector<2x128xf32>
    %94 = vector.extract_strided_slice %93 {offsets = [0, 0], sizes = [2, 32], strides = [1, 1]} : vector<2x128xf32> to vector<2x32xf32>
    %95 = vector.extract_strided_slice %93 {offsets = [0, 32], sizes = [2, 32], strides = [1, 1]} : vector<2x128xf32> to vector<2x32xf32>
    %96 = vector.extract_strided_slice %93 {offsets = [0, 64], sizes = [2, 32], strides = [1, 1]} : vector<2x128xf32> to vector<2x32xf32>
    %97 = vector.extract_strided_slice %93 {offsets = [0, 96], sizes = [2, 32], strides = [1, 1]} : vector<2x128xf32> to vector<2x32xf32>
    %98 = arith.mulf %95, %84 : vector<2x32xf32>
    %99 = arith.mulf %94, %96 : vector<2x32xf32>
    %100 = arith.addf %98, %99 : vector<2x32xf32>
    %101 = math.tanh %100 : vector<2x32xf32>
    %102 = arith.mulf %97, %101 : vector<2x32xf32>
    %103 = vector.extract_strided_slice %52 {offsets = [6, 0], sizes = [2, 128], strides = [1, 1]} : vector<16x128xf32> to vector<2x128xf32>
    %cst_48 = arith.constant dense<0.000000e+00> : vector<2x128xf32>
    %104 = tpu.matmul %102, %48, %cst_48 {dimension_numbers = #tpu.dot_dimension_numbers<[1], [0], [0], [1], [0, 0, 1, 1], [], []>} : vector<2x32xf32>, vector<32x128xf32>, vector<2x128xf32> -> vector<2x128xf32>
    %105 = arith.addf %103, %104 : vector<2x128xf32>
    %106 = arith.mulf %105, %42 : vector<2x128xf32>
    %107 = math.tanh %106 : vector<2x128xf32>
    %108 = arith.mulf %107, %42 : vector<2x128xf32>
    %109 = arith.addf %108, %45 : vector<2x128xf32>
    %110 = vector.extract_strided_slice %109 {offsets = [0, 0], sizes = [2, 32], strides = [1, 1]} : vector<2x128xf32> to vector<2x32xf32>
    %111 = vector.extract_strided_slice %109 {offsets = [0, 32], sizes = [2, 32], strides = [1, 1]} : vector<2x128xf32> to vector<2x32xf32>
    %112 = vector.extract_strided_slice %109 {offsets = [0, 64], sizes = [2, 32], strides = [1, 1]} : vector<2x128xf32> to vector<2x32xf32>
    %113 = vector.extract_strided_slice %109 {offsets = [0, 96], sizes = [2, 32], strides = [1, 1]} : vector<2x128xf32> to vector<2x32xf32>
    %114 = arith.mulf %111, %100 : vector<2x32xf32>
    %115 = arith.mulf %110, %112 : vector<2x32xf32>
    %116 = arith.addf %114, %115 : vector<2x32xf32>
    %117 = math.tanh %116 : vector<2x32xf32>
    %118 = arith.mulf %113, %117 : vector<2x32xf32>
    %119 = vector.extract_strided_slice %52 {offsets = [8, 0], sizes = [2, 128], strides = [1, 1]} : vector<16x128xf32> to vector<2x128xf32>
    %cst_49 = arith.constant dense<0.000000e+00> : vector<2x128xf32>
    %120 = tpu.matmul %118, %48, %cst_49 {dimension_numbers = #tpu.dot_dimension_numbers<[1], [0], [0], [1], [0, 0, 1, 1], [], []>} : vector<2x32xf32>, vector<32x128xf32>, vector<2x128xf32> -> vector<2x128xf32>
    %121 = arith.addf %119, %120 : vector<2x128xf32>
    %122 = arith.mulf %121, %42 : vector<2x128xf32>
    %123 = math.tanh %122 : vector<2x128xf32>
    %124 = arith.mulf %123, %42 : vector<2x128xf32>
    %125 = arith.addf %124, %45 : vector<2x128xf32>
    %126 = vector.extract_strided_slice %125 {offsets = [0, 0], sizes = [2, 32], strides = [1, 1]} : vector<2x128xf32> to vector<2x32xf32>
    %127 = vector.extract_strided_slice %125 {offsets = [0, 32], sizes = [2, 32], strides = [1, 1]} : vector<2x128xf32> to vector<2x32xf32>
    %128 = vector.extract_strided_slice %125 {offsets = [0, 64], sizes = [2, 32], strides = [1, 1]} : vector<2x128xf32> to vector<2x32xf32>
    %129 = vector.extract_strided_slice %125 {offsets = [0, 96], sizes = [2, 32], strides = [1, 1]} : vector<2x128xf32> to vector<2x32xf32>
    %130 = arith.mulf %127, %116 : vector<2x32xf32>
    %131 = arith.mulf %126, %128 : vector<2x32xf32>
    %132 = arith.addf %130, %131 : vector<2x32xf32>
    %133 = math.tanh %132 : vector<2x32xf32>
    %134 = arith.mulf %129, %133 : vector<2x32xf32>
    %135 = vector.extract_strided_slice %52 {offsets = [10, 0], sizes = [2, 128], strides = [1, 1]} : vector<16x128xf32> to vector<2x128xf32>
    %cst_50 = arith.constant dense<0.000000e+00> : vector<2x128xf32>
    %136 = tpu.matmul %134, %48, %cst_50 {dimension_numbers = #tpu.dot_dimension_numbers<[1], [0], [0], [1], [0, 0, 1, 1], [], []>} : vector<2x32xf32>, vector<32x128xf32>, vector<2x128xf32> -> vector<2x128xf32>
    %137 = arith.addf %135, %136 : vector<2x128xf32>
    %138 = arith.mulf %137, %42 : vector<2x128xf32>
    %139 = math.tanh %138 : vector<2x128xf32>
    %140 = arith.mulf %139, %42 : vector<2x128xf32>
    %141 = arith.addf %140, %45 : vector<2x128xf32>
    %142 = vector.extract_strided_slice %141 {offsets = [0, 0], sizes = [2, 32], strides = [1, 1]} : vector<2x128xf32> to vector<2x32xf32>
    %143 = vector.extract_strided_slice %141 {offsets = [0, 32], sizes = [2, 32], strides = [1, 1]} : vector<2x128xf32> to vector<2x32xf32>
    %144 = vector.extract_strided_slice %141 {offsets = [0, 64], sizes = [2, 32], strides = [1, 1]} : vector<2x128xf32> to vector<2x32xf32>
    %145 = vector.extract_strided_slice %141 {offsets = [0, 96], sizes = [2, 32], strides = [1, 1]} : vector<2x128xf32> to vector<2x32xf32>
    %146 = arith.mulf %143, %132 : vector<2x32xf32>
    %147 = arith.mulf %142, %144 : vector<2x32xf32>
    %148 = arith.addf %146, %147 : vector<2x32xf32>
    %149 = math.tanh %148 : vector<2x32xf32>
    %150 = arith.mulf %145, %149 : vector<2x32xf32>
    %151 = vector.extract_strided_slice %52 {offsets = [12, 0], sizes = [2, 128], strides = [1, 1]} : vector<16x128xf32> to vector<2x128xf32>
    %cst_51 = arith.constant dense<0.000000e+00> : vector<2x128xf32>
    %152 = tpu.matmul %150, %48, %cst_51 {dimension_numbers = #tpu.dot_dimension_numbers<[1], [0], [0], [1], [0, 0, 1, 1], [], []>} : vector<2x32xf32>, vector<32x128xf32>, vector<2x128xf32> -> vector<2x128xf32>
    %153 = arith.addf %151, %152 : vector<2x128xf32>
    %154 = arith.mulf %153, %42 : vector<2x128xf32>
    %155 = math.tanh %154 : vector<2x128xf32>
    %156 = arith.mulf %155, %42 : vector<2x128xf32>
    %157 = arith.addf %156, %45 : vector<2x128xf32>
    %158 = vector.extract_strided_slice %157 {offsets = [0, 0], sizes = [2, 32], strides = [1, 1]} : vector<2x128xf32> to vector<2x32xf32>
    %159 = vector.extract_strided_slice %157 {offsets = [0, 32], sizes = [2, 32], strides = [1, 1]} : vector<2x128xf32> to vector<2x32xf32>
    %160 = vector.extract_strided_slice %157 {offsets = [0, 64], sizes = [2, 32], strides = [1, 1]} : vector<2x128xf32> to vector<2x32xf32>
    %161 = vector.extract_strided_slice %157 {offsets = [0, 96], sizes = [2, 32], strides = [1, 1]} : vector<2x128xf32> to vector<2x32xf32>
    %162 = arith.mulf %159, %148 : vector<2x32xf32>
    %163 = arith.mulf %158, %160 : vector<2x32xf32>
    %164 = arith.addf %162, %163 : vector<2x32xf32>
    %165 = math.tanh %164 : vector<2x32xf32>
    %166 = arith.mulf %161, %165 : vector<2x32xf32>
    %167 = vector.extract_strided_slice %52 {offsets = [14, 0], sizes = [2, 128], strides = [1, 1]} : vector<16x128xf32> to vector<2x128xf32>
    %cst_52 = arith.constant dense<0.000000e+00> : vector<2x128xf32>
    %168 = tpu.matmul %166, %48, %cst_52 {dimension_numbers = #tpu.dot_dimension_numbers<[1], [0], [0], [1], [0, 0, 1, 1], [], []>} : vector<2x32xf32>, vector<32x128xf32>, vector<2x128xf32> -> vector<2x128xf32>
    %169 = arith.addf %167, %168 : vector<2x128xf32>
    %170 = arith.mulf %169, %42 : vector<2x128xf32>
    %171 = math.tanh %170 : vector<2x128xf32>
    %172 = arith.mulf %171, %42 : vector<2x128xf32>
    %173 = arith.addf %172, %45 : vector<2x128xf32>
    %174 = vector.extract_strided_slice %173 {offsets = [0, 0], sizes = [2, 32], strides = [1, 1]} : vector<2x128xf32> to vector<2x32xf32>
    %175 = vector.extract_strided_slice %173 {offsets = [0, 32], sizes = [2, 32], strides = [1, 1]} : vector<2x128xf32> to vector<2x32xf32>
    %176 = vector.extract_strided_slice %173 {offsets = [0, 64], sizes = [2, 32], strides = [1, 1]} : vector<2x128xf32> to vector<2x32xf32>
    %177 = vector.extract_strided_slice %173 {offsets = [0, 96], sizes = [2, 32], strides = [1, 1]} : vector<2x128xf32> to vector<2x32xf32>
    %178 = arith.mulf %175, %164 : vector<2x32xf32>
    %179 = arith.mulf %174, %176 : vector<2x32xf32>
    %180 = arith.addf %178, %179 : vector<2x32xf32>
    %181 = math.tanh %180 : vector<2x32xf32>
    %182 = arith.mulf %177, %181 : vector<2x32xf32>
    %183 = tpu.concatenate %70, %86, %102, %118, %134, %150, %166, %182 in 0 : vector<2x32xf32>, vector<2x32xf32>, vector<2x32xf32>, vector<2x32xf32>, vector<2x32xf32>, vector<2x32xf32>, vector<2x32xf32>, vector<2x32xf32> -> vector<16x32xf32>
    %c0_53 = arith.constant 0 : index
    %c0_54 = arith.constant 0 : index
    %184 = vector.load %arg14[%c0_53, %c0_54] : memref<32x128xf32, #tpu.memory_space<vmem>>, vector<32x128xf32>
    %c0_55 = arith.constant 0 : index
    %c0_56 = arith.constant 0 : index
    %185 = vector.load %arg15[%c0_55, %c0_56] : memref<32x128xf32, #tpu.memory_space<vmem>>, vector<32x128xf32>
    %c0_57 = arith.constant 0 : index
    %c0_58 = arith.constant 0 : index
    %186 = vector.load %arg16[%c0_57, %c0_58] : memref<1x128xf32, #tpu.memory_space<vmem>>, vector<1x128xf32>
    %cst_59 = arith.constant dense<0.000000e+00> : vector<16x128xf32>
    %187 = tpu.matmul %183, %184, %cst_59 {dimension_numbers = #tpu.dot_dimension_numbers<[1], [0], [0], [1], [0, 0, 1, 1], [], []>} : vector<16x32xf32>, vector<32x128xf32>, vector<16x128xf32> -> vector<16x128xf32>
    %188 = vector.broadcast %186 : vector<1x128xf32> to vector<16x128xf32>
    %189 = arith.addf %187, %188 : vector<16x128xf32>
    %cst_60 = arith.constant 0.000000e+00 : f32
    %190 = vector.broadcast %cst_60 : f32 to vector<2x32xf32>
    %cst_61 = arith.constant 0.000000e+00 : f32
    %191 = vector.broadcast %cst_61 : f32 to vector<2x32xf32>
    %192 = vector.extract_strided_slice %189 {offsets = [0, 0], sizes = [2, 128], strides = [1, 1]} : vector<16x128xf32> to vector<2x128xf32>
    %cst_62 = arith.constant dense<0.000000e+00> : vector<2x128xf32>
    %193 = tpu.matmul %190, %185, %cst_62 {dimension_numbers = #tpu.dot_dimension_numbers<[1], [0], [0], [1], [0, 0, 1, 1], [], []>} : vector<2x32xf32>, vector<32x128xf32>, vector<2x128xf32> -> vector<2x128xf32>
    %194 = arith.addf %192, %193 : vector<2x128xf32>
    %195 = arith.mulf %194, %42 : vector<2x128xf32>
    %196 = math.tanh %195 : vector<2x128xf32>
    %197 = arith.mulf %196, %42 : vector<2x128xf32>
    %198 = arith.addf %197, %45 : vector<2x128xf32>
    %199 = vector.extract_strided_slice %198 {offsets = [0, 0], sizes = [2, 32], strides = [1, 1]} : vector<2x128xf32> to vector<2x32xf32>
    %200 = vector.extract_strided_slice %198 {offsets = [0, 32], sizes = [2, 32], strides = [1, 1]} : vector<2x128xf32> to vector<2x32xf32>
    %201 = vector.extract_strided_slice %198 {offsets = [0, 64], sizes = [2, 32], strides = [1, 1]} : vector<2x128xf32> to vector<2x32xf32>
    %202 = vector.extract_strided_slice %198 {offsets = [0, 96], sizes = [2, 32], strides = [1, 1]} : vector<2x128xf32> to vector<2x32xf32>
    %203 = arith.mulf %200, %191 : vector<2x32xf32>
    %204 = arith.mulf %199, %201 : vector<2x32xf32>
    %205 = arith.addf %203, %204 : vector<2x32xf32>
    %206 = math.tanh %205 : vector<2x32xf32>
    %207 = arith.mulf %202, %206 : vector<2x32xf32>
    %208 = vector.extract_strided_slice %189 {offsets = [2, 0], sizes = [2, 128], strides = [1, 1]} : vector<16x128xf32> to vector<2x128xf32>
    %cst_63 = arith.constant dense<0.000000e+00> : vector<2x128xf32>
    %209 = tpu.matmul %207, %185, %cst_63 {dimension_numbers = #tpu.dot_dimension_numbers<[1], [0], [0], [1], [0, 0, 1, 1], [], []>} : vector<2x32xf32>, vector<32x128xf32>, vector<2x128xf32> -> vector<2x128xf32>
    %210 = arith.addf %208, %209 : vector<2x128xf32>
    %211 = arith.mulf %210, %42 : vector<2x128xf32>
    %212 = math.tanh %211 : vector<2x128xf32>
    %213 = arith.mulf %212, %42 : vector<2x128xf32>
    %214 = arith.addf %213, %45 : vector<2x128xf32>
    %215 = vector.extract_strided_slice %214 {offsets = [0, 0], sizes = [2, 32], strides = [1, 1]} : vector<2x128xf32> to vector<2x32xf32>
    %216 = vector.extract_strided_slice %214 {offsets = [0, 32], sizes = [2, 32], strides = [1, 1]} : vector<2x128xf32> to vector<2x32xf32>
    %217 = vector.extract_strided_slice %214 {offsets = [0, 64], sizes = [2, 32], strides = [1, 1]} : vector<2x128xf32> to vector<2x32xf32>
    %218 = vector.extract_strided_slice %214 {offsets = [0, 96], sizes = [2, 32], strides = [1, 1]} : vector<2x128xf32> to vector<2x32xf32>
    %219 = arith.mulf %216, %205 : vector<2x32xf32>
    %220 = arith.mulf %215, %217 : vector<2x32xf32>
    %221 = arith.addf %219, %220 : vector<2x32xf32>
    %222 = math.tanh %221 : vector<2x32xf32>
    %223 = arith.mulf %218, %222 : vector<2x32xf32>
    %224 = vector.extract_strided_slice %189 {offsets = [4, 0], sizes = [2, 128], strides = [1, 1]} : vector<16x128xf32> to vector<2x128xf32>
    %cst_64 = arith.constant dense<0.000000e+00> : vector<2x128xf32>
    %225 = tpu.matmul %223, %185, %cst_64 {dimension_numbers = #tpu.dot_dimension_numbers<[1], [0], [0], [1], [0, 0, 1, 1], [], []>} : vector<2x32xf32>, vector<32x128xf32>, vector<2x128xf32> -> vector<2x128xf32>
    %226 = arith.addf %224, %225 : vector<2x128xf32>
    %227 = arith.mulf %226, %42 : vector<2x128xf32>
    %228 = math.tanh %227 : vector<2x128xf32>
    %229 = arith.mulf %228, %42 : vector<2x128xf32>
    %230 = arith.addf %229, %45 : vector<2x128xf32>
    %231 = vector.extract_strided_slice %230 {offsets = [0, 0], sizes = [2, 32], strides = [1, 1]} : vector<2x128xf32> to vector<2x32xf32>
    %232 = vector.extract_strided_slice %230 {offsets = [0, 32], sizes = [2, 32], strides = [1, 1]} : vector<2x128xf32> to vector<2x32xf32>
    %233 = vector.extract_strided_slice %230 {offsets = [0, 64], sizes = [2, 32], strides = [1, 1]} : vector<2x128xf32> to vector<2x32xf32>
    %234 = vector.extract_strided_slice %230 {offsets = [0, 96], sizes = [2, 32], strides = [1, 1]} : vector<2x128xf32> to vector<2x32xf32>
    %235 = arith.mulf %232, %221 : vector<2x32xf32>
    %236 = arith.mulf %231, %233 : vector<2x32xf32>
    %237 = arith.addf %235, %236 : vector<2x32xf32>
    %238 = math.tanh %237 : vector<2x32xf32>
    %239 = arith.mulf %234, %238 : vector<2x32xf32>
    %240 = vector.extract_strided_slice %189 {offsets = [6, 0], sizes = [2, 128], strides = [1, 1]} : vector<16x128xf32> to vector<2x128xf32>
    %cst_65 = arith.constant dense<0.000000e+00> : vector<2x128xf32>
    %241 = tpu.matmul %239, %185, %cst_65 {dimension_numbers = #tpu.dot_dimension_numbers<[1], [0], [0], [1], [0, 0, 1, 1], [], []>} : vector<2x32xf32>, vector<32x128xf32>, vector<2x128xf32> -> vector<2x128xf32>
    %242 = arith.addf %240, %241 : vector<2x128xf32>
    %243 = arith.mulf %242, %42 : vector<2x128xf32>
    %244 = math.tanh %243 : vector<2x128xf32>
    %245 = arith.mulf %244, %42 : vector<2x128xf32>
    %246 = arith.addf %245, %45 : vector<2x128xf32>
    %247 = vector.extract_strided_slice %246 {offsets = [0, 0], sizes = [2, 32], strides = [1, 1]} : vector<2x128xf32> to vector<2x32xf32>
    %248 = vector.extract_strided_slice %246 {offsets = [0, 32], sizes = [2, 32], strides = [1, 1]} : vector<2x128xf32> to vector<2x32xf32>
    %249 = vector.extract_strided_slice %246 {offsets = [0, 64], sizes = [2, 32], strides = [1, 1]} : vector<2x128xf32> to vector<2x32xf32>
    %250 = vector.extract_strided_slice %246 {offsets = [0, 96], sizes = [2, 32], strides = [1, 1]} : vector<2x128xf32> to vector<2x32xf32>
    %251 = arith.mulf %248, %237 : vector<2x32xf32>
    %252 = arith.mulf %247, %249 : vector<2x32xf32>
    %253 = arith.addf %251, %252 : vector<2x32xf32>
    %254 = math.tanh %253 : vector<2x32xf32>
    %255 = arith.mulf %250, %254 : vector<2x32xf32>
    %256 = vector.extract_strided_slice %189 {offsets = [8, 0], sizes = [2, 128], strides = [1, 1]} : vector<16x128xf32> to vector<2x128xf32>
    %cst_66 = arith.constant dense<0.000000e+00> : vector<2x128xf32>
    %257 = tpu.matmul %255, %185, %cst_66 {dimension_numbers = #tpu.dot_dimension_numbers<[1], [0], [0], [1], [0, 0, 1, 1], [], []>} : vector<2x32xf32>, vector<32x128xf32>, vector<2x128xf32> -> vector<2x128xf32>
    %258 = arith.addf %256, %257 : vector<2x128xf32>
    %259 = arith.mulf %258, %42 : vector<2x128xf32>
    %260 = math.tanh %259 : vector<2x128xf32>
    %261 = arith.mulf %260, %42 : vector<2x128xf32>
    %262 = arith.addf %261, %45 : vector<2x128xf32>
    %263 = vector.extract_strided_slice %262 {offsets = [0, 0], sizes = [2, 32], strides = [1, 1]} : vector<2x128xf32> to vector<2x32xf32>
    %264 = vector.extract_strided_slice %262 {offsets = [0, 32], sizes = [2, 32], strides = [1, 1]} : vector<2x128xf32> to vector<2x32xf32>
    %265 = vector.extract_strided_slice %262 {offsets = [0, 64], sizes = [2, 32], strides = [1, 1]} : vector<2x128xf32> to vector<2x32xf32>
    %266 = vector.extract_strided_slice %262 {offsets = [0, 96], sizes = [2, 32], strides = [1, 1]} : vector<2x128xf32> to vector<2x32xf32>
    %267 = arith.mulf %264, %253 : vector<2x32xf32>
    %268 = arith.mulf %263, %265 : vector<2x32xf32>
    %269 = arith.addf %267, %268 : vector<2x32xf32>
    %270 = math.tanh %269 : vector<2x32xf32>
    %271 = arith.mulf %266, %270 : vector<2x32xf32>
    %272 = vector.extract_strided_slice %189 {offsets = [10, 0], sizes = [2, 128], strides = [1, 1]} : vector<16x128xf32> to vector<2x128xf32>
    %cst_67 = arith.constant dense<0.000000e+00> : vector<2x128xf32>
    %273 = tpu.matmul %271, %185, %cst_67 {dimension_numbers = #tpu.dot_dimension_numbers<[1], [0], [0], [1], [0, 0, 1, 1], [], []>} : vector<2x32xf32>, vector<32x128xf32>, vector<2x128xf32> -> vector<2x128xf32>
    %274 = arith.addf %272, %273 : vector<2x128xf32>
    %275 = arith.mulf %274, %42 : vector<2x128xf32>
    %276 = math.tanh %275 : vector<2x128xf32>
    %277 = arith.mulf %276, %42 : vector<2x128xf32>
    %278 = arith.addf %277, %45 : vector<2x128xf32>
    %279 = vector.extract_strided_slice %278 {offsets = [0, 0], sizes = [2, 32], strides = [1, 1]} : vector<2x128xf32> to vector<2x32xf32>
    %280 = vector.extract_strided_slice %278 {offsets = [0, 32], sizes = [2, 32], strides = [1, 1]} : vector<2x128xf32> to vector<2x32xf32>
    %281 = vector.extract_strided_slice %278 {offsets = [0, 64], sizes = [2, 32], strides = [1, 1]} : vector<2x128xf32> to vector<2x32xf32>
    %282 = vector.extract_strided_slice %278 {offsets = [0, 96], sizes = [2, 32], strides = [1, 1]} : vector<2x128xf32> to vector<2x32xf32>
    %283 = arith.mulf %280, %269 : vector<2x32xf32>
    %284 = arith.mulf %279, %281 : vector<2x32xf32>
    %285 = arith.addf %283, %284 : vector<2x32xf32>
    %286 = math.tanh %285 : vector<2x32xf32>
    %287 = arith.mulf %282, %286 : vector<2x32xf32>
    %288 = vector.extract_strided_slice %189 {offsets = [12, 0], sizes = [2, 128], strides = [1, 1]} : vector<16x128xf32> to vector<2x128xf32>
    %cst_68 = arith.constant dense<0.000000e+00> : vector<2x128xf32>
    %289 = tpu.matmul %287, %185, %cst_68 {dimension_numbers = #tpu.dot_dimension_numbers<[1], [0], [0], [1], [0, 0, 1, 1], [], []>} : vector<2x32xf32>, vector<32x128xf32>, vector<2x128xf32> -> vector<2x128xf32>
    %290 = arith.addf %288, %289 : vector<2x128xf32>
    %291 = arith.mulf %290, %42 : vector<2x128xf32>
    %292 = math.tanh %291 : vector<2x128xf32>
    %293 = arith.mulf %292, %42 : vector<2x128xf32>
    %294 = arith.addf %293, %45 : vector<2x128xf32>
    %295 = vector.extract_strided_slice %294 {offsets = [0, 0], sizes = [2, 32], strides = [1, 1]} : vector<2x128xf32> to vector<2x32xf32>
    %296 = vector.extract_strided_slice %294 {offsets = [0, 32], sizes = [2, 32], strides = [1, 1]} : vector<2x128xf32> to vector<2x32xf32>
    %297 = vector.extract_strided_slice %294 {offsets = [0, 64], sizes = [2, 32], strides = [1, 1]} : vector<2x128xf32> to vector<2x32xf32>
    %298 = vector.extract_strided_slice %294 {offsets = [0, 96], sizes = [2, 32], strides = [1, 1]} : vector<2x128xf32> to vector<2x32xf32>
    %299 = arith.mulf %296, %285 : vector<2x32xf32>
    %300 = arith.mulf %295, %297 : vector<2x32xf32>
    %301 = arith.addf %299, %300 : vector<2x32xf32>
    %302 = math.tanh %301 : vector<2x32xf32>
    %303 = arith.mulf %298, %302 : vector<2x32xf32>
    %304 = vector.extract_strided_slice %189 {offsets = [14, 0], sizes = [2, 128], strides = [1, 1]} : vector<16x128xf32> to vector<2x128xf32>
    %cst_69 = arith.constant dense<0.000000e+00> : vector<2x128xf32>
    %305 = tpu.matmul %303, %185, %cst_69 {dimension_numbers = #tpu.dot_dimension_numbers<[1], [0], [0], [1], [0, 0, 1, 1], [], []>} : vector<2x32xf32>, vector<32x128xf32>, vector<2x128xf32> -> vector<2x128xf32>
    %306 = arith.addf %304, %305 : vector<2x128xf32>
    %307 = arith.mulf %306, %42 : vector<2x128xf32>
    %308 = math.tanh %307 : vector<2x128xf32>
    %309 = arith.mulf %308, %42 : vector<2x128xf32>
    %310 = arith.addf %309, %45 : vector<2x128xf32>
    %311 = vector.extract_strided_slice %310 {offsets = [0, 0], sizes = [2, 32], strides = [1, 1]} : vector<2x128xf32> to vector<2x32xf32>
    %312 = vector.extract_strided_slice %310 {offsets = [0, 32], sizes = [2, 32], strides = [1, 1]} : vector<2x128xf32> to vector<2x32xf32>
    %313 = vector.extract_strided_slice %310 {offsets = [0, 64], sizes = [2, 32], strides = [1, 1]} : vector<2x128xf32> to vector<2x32xf32>
    %314 = vector.extract_strided_slice %310 {offsets = [0, 96], sizes = [2, 32], strides = [1, 1]} : vector<2x128xf32> to vector<2x32xf32>
    %315 = arith.mulf %312, %301 : vector<2x32xf32>
    %316 = arith.mulf %311, %313 : vector<2x32xf32>
    %317 = arith.addf %315, %316 : vector<2x32xf32>
    %318 = math.tanh %317 : vector<2x32xf32>
    %319 = arith.mulf %314, %318 : vector<2x32xf32>
    %320 = tpu.concatenate %207, %223, %239, %255, %271, %287, %303, %319 in 1 : vector<2x32xf32>, vector<2x32xf32>, vector<2x32xf32>, vector<2x32xf32>, vector<2x32xf32>, vector<2x32xf32>, vector<2x32xf32>, vector<2x32xf32> -> vector<2x256xf32>
    %c0_70 = arith.constant 0 : index
    %c0_71 = arith.constant 0 : index
    %321 = vector.load %arg17[%c0_70, %c0_71] : memref<256x8xf32, #tpu.memory_space<vmem>>, vector<256x8xf32>
    %cst_72 = arith.constant dense<0.000000e+00> : vector<2x8xf32>
    %322 = tpu.matmul %320, %321, %cst_72 {dimension_numbers = #tpu.dot_dimension_numbers<[1], [0], [0], [1], [0, 0, 1, 1], [], []>} : vector<2x256xf32>, vector<256x8xf32>, vector<2x8xf32> -> vector<2x8xf32>
    %323 = arith.addf %33, %322 : vector<2x8xf32>
    %c0_73 = arith.constant 0 : index
    %c0_74 = arith.constant 0 : index
    %324 = vector.load %arg20[%c0_73, %c0_74] : memref<2x8xf32, #tpu.memory_space<vmem>>, vector<2x8xf32>
    tpu.vector_store %arg20[%c0_73, %c0_74], %323 {strides = array<i32>} : memref<2x8xf32, #tpu.memory_space<vmem>>, vector<2x8xf32>,
    %cst_75 = arith.constant 0.000000e+00 : f32
    %325 = vector.broadcast %cst_75 : f32 to vector<2x8xf32>
    %326 = arith.subf %325, %323 : vector<2x8xf32>
    %327 = math.exp %326 : vector<2x8xf32>
    %cst_76 = arith.constant 1.000000e+00 : f32
    %328 = vector.broadcast %cst_76 : f32 to vector<2x8xf32>
    %329 = arith.addf %328, %327 : vector<2x8xf32>
    %cst_77 = arith.constant 1.000000e+00 : f32
    %330 = vector.broadcast %cst_77 : f32 to vector<2x8xf32>
    %331 = arith.divf %330, %329 : vector<2x8xf32>
    %c0_78 = arith.constant 0 : index
    %c0_79 = arith.constant 0 : index
    %332 = vector.load %arg21[%c0_78, %c0_79] : memref<2x8xf32, #tpu.memory_space<vmem>>, vector<2x8xf32>
    tpu.vector_store %arg21[%c0_78, %c0_79], %331 {strides = array<i32>} : memref<2x8xf32, #tpu.memory_space<vmem>>, vector<2x8xf32>,
    return
  }
}

</mosaic_0001>

<llo_original>
// kernel: tpu_custom_call.1
$region0: #{tpu_custom_call.1}
  #allocation0 [shape = 'u32[]', space=smem, size = 0x4, offset = 0x4, fixed_abs, tag = 'smem constant byte address 0x4 - core index']
  #allocation1 [shape = 'u32[144,128]{1,0:T(1,128)}', space=vmem, size = 0x12000, scoped, tag = 'internal scratch']
  %s0 = inlined_call_operand.vmem [shape: f32[16,4], index: 0, kind: input, shape index: {}]
  %s1 = inlined_call_operand.hbm [shape: f32[2,27], index: 1, kind: input, shape index: {}]
  %s2 = inlined_call_operand.hbm [shape: f32[2,6], index: 2, kind: input, shape index: {}]
  %s3 = inlined_call_operand.vmem [shape: f32[27,144], index: 3, kind: input, shape index: {}]
  %s4 = inlined_call_operand.hbm [shape: f32[1,144], index: 4, kind: input, shape index: {}]
  %s5 = inlined_call_operand.vmem [shape: f32[144,96], index: 5, kind: input, shape index: {}]
  %s6 = inlined_call_operand.hbm [shape: f32[1,96], index: 6, kind: input, shape index: {}]
  %s7 = inlined_call_operand.vmem [shape: f32[96,96], index: 7, kind: input, shape index: {}]
  %s8 = inlined_call_operand.hbm [shape: f32[1,96], index: 8, kind: input, shape index: {}]
  %s9 = inlined_call_operand.vmem [shape: f32[96,6], index: 9, kind: input, shape index: {}]
  %s10 = inlined_call_operand.hbm [shape: f32[1,6], index: 10, kind: input, shape index: {}]
  %s11 = inlined_call_operand.vmem [shape: f32[4,128], index: 11, kind: input, shape index: {}]
  %s12 = inlined_call_operand.vmem [shape: f32[32,128], index: 12, kind: input, shape index: {}]
  %s13 = inlined_call_operand.vmem [shape: f32[1,128], index: 13, kind: input, shape index: {}]
  %s14 = inlined_call_operand.vmem [shape: f32[32,128], index: 14, kind: input, shape index: {}]
  %s15 = inlined_call_operand.vmem [shape: f32[32,128], index: 15, kind: input, shape index: {}]
  %s16 = inlined_call_operand.vmem [shape: f32[1,128], index: 16, kind: input, shape index: {}]
  %s17 = inlined_call_operand.vmem [shape: f32[256,8], index: 17, kind: input, shape index: {}]
  %s18 = inlined_call_operand.vmem [shape: f32[12,8], index: 18, kind: input, shape index: {}]
  %s19 = inlined_call_operand.vmem [shape: f32[1,8], index: 19, kind: input, shape index: {}]
  %s20 = inlined_call_operand.hbm [shape: f32[2,8], index: 20, kind: output, shape index: {0}]
  %s21 = inlined_call_operand.hbm [shape: f32[2,8], index: 21, kind: output, shape index: {1}]
  %22 = xla_tuple %s20, %s21
  %s23 = sld [smem:[#allocation0]]
  $region122: #{tpu_custom_call.1} parent=0
    _
  %s25 = ssub.s32 1, %s23
  %s26 = scalar_select 0, %s25, %s23
  $region1: #{tpu_custom_call.1} parent=0
    #allocation2 [shape = 'u8[1024]{0}', space=vmem, size = 0x400, scoped, tag = 'input window, operand 1, single buffered']
    #allocation3 [shape = 's32[1]{0}', space=sflag, size = 0x4, scoped, tag = 'scoped memory for tpu_custom_call.1']
    #allocation4 [shape = 's32[1]{0}', space=sflag, size = 0x4, scoped, tag = 'scoped memory for tpu_custom_call.1']
    #allocation5 [shape = 'u8[1024]{0}', space=vmem, size = 0x400, scoped, tag = 'input window, operand 2, single buffered']
    #allocation6 [shape = 's32[1]{0}', space=sflag, size = 0x4, scoped, tag = 'scoped memory for tpu_custom_call.1']
    #allocation7 [shape = 'u8[1024]{0}', space=vmem, size = 0x400, scoped, tag = 'input window, operand 4, single buffered']
    #allocation8 [shape = 'u8[512]{0}', space=vmem, size = 0x400, scoped, tag = 'input window, operand 6, single buffered']
    #allocation9 [shape = 's32[1]{0}', space=sflag, size = 0x4, scoped, tag = 'scoped memory for tpu_custom_call.1']
    #allocation10 [shape = 'u8[512]{0}', space=vmem, size = 0x400, scoped, tag = 'input window, operand 8, single buffered']
    #allocation11 [shape = 'u8[512]{0}', space=vmem, size = 0x400, scoped, tag = 'input window, operand 10, single buffered']
    #allocation12 [shape = 's32[1]{0}', space=sflag, size = 0x4, scoped, tag = 'scoped memory for tpu_custom_call.1']
    #allocation13 [shape = 'u8[1024]{0}', space=vmem, size = 0x400, scoped, tag = 'output window, operand 0, single buffered']
    #allocation14 [shape = 'u8[1024]{0}', space=vmem, size = 0x400, scoped, tag = 'output window, operand 1, single buffered']
    #allocation15 [shape = 's32[1]{0}', space=sflag, size = 0x4, scoped, tag = 'scoped memory for tpu_custom_call.1']
    %27 = vsyncpa [#allocation3], 0
    %28 = vsyncpa [#allocation6], 0
    %29 = vsyncpa [#allocation9], 0
    %30 = vsyncpa [#allocation12], 0
    %31 = vsyncpa [#allocation4], 0
    %32 = vsyncpa [#allocation15], 0
    // Predicated region
    $region2: #{tpu_custom_call.1} parent=1 // pred_check
      _
    $region3: #{tpu_custom_call.1} parent=1 // pred_check_branch
      %34 = sbr.rel (0) target = $region5
    $region4: #{tpu_custom_call.1} parent=1 // pred_region
      _
    $region5: #{tpu_custom_call.1} parent=1 // pred_fallthru
      _
    // Predicated region
    $region6: #{tpu_custom_call.1} parent=1 // pred_check
      _
    $region7: #{tpu_custom_call.1} parent=1 // pred_check_branch
      %36 = sbr.rel (0) target = $region9
    $region8: #{tpu_custom_call.1} parent=1 // pred_region
      %s38 = ssub.s32 32, 32
      %39 = vsyncadd [#allocation3], %s38
      %s41 = sshll.u32 [#allocation2], 4
      %s42 = int_to_ptr.vmem [resolvable:$true] %s41
      %44 = dma.hbm_to_vmem [thread:$0]  %s1, 32, %s42, [#allocation3]
    $region9: #{tpu_custom_call.1} parent=1 // pred_fallthru
      _
    // Predicated region
    $region10: #{tpu_custom_call.1} parent=1 // pred_check
      _
    $region11: #{tpu_custom_call.1} parent=1 // pred_check_branch
      %46 = sbr.rel (0) target = $region13
    $region12: #{tpu_custom_call.1} parent=1 // pred_region
      %s48 = ssub.s32 32, 32
      %49 = vsyncadd [#allocation6], %s48
      %s51 = sshll.u32 [#allocation5], 4
      %s52 = int_to_ptr.vmem [resolvable:$true] %s51
      %54 = dma.hbm_to_vmem [thread:$0]  %s2, 32, %s52, [#allocation6]
    $region13: #{tpu_custom_call.1} parent=1 // pred_fallthru
      _
    // Predicated region
    $region14: #{tpu_custom_call.1} parent=1 // pred_check
      _
    $region15: #{tpu_custom_call.1} parent=1 // pred_check_branch
      %56 = sbr.rel (0) target = $region17
    $region16: #{tpu_custom_call.1} parent=1 // pred_region
      _
    $region17: #{tpu_custom_call.1} parent=1 // pred_fallthru
      _
    // Predicated region
    $region18: #{tpu_custom_call.1} parent=1 // pred_check
      _
    $region19: #{tpu_custom_call.1} parent=1 // pred_check_branch
      %58 = sbr.rel (0) target = $region21
    $region20: #{tpu_custom_call.1} parent=1 // pred_region
      %s60 = ssub.s32 32, 32
      %61 = vsyncadd [#allocation6], %s60
      %s63 = sshll.u32 [#allocation7], 4
      %s64 = int_to_ptr.vmem [resolvable:$true] %s63
      %66 = dma.hbm_to_vmem [thread:$0]  %s4, 32, %s64, [#allocation6]
    $region21: #{tpu_custom_call.1} parent=1 // pred_fallthru
      _
    // Predicated region
    $region22: #{tpu_custom_call.1} parent=1 // pred_check
      _
    $region23: #{tpu_custom_call.1} parent=1 // pred_check_branch
      %68 = sbr.rel (0) target = $region25
    $region24: #{tpu_custom_call.1} parent=1 // pred_region
      _
    $region25: #{tpu_custom_call.1} parent=1 // pred_fallthru
      _
    // Predicated region
    $region26: #{tpu_custom_call.1} parent=1 // pred_check
      _
    $region27: #{tpu_custom_call.1} parent=1 // pred_check_branch
      %70 = sbr.rel (0) target = $region29
    $region28: #{tpu_custom_call.1} parent=1 // pred_region
      %s72 = ssub.s32 16, 16
      %73 = vsyncadd [#allocation9], %s72
      %s75 = sshll.u32 [#allocation8], 4
      %s76 = int_to_ptr.vmem [resolvable:$true] %s75
      %78 = dma.hbm_to_vmem [thread:$0]  %s6, 16, %s76, [#allocation9]
    $region29: #{tpu_custom_call.1} parent=1 // pred_fallthru
      _
    // Predicated region
    $region30: #{tpu_custom_call.1} parent=1 // pred_check
      _
    $region31: #{tpu_custom_call.1} parent=1 // pred_check_branch
      %80 = sbr.rel (0) target = $region33
    $region32: #{tpu_custom_call.1} parent=1 // pred_region
      _
    $region33: #{tpu_custom_call.1} parent=1 // pred_fallthru
      _
    // Predicated region
    $region34: #{tpu_custom_call.1} parent=1 // pred_check
      _
    $region35: #{tpu_custom_call.1} parent=1 // pred_check_branch
      %82 = sbr.rel (0) target = $region37
    $region36: #{tpu_custom_call.1} parent=1 // pred_region
      %s84 = ssub.s32 16, 16
      %85 = vsyncadd [#allocation9], %s84
      %s87 = sshll.u32 [#allocation10], 4
      %s88 = int_to_ptr.vmem [resolvable:$true] %s87
      %90 = dma.hbm_to_vmem [thread:$0]  %s8, 16, %s88, [#allocation9]
    $region37: #{tpu_custom_call.1} parent=1 // pred_fallthru
      _
    // Predicated region
    $region38: #{tpu_custom_call.1} parent=1 // pred_check
      _
    $region39: #{tpu_custom_call.1} parent=1 // pred_check_branch
      %92 = sbr.rel (0) target = $region41
    $region40: #{tpu_custom_call.1} parent=1 // pred_region
      _
    $region41: #{tpu_custom_call.1} parent=1 // pred_fallthru
      _
    // Predicated region
    $region42: #{tpu_custom_call.1} parent=1 // pred_check
      _
    $region43: #{tpu_custom_call.1} parent=1 // pred_check_branch
      %94 = sbr.rel (0) target = $region45
    $region44: #{tpu_custom_call.1} parent=1 // pred_region
      %s96 = ssub.s32 16, 16
      %97 = vsyncadd [#allocation12], %s96
      %s99 = sshll.u32 [#allocation11], 4
      %s100 = int_to_ptr.vmem [resolvable:$true] %s99
      %102 = dma.hbm_to_vmem [thread:$0]  %s10, 16, %s100, [#allocation12]
    $region45: #{tpu_custom_call.1} parent=1 // pred_fallthru
      _
    // Predicated region
    $region46: #{tpu_custom_call.1} parent=1 // pred_check
      _
    $region47: #{tpu_custom_call.1} parent=1 // pred_check_branch
      %104 = sbr.rel (0) target = $region49
    $region48: #{tpu_custom_call.1} parent=1 // pred_region
      _
    $region49: #{tpu_custom_call.1} parent=1 // pred_fallthru
      _
    // Predicated region
    $region50: #{tpu_custom_call.1} parent=1 // pred_check
      _
    $region51: #{tpu_custom_call.1} parent=1 // pred_check_branch
      %106 = sbr.rel (0) target = $region53
    $region52: #{tpu_custom_call.1} parent=1 // pred_region
      _
    $region53: #{tpu_custom_call.1} parent=1 // pred_fallthru
      _
    // Predicated region
    $region54: #{tpu_custom_call.1} parent=1 // pred_check
      _
    $region55: #{tpu_custom_call.1} parent=1 // pred_check_branch
      %108 = sbr.rel (0) target = $region57
    $region56: #{tpu_custom_call.1} parent=1 // pred_region
      _
    $region57: #{tpu_custom_call.1} parent=1 // pred_fallthru
      _
    // Predicated region
    $region58: #{tpu_custom_call.1} parent=1 // pred_check
      _
    $region59: #{tpu_custom_call.1} parent=1 // pred_check_branch
      %110 = sbr.rel (0) target = $region61
    $region60: #{tpu_custom_call.1} parent=1 // pred_region
      _
    $region61: #{tpu_custom_call.1} parent=1 // pred_fallthru
      _
    // Predicated region
    $region62: #{tpu_custom_call.1} parent=1 // pred_check
      _
    $region63: #{tpu_custom_call.1} parent=1 // pred_check_branch
      %112 = sbr.rel (0) target = $region65
    $region64: #{tpu_custom_call.1} parent=1 // pred_region
      _
    $region65: #{tpu_custom_call.1} parent=1 // pred_fallthru
      _
    // Predicated region
    $region66: #{tpu_custom_call.1} parent=1 // pred_check
      _
    $region67: #{tpu_custom_call.1} parent=1 // pred_check_branch
      %114 = sbr.rel (0) target = $region69
    $region68: #{tpu_custom_call.1} parent=1 // pred_region
      _
    $region69: #{tpu_custom_call.1} parent=1 // pred_fallthru
      _
    // Predicated region
    $region70: #{tpu_custom_call.1} parent=1 // pred_check
      _
    $region71: #{tpu_custom_call.1} parent=1 // pred_check_branch
      %116 = sbr.rel (0) target = $region73
    $region72: #{tpu_custom_call.1} parent=1 // pred_region
      _
    $region73: #{tpu_custom_call.1} parent=1 // pred_fallthru
      _
    // Predicated region
    $region74: #{tpu_custom_call.1} parent=1 // pred_check
      _
    $region75: #{tpu_custom_call.1} parent=1 // pred_check_branch
      %118 = sbr.rel (0) target = $region77
    $region76: #{tpu_custom_call.1} parent=1 // pred_region
      _
    $region77: #{tpu_custom_call.1} parent=1 // pred_fallthru
      _
    // Predicated region
    $region78: #{tpu_custom_call.1} parent=1 // pred_check
      _
    $region79: #{tpu_custom_call.1} parent=1 // pred_check_branch
      %120 = sbr.rel (0) target = $region81
    $region80: #{tpu_custom_call.1} parent=1 // pred_region
      _
    $region81: #{tpu_custom_call.1} parent=1 // pred_fallthru
      _
    // Predicated region
    $region82: #{tpu_custom_call.1} parent=1 // pred_check
      _
    $region83: #{tpu_custom_call.1} parent=1 // pred_check_branch
      %122 = sbr.rel (0) target = $region85
    $region84: #{tpu_custom_call.1} parent=1 // pred_region
      %123 = dma.done [#allocation3], 32
    $region85: #{tpu_custom_call.1} parent=1 // pred_fallthru
      _
    // Predicated region
    $region86: #{tpu_custom_call.1} parent=1 // pred_check
      _
    $region87: #{tpu_custom_call.1} parent=1 // pred_check_branch
      %125 = sbr.rel (0) target = $region89
    $region88: #{tpu_custom_call.1} parent=1 // pred_region
      %126 = dma.done [#allocation6], 32
    $region89: #{tpu_custom_call.1} parent=1 // pred_fallthru
      _
    // Predicated region
    $region90: #{tpu_custom_call.1} parent=1 // pred_check
      _
    $region91: #{tpu_custom_call.1} parent=1 // pred_check_branch
      %128 = sbr.rel (0) target = $region93
    $region92: #{tpu_custom_call.1} parent=1 // pred_region
      %129 = dma.done [#allocation6], 32
    $region93: #{tpu_custom_call.1} parent=1 // pred_fallthru
      _
    // Predicated region
    $region94: #{tpu_custom_call.1} parent=1 // pred_check
      _
    $region95: #{tpu_custom_call.1} parent=1 // pred_check_branch
      %131 = sbr.rel (0) target = $region97
    $region96: #{tpu_custom_call.1} parent=1 // pred_region
      %132 = dma.done [#allocation9], 16
    $region97: #{tpu_custom_call.1} parent=1 // pred_fallthru
      _
    // Predicated region
    $region98: #{tpu_custom_call.1} parent=1 // pred_check
      _
    $region99: #{tpu_custom_call.1} parent=1 // pred_check_branch
      %134 = sbr.rel (0) target = $region101
    $region100: #{tpu_custom_call.1} parent=1 // pred_region
      %135 = dma.done [#allocation9], 16
    $region101: #{tpu_custom_call.1} parent=1 // pred_fallthru
      _
    // Predicated region
    $region102: #{tpu_custom_call.1} parent=1 // pred_check
      _
    $region103: #{tpu_custom_call.1} parent=1 // pred_check_branch
      %137 = sbr.rel (0) target = $region105
    $region104: #{tpu_custom_call.1} parent=1 // pred_region
      %138 = dma.done [#allocation12], 16
    $region105: #{tpu_custom_call.1} parent=1 // pred_fallthru
      _
    %v139 = vld [vmem:[#allocation2] sm:$0x3]
    %v140 = vld [vmem:[%s3] sm:$0xff]
    %v141 = vld [vmem:[%s3 + $0x8] sm:$0xff]
    %v142 = vld [vmem:[%s3 + $0x10] sm:$0xff]
    %v143 = vld [vmem:[%s3 + $0x18] sm:$0xff]
    %v144 = vld [vmem:[%s3 + $0x20] sm:$0xff]
    %v145 = vld [vmem:[%s3 + $0x28] sm:$0xff]
    %v146 = vld [vmem:[%s3 + $0x30] sm:$0x7]
    %v147 = vld [vmem:[%s3 + $0x38] sm:$0x7]
    %v148 = vld [vmem:[#allocation7] sm:$0x3]
    %v150 = vlaneseq
    %v151 = vshrl.u32 %v150, 7
    %v152 = vsub.s32 0, %v151
    %v153 = vrot.slane %v148, %v152
    %v154 = vlaneseq
    %v155 = vshrl.u32 %v154, 7
    %v156 = vsub.s32 1, %v155
    %v157 = vrot.slane %v148, %v156
    %vm160 = vcmask 220160
    %v162 = vsel %vm160, %v139, 0
    %vm164 = vcmask 1042432
    %v166 = vsel %vm164, %v146, 0
    %v169 = vsel %vm164, %v147, 0
    %171 = vmatprep.subr.mxu0 0.0
    %172 = vmatpush1.msra.mxu0 0.0
    %173 = vmatprep.subr.mxu0 0.0
    %174 = vmatpush1.msra.mxu0 0.0
    %175 = vmatprep.subr.mxu0 0.0
    %176 = vmatpush1.msra.mxu0 0.0
    %177 = vmatprep.subr.mxu0 0.0
    %178 = vmatpush1.msra.mxu0 0.0
    %179 = vmatprep.subr.mxu0 0.0
    %180 = vmatpush1.msra.mxu0 0.0
    %181 = vmatprep.subr.mxu0 0.0
    %182 = vmatpush1.msra.mxu0 0.0
    %183 = vmatprep.subr.mxu0 0.0
    %184 = vmatpush1.msra.mxu0 0.0
    %185 = vmatprep.subr.mxu0 0.0
    %186 = vmatpush1.msra.mxu0 0.0
    %187 = vmatprep.subr.mxu0 0.0
    %188 = vmatpush1.msra.mxu0 0.0
    %189 = vmatprep.subr.mxu0 0.0
    %190 = vmatpush1.msra.mxu0 0.0
    %191 = vmatprep.subr.mxu0 0.0
    %192 = vmatpush1.msra.mxu0 0.0
    %193 = vmatprep.subr.mxu0 0.0
    %194 = vmatpush1.msra.mxu0 0.0
    %195 = vmatprep.subr.mxu0 %v169
    %196 = vmatpush1.msra.mxu0 %v166
    %197 = vmatprep.subr.mxu0 %v145
    %198 = vmatpush1.msra.mxu0 %v144
    %199 = vmatprep.subr.mxu0 %v143
    %200 = vmatpush1.msra.mxu0 %v142
    %201 = vmatprep.subr.mxu0 %v141
    %202 = vmatpush1.msra.mxu0 %v140
    %203 = vmatprep.subr.mxu0 0.0
    %204 = vmatpush2.msra.mxu0 0.0
    %205 = vmatprep.subr.mxu0 0.0
    %206 = vmatpush2.msra.mxu0 0.0
    %207 = vmatprep.subr.mxu0 0.0
    %208 = vmatpush2.msra.mxu0 0.0
    %209 = vmatprep.subr.mxu0 0.0
    %210 = vmatpush2.msra.mxu0 0.0
    %211 = vmatprep.subr.mxu0 0.0
    %212 = vmatpush2.msra.mxu0 0.0
    %213 = vmatprep.subr.mxu0 0.0
    %214 = vmatpush2.msra.mxu0 0.0
    %215 = vmatprep.subr.mxu0 0.0
    %216 = vmatpush2.msra.mxu0 0.0
    %217 = vmatprep.subr.mxu0 0.0
    %218 = vmatpush2.msra.mxu0 0.0
    %219 = vmatprep.subr.mxu0 0.0
    %220 = vmatpush2.msra.mxu0 0.0
    %221 = vmatprep.subr.mxu0 0.0
    %222 = vmatpush2.msra.mxu0 0.0
    %223 = vmatprep.subr.mxu0 0.0
    %224 = vmatpush2.msra.mxu0 0.0
    %225 = vmatprep.subr.mxu0 0.0
    %226 = vmatpush2.msra.mxu0 0.0
    %227 = vmatprep.subr.mxu0 0.0
    %228 = vmatpush2.msra.mxu0 0.0
    %229 = vmatprep.subr.mxu0 0.0
    %230 = vmatpush2.msra.mxu0 0.0
    %231 = vmatprep.subr.mxu0 0.0
    %232 = vmatpush2.msra.mxu0 0.0
    %233 = vmatprep.subr.mxu0 0.0
    %234 = vmatpush2.msra.mxu0 0.0
    %235 = vmatprep.mubr.f32.mxu0 0.0
    %236 = vmatmul.mubr.f32.gmra.mxu0 %v162
    %v237 = vpop.f32.mrf.mxu0
    %v238 = vadd.f32 %v153, %v237
    %v239 = vpop.f32.mrf.mxu0
    %v240 = vadd.f32 %v157, %v239
    %241 = vdwg.mxu0
    %v242 = vmax.f32 %v238, 0.0
    %v243 = vmax.f32 %v240, 0.0
    %v244 = vld [vmem:[%s5] sm:$0xff]
    %v245 = vld [vmem:[%s5 + $0x8] sm:$0xff]
    %v246 = vld [vmem:[%s5 + $0x10] sm:$0xff]
    %v247 = vld [vmem:[%s5 + $0x18] sm:$0xff]
    %v248 = vld [vmem:[%s5 + $0x20] sm:$0xff]
    %v249 = vld [vmem:[%s5 + $0x28] sm:$0xff]
    %v250 = vld [vmem:[%s5 + $0x30] sm:$0xff]
    %v251 = vld [vmem:[%s5 + $0x38] sm:$0xff]
    %v252 = vld [vmem:[%s5 + $0x40] sm:$0xff]
    %v253 = vld [vmem:[%s5 + $0x48] sm:$0xff]
    %v254 = vld [vmem:[%s5 + $0x50] sm:$0xff]
    %v255 = vld [vmem:[%s5 + $0x58] sm:$0xff]
    %v256 = vld [vmem:[%s5 + $0x60] sm:$0xff]
    %v257 = vld [vmem:[%s5 + $0x68] sm:$0xff]
    %v258 = vld [vmem:[%s5 + $0x70] sm:$0xff]
    %v259 = vld [vmem:[%s5 + $0x78] sm:$0xff]
    %v260 = vld [vmem:[%s5 + $0x80] sm:$0xff]
    %v261 = vld [vmem:[%s5 + $0x88] sm:$0xff]
    %v262 = vld [vmem:[#allocation8] sm:$0x1]
    %v264 = vlaneseq
    %v265 = vshrl.u32 %v264, 7
    %v266 = vsub.s32 0, %v265
    %v267 = vrot.slane %v262, %v266
    %vm269 = vcmask 130048
    %v271 = vsel %vm269, %v243, 0
    %273 = vmatprep.subr.mxu0 0.0
    %274 = vmatpush1.msra.mxu0 %v259
    %275 = vmatprep.subr.mxu0 0.0
    %276 = vmatpush1.msra.mxu0 %v258
    %277 = vmatprep.subr.mxu0 0.0
    %278 = vmatpush1.msra.mxu0 %v257
    %279 = vmatprep.subr.mxu0 0.0
    %280 = vmatpush1.msra.mxu0 %v256
    %281 = vmatprep.subr.mxu0 0.0
    %282 = vmatpush1.msra.mxu0 %v255
    %283 = vmatprep.subr.mxu0 0.0
    %284 = vmatpush1.msra.mxu0 %v254
    %285 = vmatprep.subr.mxu0 0.0
    %286 = vmatpush1.msra.mxu0 %v253
    %287 = vmatprep.subr.mxu0 0.0
    %288 = vmatpush1.msra.mxu0 %v252
    %289 = vmatprep.subr.mxu0 0.0
    %290 = vmatpush1.msra.mxu0 %v251
    %291 = vmatprep.subr.mxu0 0.0
    %292 = vmatpush1.msra.mxu0 %v250
    %293 = vmatprep.subr.mxu0 0.0
    %294 = vmatpush1.msra.mxu0 %v249
    %295 = vmatprep.subr.mxu0 0.0
    %296 = vmatpush1.msra.mxu0 %v248
    %297 = vmatprep.subr.mxu0 0.0
    %298 = vmatpush1.msra.mxu0 %v247
    %299 = vmatprep.subr.mxu0 0.0
    %300 = vmatpush1.msra.mxu0 %v246
    %301 = vmatprep.subr.mxu0 0.0
    %302 = vmatpush1.msra.mxu0 %v245
    %303 = vmatprep.subr.mxu0 0.0
    %304 = vmatpush1.msra.mxu0 %v244
    %305 = vmatprep.subr.mxu0 0.0
    %306 = vmatpush2.msra.mxu0 0.0
    %307 = vmatprep.subr.mxu0 0.0
    %308 = vmatpush2.msra.mxu0 0.0
    %309 = vmatprep.subr.mxu0 0.0
    %310 = vmatpush2.msra.mxu0 0.0
    %311 = vmatprep.subr.mxu0 0.0
    %312 = vmatpush2.msra.mxu0 0.0
    %313 = vmatprep.subr.mxu0 0.0
    %314 = vmatpush2.msra.mxu0 0.0
    %315 = vmatprep.subr.mxu0 0.0
    %316 = vmatpush2.msra.mxu0 0.0
    %317 = vmatprep.subr.mxu0 0.0
    %318 = vmatpush2.msra.mxu0 0.0
    %319 = vmatprep.subr.mxu0 0.0
    %320 = vmatpush2.msra.mxu0 0.0
    %321 = vmatprep.subr.mxu0 0.0
    %322 = vmatpush2.msra.mxu0 0.0
    %323 = vmatprep.subr.mxu0 0.0
    %324 = vmatpush2.msra.mxu0 0.0
    %325 = vmatprep.subr.mxu0 0.0
    %326 = vmatpush2.msra.mxu0 0.0
    %327 = vmatprep.subr.mxu0 0.0
    %328 = vmatpush2.msra.mxu0 0.0
    %329 = vmatprep.subr.mxu0 0.0
    %330 = vmatpush2.msra.mxu0 0.0
    %331 = vmatprep.subr.mxu0 0.0
    %332 = vmatpush2.msra.mxu0 0.0
    %333 = vmatprep.subr.mxu0 0.0
    %334 = vmatpush2.msra.mxu0 %v261
    %335 = vmatprep.subr.mxu0 0.0
    %336 = vmatpush2.msra.mxu0 %v260
    %337 = vmatprep.mubr.f32.mxu0 %v271
    %338 = vmatmul.mubr.f32.gmra.mxu0 %v242
    %v339 = vpop.f32.mrf.mxu0
    %v340 = vadd.f32 %v267, %v339
    %v341 = vpop.f32.mrf.mxu0
    %342 = vdwg.mxu0
    %v343 = vmax.f32 %v340, 0.0
    %v344 = vld [vmem:[%s7] sm:$0xff]
    %v345 = vld [vmem:[%s7 + $0x8] sm:$0xff]
    %v346 = vld [vmem:[%s7 + $0x10] sm:$0xff]
    %v347 = vld [vmem:[%s7 + $0x18] sm:$0xff]
    %v348 = vld [vmem:[%s7 + $0x20] sm:$0xff]
    %v349 = vld [vmem:[%s7 + $0x28] sm:$0xff]
    %v350 = vld [vmem:[%s7 + $0x30] sm:$0xff]
    %v351 = vld [vmem:[%s7 + $0x38] sm:$0xff]
    %v352 = vld [vmem:[%s7 + $0x40] sm:$0xff]
    %v353 = vld [vmem:[%s7 + $0x48] sm:$0xff]
    %v354 = vld [vmem:[%s7 + $0x50] sm:$0xff]
    %v355 = vld [vmem:[%s7 + $0x58] sm:$0xff]
    %v356 = vld [vmem:[#allocation10] sm:$0x1]
    %v358 = vlaneseq
    %v359 = vshrl.u32 %v358, 7
    %v360 = vsub.s32 0, %v359
    %v361 = vrot.slane %v356, %v360
    %vm363 = vcmask 785408
    %v365 = vsel %vm363, %v343, 0
    %367 = vmatprep.subr.mxu0 0.0
    %368 = vmatpush1.msra.mxu0 0.0
    %369 = vmatprep.subr.mxu0 0.0
    %370 = vmatpush1.msra.mxu0 0.0
    %371 = vmatprep.subr.mxu0 0.0
    %372 = vmatpush1.msra.mxu0 0.0
    %373 = vmatprep.subr.mxu0 0.0
    %374 = vmatpush1.msra.mxu0 0.0
    %375 = vmatprep.subr.mxu0 0.0
    %376 = vmatpush1.msra.mxu0 %v355
    %377 = vmatprep.subr.mxu0 0.0
    %378 = vmatpush1.msra.mxu0 %v354
    %379 = vmatprep.subr.mxu0 0.0
    %380 = vmatpush1.msra.mxu0 %v353
    %381 = vmatprep.subr.mxu0 0.0
    %382 = vmatpush1.msra.mxu0 %v352
    %383 = vmatprep.subr.mxu0 0.0
    %384 = vmatpush1.msra.mxu0 %v351
    %385 = vmatprep.subr.mxu0 0.0
    %386 = vmatpush1.msra.mxu0 %v350
    %387 = vmatprep.subr.mxu0 0.0
    %388 = vmatpush1.msra.mxu0 %v349
    %389 = vmatprep.subr.mxu0 0.0
    %390 = vmatpush1.msra.mxu0 %v348
    %391 = vmatprep.subr.mxu0 0.0
    %392 = vmatpush1.msra.mxu0 %v347
    %393 = vmatprep.subr.mxu0 0.0
    %394 = vmatpush1.msra.mxu0 %v346
    %395 = vmatprep.subr.mxu0 0.0
    %396 = vmatpush1.msra.mxu0 %v345
    %397 = vmatprep.subr.mxu0 0.0
    %398 = vmatpush1.msra.mxu0 %v344
    %399 = vmatprep.subr.mxu0 0.0
    %400 = vmatpush2.msra.mxu0 0.0
    %401 = vmatprep.subr.mxu0 0.0
    %402 = vmatpush2.msra.mxu0 0.0
    %403 = vmatprep.subr.mxu0 0.0
    %404 = vmatpush2.msra.mxu0 0.0
    %405 = vmatprep.subr.mxu0 0.0
    %406 = vmatpush2.msra.mxu0 0.0
    %407 = vmatprep.subr.mxu0 0.0
    %408 = vmatpush2.msra.mxu0 0.0
    %409 = vmatprep.subr.mxu0 0.0
    %410 = vmatpush2.msra.mxu0 0.0
    %411 = vmatprep.subr.mxu0 0.0
    %412 = vmatpush2.msra.mxu0 0.0
    %413 = vmatprep.subr.mxu0 0.0
    %414 = vmatpush2.msra.mxu0 0.0
    %415 = vmatprep.subr.mxu0 0.0
    %416 = vmatpush2.msra.mxu0 0.0
    %417 = vmatprep.subr.mxu0 0.0
    %418 = vmatpush2.msra.mxu0 0.0
    %419 = vmatprep.subr.mxu0 0.0
    %420 = vmatpush2.msra.mxu0 0.0
    %421 = vmatprep.subr.mxu0 0.0
    %422 = vmatpush2.msra.mxu0 0.0
    %423 = vmatprep.subr.mxu0 0.0
    %424 = vmatpush2.msra.mxu0 0.0
    %425 = vmatprep.subr.mxu0 0.0
    %426 = vmatpush2.msra.mxu0 0.0
    %427 = vmatprep.subr.mxu0 0.0
    %428 = vmatpush2.msra.mxu0 0.0
    %429 = vmatprep.subr.mxu0 0.0
    %430 = vmatpush2.msra.mxu0 0.0
    %431 = vmatprep.mubr.f32.mxu0 0.0
    %432 = vmatmul.mubr.f32.gmra.mxu0 %v365
    %v433 = vpop.f32.mrf.mxu0
    %v434 = vadd.f32 %v361, %v433
    %v435 = vpop.f32.mrf.mxu0
    %436 = vdwg.mxu0
    %v437 = vmax.f32 %v434, 0.0
    %v438 = vld [vmem:[%s9] sm:$0xff]
    %v439 = vld [vmem:[%s9 + $0x8] sm:$0xff]
    %v440 = vld [vmem:[%s9 + $0x10] sm:$0xff]
    %v441 = vld [vmem:[%s9 + $0x18] sm:$0xff]
    %v442 = vld [vmem:[%s9 + $0x20] sm:$0xff]
    %v443 = vld [vmem:[%s9 + $0x28] sm:$0xff]
    %v444 = vld [vmem:[%s9 + $0x30] sm:$0xff]
    %v445 = vld [vmem:[%s9 + $0x38] sm:$0xff]
    %v446 = vld [vmem:[%s9 + $0x40] sm:$0xff]
    %v447 = vld [vmem:[%s9 + $0x48] sm:$0xff]
    %v448 = vld [vmem:[%s9 + $0x50] sm:$0xff]
    %v449 = vld [vmem:[%s9 + $0x58] sm:$0xff]
    %v450 = vld [vmem:[#allocation11] sm:$0x1]
    %v452 = vlaneseq
    %v453 = vshrl.u32 %v452, 7
    %v454 = vsub.s32 0, %v453
    %v455 = vrot.slane %v450, %v454
    %v458 = vsel %vm363, %v437, 0
    %460 = vmatprep.subr.mxu0 0.0
    %461 = vmatpush1.msra.mxu0 0.0
    %462 = vmatprep.subr.mxu0 0.0
    %463 = vmatpush1.msra.mxu0 0.0
    %464 = vmatprep.subr.mxu0 0.0
    %465 = vmatpush1.msra.mxu0 0.0
    %466 = vmatprep.subr.mxu0 0.0
    %467 = vmatpush1.msra.mxu0 0.0
    %468 = vmatprep.subr.mxu0 0.0
    %469 = vmatpush1.msra.mxu0 %v449
    %470 = vmatprep.subr.mxu0 0.0
    %471 = vmatpush1.msra.mxu0 %v448
    %472 = vmatprep.subr.mxu0 0.0
    %473 = vmatpush1.msra.mxu0 %v447
    %474 = vmatprep.subr.mxu0 0.0
    %475 = vmatpush1.msra.mxu0 %v446
    %476 = vmatprep.subr.mxu0 0.0
    %477 = vmatpush1.msra.mxu0 %v445
    %478 = vmatprep.subr.mxu0 0.0
    %479 = vmatpush1.msra.mxu0 %v444
    %480 = vmatprep.subr.mxu0 0.0
    %481 = vmatpush1.msra.mxu0 %v443
    %482 = vmatprep.subr.mxu0 0.0
    %483 = vmatpush1.msra.mxu0 %v442
    %484 = vmatprep.subr.mxu0 0.0
    %485 = vmatpush1.msra.mxu0 %v441
    %486 = vmatprep.subr.mxu0 0.0
    %487 = vmatpush1.msra.mxu0 %v440
    %488 = vmatprep.subr.mxu0 0.0
    %489 = vmatpush1.msra.mxu0 %v439
    %490 = vmatprep.subr.mxu0 0.0
    %491 = vmatpush1.msra.mxu0 %v438
    %492 = vmatprep.subr.mxu0 0.0
    %493 = vmatpush2.msra.mxu0 0.0
    %494 = vmatprep.subr.mxu0 0.0
    %495 = vmatpush2.msra.mxu0 0.0
    %496 = vmatprep.subr.mxu0 0.0
    %497 = vmatpush2.msra.mxu0 0.0
    %498 = vmatprep.subr.mxu0 0.0
    %499 = vmatpush2.msra.mxu0 0.0
    %500 = vmatprep.subr.mxu0 0.0
    %501 = vmatpush2.msra.mxu0 0.0
    %502 = vmatprep.subr.mxu0 0.0
    %503 = vmatpush2.msra.mxu0 0.0
    %504 = vmatprep.subr.mxu0 0.0
    %505 = vmatpush2.msra.mxu0 0.0
    %506 = vmatprep.subr.mxu0 0.0
    %507 = vmatpush2.msra.mxu0 0.0
    %508 = vmatprep.subr.mxu0 0.0
    %509 = vmatpush2.msra.mxu0 0.0
    %510 = vmatprep.subr.mxu0 0.0
    %511 = vmatpush2.msra.mxu0 0.0
    %512 = vmatprep.subr.mxu0 0.0
    %513 = vmatpush2.msra.mxu0 0.0
    %514 = vmatprep.subr.mxu0 0.0
    %515 = vmatpush2.msra.mxu0 0.0
    %516 = vmatprep.subr.mxu0 0.0
    %517 = vmatpush2.msra.mxu0 0.0
    %518 = vmatprep.subr.mxu0 0.0
    %519 = vmatpush2.msra.mxu0 0.0
    %520 = vmatprep.subr.mxu0 0.0
    %521 = vmatpush2.msra.mxu0 0.0
    %522 = vmatprep.subr.mxu0 0.0
    %523 = vmatpush2.msra.mxu0 0.0
    %524 = vmatprep.mubr.f32.mxu0 0.0
    %525 = vmatmul.mubr.f32.gmra.mxu0 %v458
    %v526 = vpop.f32.mrf.mxu0
    %v527 = vadd.f32 %v455, %v526
    %v528 = vpop.f32.mrf.mxu0
    %529 = vdwg.mxu0
    %v530 = vld [vmem:[#allocation5] sm:$0x3]
    %532 = vrot.lane.b32.xlu0 %v530, 6
    %v533 = vpop.permute.xlu0 %532
    %vm535 = vcmask 48128
    %v536 = vsel %vm535, %v527, %v533
    %v537 = vld [vmem:[%s18] sm:$0xff]
    %v538 = vld [vmem:[%s18 + $0x8] sm:$0xf]
    %v539 = vld [vmem:[%s19] sm:$0x1]
    %v541 = vlaneseq
    %v542 = vshrl.u32 %v541, 7
    %v543 = vsub.s32 0, %v542
    %v544 = vrot.slane %v539, %v543
    %vm546 = vcmask 97280
    %v548 = vsel %vm546, %v536, 0
    %vm550 = vcmask 1043456
    %v552 = vsel %vm550, %v538, 0
    %554 = vmatprep.subr.mxu0 0.0
    %555 = vmatpush1.msra.mxu0 0.0
    %556 = vmatprep.subr.mxu0 0.0
    %557 = vmatpush1.msra.mxu0 0.0
    %558 = vmatprep.subr.mxu0 0.0
    %559 = vmatpush1.msra.mxu0 0.0
    %560 = vmatprep.subr.mxu0 0.0
    %561 = vmatpush1.msra.mxu0 0.0
    %562 = vmatprep.subr.mxu0 0.0
    %563 = vmatpush1.msra.mxu0 0.0
    %564 = vmatprep.subr.mxu0 0.0
    %565 = vmatpush1.msra.mxu0 0.0
    %566 = vmatprep.subr.mxu0 0.0
    %567 = vmatpush1.msra.mxu0 0.0
    %568 = vmatprep.subr.mxu0 0.0
    %569 = vmatpush1.msra.mxu0 0.0
    %570 = vmatprep.subr.mxu0 0.0
    %571 = vmatpush1.msra.mxu0 0.0
    %572 = vmatprep.subr.mxu0 0.0
    %573 = vmatpush1.msra.mxu0 0.0
    %574 = vmatprep.subr.mxu0 0.0
    %575 = vmatpush1.msra.mxu0 0.0
    %576 = vmatprep.subr.mxu0 0.0
    %577 = vmatpush1.msra.mxu0 0.0
    %578 = vmatprep.subr.mxu0 0.0
    %579 = vmatpush1.msra.mxu0 0.0
    %580 = vmatprep.subr.mxu0 0.0
    %581 = vmatpush1.msra.mxu0 0.0
    %582 = vmatprep.subr.mxu0 0.0
    %583 = vmatpush1.msra.mxu0 %v552
    %584 = vmatprep.subr.mxu0 0.0
    %585 = vmatpush1.msra.mxu0 %v537
    %586 = vmatprep.subr.mxu0 0.0
    %587 = vmatpush2.msra.mxu0 0.0
    %588 = vmatprep.subr.mxu0 0.0
    %589 = vmatpush2.msra.mxu0 0.0
    %590 = vmatprep.subr.mxu0 0.0
    %591 = vmatpush2.msra.mxu0 0.0
    %592 = vmatprep.subr.mxu0 0.0
    %593 = vmatpush2.msra.mxu0 0.0
    %594 = vmatprep.subr.mxu0 0.0
    %595 = vmatpush2.msra.mxu0 0.0
    %596 = vmatprep.subr.mxu0 0.0
    %597 = vmatpush2.msra.mxu0 0.0
    %598 = vmatprep.subr.mxu0 0.0
    %599 = vmatpush2.msra.mxu0 0.0
    %600 = vmatprep.subr.mxu0 0.0
    %601 = vmatpush2.msra.mxu0 0.0
    %602 = vmatprep.subr.mxu0 0.0
    %603 = vmatpush2.msra.mxu0 0.0
    %604 = vmatprep.subr.mxu0 0.0
    %605 = vmatpush2.msra.mxu0 0.0
    %606 = vmatprep.subr.mxu0 0.0
    %607 = vmatpush2.msra.mxu0 0.0
    %608 = vmatprep.subr.mxu0 0.0
    %609 = vmatpush2.msra.mxu0 0.0
    %610 = vmatprep.subr.mxu0 0.0
    %611 = vmatpush2.msra.mxu0 0.0
    %612 = vmatprep.subr.mxu0 0.0
    %613 = vmatpush2.msra.mxu0 0.0
    %614 = vmatprep.subr.mxu0 0.0
    %615 = vmatpush2.msra.mxu0 0.0
    %616 = vmatprep.subr.mxu0 0.0
    %617 = vmatpush2.msra.mxu0 0.0
    %618 = vmatprep.mubr.f32.mxu0 0.0
    %619 = vmatmul.mubr.f32.gmra.mxu0 %v548
    %v620 = vpop.f32.mrf.mxu0
    %v621 = vadd.f32 %v544, %v620
    %v622 = vpop.f32.mrf.mxu0
    %623 = vdwg.mxu0
    %v624 = vlaneseq
    %v625 = vand.u32 %v624, 127
    %vm626 = vcmp.ge.s32.totalorder %v625, 64
    %vm627 = vcmp.lt.s32.totalorder %v625, 96
    %vm628 = vmand %vm626, %vm627
    %v629 = vsel %vm628, 1.0, 0.5
    %v630 = vsel %vm628, 0.0, 0.5
    %v631 = vld [vmem:[%s0] sm:$0xff]
    %v632 = vld [vmem:[%s0 + $0x8] sm:$0xff]
    %v633 = vld [vmem:[%s11] sm:$0xf]
    %v634 = vld [vmem:[%s12] sm:$0xff]
    %v635 = vld [vmem:[%s12 + $0x8] sm:$0xff]
    %v636 = vld [vmem:[%s12 + $0x10] sm:$0xff]
    %v637 = vld [vmem:[%s12 + $0x18] sm:$0xff]
    %v638 = vld [vmem:[%s13] sm:$0x1]
    %v640 = vlaneseq
    %v641 = vshrl.u32 %v640, 7
    %v642 = vsub.s32 0, %v641
    %v643 = vrot.slane %v638, %v642
    %vm645 = vcmask 31744
    %v647 = vsel %vm645, %v631, 0
    %v650 = vsel %vm645, %v632, 0
    %v653 = vsel %vm550, %v633, 0
    %655 = vmatprep.subr.mxu0 0.0
    %656 = vmatpush1.msra.mxu0 0.0
    %657 = vmatprep.subr.mxu0 0.0
    %658 = vmatpush1.msra.mxu0 0.0
    %659 = vmatprep.subr.mxu0 0.0
    %660 = vmatpush1.msra.mxu0 0.0
    %661 = vmatprep.subr.mxu0 0.0
    %662 = vmatpush1.msra.mxu0 0.0
    %663 = vmatprep.subr.mxu0 0.0
    %664 = vmatpush1.msra.mxu0 0.0
    %665 = vmatprep.subr.mxu0 0.0
    %666 = vmatpush1.msra.mxu0 0.0
    %667 = vmatprep.subr.mxu0 0.0
    %668 = vmatpush1.msra.mxu0 0.0
    %669 = vmatprep.subr.mxu0 0.0
    %670 = vmatpush1.msra.mxu0 0.0
    %671 = vmatprep.subr.mxu0 0.0
    %672 = vmatpush1.msra.mxu0 0.0
    %673 = vmatprep.subr.mxu0 0.0
    %674 = vmatpush1.msra.mxu0 0.0
    %675 = vmatprep.subr.mxu0 0.0
    %676 = vmatpush1.msra.mxu0 0.0
    %677 = vmatprep.subr.mxu0 0.0
    %678 = vmatpush1.msra.mxu0 0.0
    %679 = vmatprep.subr.mxu0 0.0
    %680 = vmatpush1.msra.mxu0 0.0
    %681 = vmatprep.subr.mxu0 0.0
    %682 = vmatpush1.msra.mxu0 0.0
    %683 = vmatprep.subr.mxu0 0.0
    %684 = vmatpush1.msra.mxu0 0.0
    %685 = vmatprep.subr.mxu0 0.0
    %686 = vmatpush1.msra.mxu0 %v653
    %687 = vmatprep.subr.mxu0 0.0
    %688 = vmatpush2.msra.mxu0 0.0
    %689 = vmatprep.subr.mxu0 0.0
    %690 = vmatpush2.msra.mxu0 0.0
    %691 = vmatprep.subr.mxu0 0.0
    %692 = vmatpush2.msra.mxu0 0.0
    %693 = vmatprep.subr.mxu0 0.0
    %694 = vmatpush2.msra.mxu0 0.0
    %695 = vmatprep.subr.mxu0 0.0
    %696 = vmatpush2.msra.mxu0 0.0
    %697 = vmatprep.subr.mxu0 0.0
    %698 = vmatpush2.msra.mxu0 0.0
    %699 = vmatprep.subr.mxu0 0.0
    %700 = vmatpush2.msra.mxu0 0.0
    %701 = vmatprep.subr.mxu0 0.0
    %702 = vmatpush2.msra.mxu0 0.0
    %703 = vmatprep.subr.mxu0 0.0
    %704 = vmatpush2.msra.mxu0 0.0
    %705 = vmatprep.subr.mxu0 0.0
    %706 = vmatpush2.msra.mxu0 0.0
    %707 = vmatprep.subr.mxu0 0.0
    %708 = vmatpush2.msra.mxu0 0.0
    %709 = vmatprep.subr.mxu0 0.0
    %710 = vmatpush2.msra.mxu0 0.0
    %711 = vmatprep.subr.mxu0 0.0
    %712 = vmatpush2.msra.mxu0 0.0
    %713 = vmatprep.subr.mxu0 0.0
    %714 = vmatpush2.msra.mxu0 0.0
    %715 = vmatprep.subr.mxu0 0.0
    %716 = vmatpush2.msra.mxu0 0.0
    %717 = vmatprep.subr.mxu0 0.0
    %718 = vmatpush2.msra.mxu0 0.0
    %719 = vmatprep.mubr.f32.mxu0 0.0
    %720 = vmatmul.mubr.f32.gmra.mxu0 %v647
    %v721 = vpop.f32.mrf.mxu0
    %v722 = vadd.f32 %v643, %v721
    %v723 = vpop.f32.mrf.mxu0
    %724 = vmatprep.mubr.f32.mxu0 0.0
    %725 = vmatmul.mubr.f32.gmra.mxu0 %v650
    %v726 = vpop.f32.mrf.mxu0
    %v727 = vadd.f32 %v643, %v726
    %v728 = vpop.f32.mrf.mxu0
    %729 = vdwg.mxu0
    %vm730 = vcmask 261120
    %v732 = vsel %vm730, 0.0, 0
    %734 = vmatprep.subr.mxu0 0.0
    %735 = vmatpush1.msra.mxu0 0.0
    %736 = vmatprep.subr.mxu0 0.0
    %737 = vmatpush1.msra.mxu0 0.0
    %738 = vmatprep.subr.mxu0 0.0
    %739 = vmatpush1.msra.mxu0 0.0
    %740 = vmatprep.subr.mxu0 0.0
    %741 = vmatpush1.msra.mxu0 0.0
    %742 = vmatprep.subr.mxu0 0.0
    %743 = vmatpush1.msra.mxu0 0.0
    %744 = vmatprep.subr.mxu0 0.0
    %745 = vmatpush1.msra.mxu0 0.0
    %746 = vmatprep.subr.mxu0 0.0
    %747 = vmatpush1.msra.mxu0 0.0
    %748 = vmatprep.subr.mxu0 0.0
    %749 = vmatpush1.msra.mxu0 0.0
    %750 = vmatprep.subr.mxu0 0.0
    %751 = vmatpush1.msra.mxu0 0.0
    %752 = vmatprep.subr.mxu0 0.0
    %753 = vmatpush1.msra.mxu0 0.0
    %754 = vmatprep.subr.mxu0 0.0
    %755 = vmatpush1.msra.mxu0 0.0
    %756 = vmatprep.subr.mxu0 0.0
    %757 = vmatpush1.msra.mxu0 0.0
    %758 = vmatprep.subr.mxu0 0.0
    %759 = vmatpush1.msra.mxu0 %v637
    %760 = vmatprep.subr.mxu0 0.0
    %761 = vmatpush1.msra.mxu0 %v636
    %762 = vmatprep.subr.mxu0 0.0
    %763 = vmatpush1.msra.mxu0 %v635
    %764 = vmatprep.subr.mxu0 0.0
    %765 = vmatpush1.msra.mxu0 %v634
    %766 = vmatprep.subr.mxu0 0.0
    %767 = vmatpush2.msra.mxu0 0.0
    %768 = vmatprep.subr.mxu0 0.0
    %769 = vmatpush2.msra.mxu0 0.0
    %770 = vmatprep.subr.mxu0 0.0
    %771 = vmatpush2.msra.mxu0 0.0
    %772 = vmatprep.subr.mxu0 0.0
    %773 = vmatpush2.msra.mxu0 0.0
    %774 = vmatprep.subr.mxu0 0.0
    %775 = vmatpush2.msra.mxu0 0.0
    %776 = vmatprep.subr.mxu0 0.0
    %777 = vmatpush2.msra.mxu0 0.0
    %778 = vmatprep.subr.mxu0 0.0
    %779 = vmatpush2.msra.mxu0 0.0
    %780 = vmatprep.subr.mxu0 0.0
    %781 = vmatpush2.msra.mxu0 0.0
    %782 = vmatprep.subr.mxu0 0.0
    %783 = vmatpush2.msra.mxu0 0.0
    %784 = vmatprep.subr.mxu0 0.0
    %785 = vmatpush2.msra.mxu0 0.0
    %786 = vmatprep.subr.mxu0 0.0
    %787 = vmatpush2.msra.mxu0 0.0
    %788 = vmatprep.subr.mxu0 0.0
    %789 = vmatpush2.msra.mxu0 0.0
    %790 = vmatprep.subr.mxu0 0.0
    %791 = vmatpush2.msra.mxu0 0.0
    %792 = vmatprep.subr.mxu0 0.0
    %793 = vmatpush2.msra.mxu0 0.0
    %794 = vmatprep.subr.mxu0 0.0
    %795 = vmatpush2.msra.mxu0 0.0
    %796 = vmatprep.subr.mxu0 0.0
    %797 = vmatpush2.msra.mxu0 0.0
    %798 = vmatprep.mubr.f32.mxu0 0.0
    %799 = vmatmul.mubr.f32.gmra.mxu0 %v732
    %v800 = vpop.f32.mrf.mxu0
    %v801 = vadd.f32 0.0, %v800
    %v802 = vpop.f32.mrf.mxu0
    %803 = vdwg.mxu0
    %v804 = vadd.f32 %v722, %v801
    %v805 = vmul.f32 %v804, %v629
    %v806 = vtanh.pop %v805
    %v807 = vmul.f32 %v806, %v629
    %v808 = vadd.f32 %v807, %v630
    %v809 = vmul.f32 %v808, 0.0
    %811 = vrot.lane.b32.xlu0 %v808, 64
    %v812 = vpop.permute.xlu0 %811
    %v814 = vmul.f32 %v808, %v812
    %816 = vrot.lane.b32.xlu0 %v814, 32
    %v817 = vpop.permute.xlu0 %816
    %v819 = vadd.f32 %v809, %v817
    %v820 = vtanh.pop %v819
    %822 = vrot.lane.b32.xlu0 %v820, 64
    %v823 = vpop.permute.xlu0 %822
    %v825 = vmul.f32 %v808, %v823
    %827 = vrot.lane.b32.xlu0 %v825, 32
    %v828 = vpop.permute.xlu0 %827
    %v829 = vsel %vm730, %v828, 0
    %831 = vmatprep.subr.mxu0 0.0
    %832 = vmatpush1.msra.mxu0 0.0
    %833 = vmatprep.subr.mxu0 0.0
    %834 = vmatpush1.msra.mxu0 0.0
    %835 = vmatprep.subr.mxu0 0.0
    %836 = vmatpush1.msra.mxu0 0.0
    %837 = vmatprep.subr.mxu0 0.0
    %838 = vmatpush1.msra.mxu0 0.0
    %839 = vmatprep.subr.mxu0 0.0
    %840 = vmatpush1.msra.mxu0 0.0
    %841 = vmatprep.subr.mxu0 0.0
    %842 = vmatpush1.msra.mxu0 0.0
    %843 = vmatprep.subr.mxu0 0.0
    %844 = vmatpush1.msra.mxu0 0.0
    %845 = vmatprep.subr.mxu0 0.0
    %846 = vmatpush1.msra.mxu0 0.0
    %847 = vmatprep.subr.mxu0 0.0
    %848 = vmatpush1.msra.mxu0 0.0
    %849 = vmatprep.subr.mxu0 0.0
    %850 = vmatpush1.msra.mxu0 0.0
    %851 = vmatprep.subr.mxu0 0.0
    %852 = vmatpush1.msra.mxu0 0.0
    %853 = vmatprep.subr.mxu0 0.0
    %854 = vmatpush1.msra.mxu0 0.0
    %855 = vmatprep.subr.mxu0 0.0
    %856 = vmatpush1.msra.mxu0 %v637
    %857 = vmatprep.subr.mxu0 0.0
    %858 = vmatpush1.msra.mxu0 %v636
    %859 = vmatprep.subr.mxu0 0.0
    %860 = vmatpush1.msra.mxu0 %v635
    %861 = vmatprep.subr.mxu0 0.0
    %862 = vmatpush1.msra.mxu0 %v634
    %863 = vmatprep.subr.mxu0 0.0
    %864 = vmatpush2.msra.mxu0 0.0
    %865 = vmatprep.subr.mxu0 0.0
    %866 = vmatpush2.msra.mxu0 0.0
    %867 = vmatprep.subr.mxu0 0.0
    %868 = vmatpush2.msra.mxu0 0.0
    %869 = vmatprep.subr.mxu0 0.0
    %870 = vmatpush2.msra.mxu0 0.0
    %871 = vmatprep.subr.mxu0 0.0
    %872 = vmatpush2.msra.mxu0 0.0
    %873 = vmatprep.subr.mxu0 0.0
    %874 = vmatpush2.msra.mxu0 0.0
    %875 = vmatprep.subr.mxu0 0.0
    %876 = vmatpush2.msra.mxu0 0.0
    %877 = vmatprep.subr.mxu0 0.0
    %878 = vmatpush2.msra.mxu0 0.0
    %879 = vmatprep.subr.mxu0 0.0
    %880 = vmatpush2.msra.mxu0 0.0
    %881 = vmatprep.subr.mxu0 0.0
    %882 = vmatpush2.msra.mxu0 0.0
    %883 = vmatprep.subr.mxu0 0.0
    %884 = vmatpush2.msra.mxu0 0.0
    %885 = vmatprep.subr.mxu0 0.0
    %886 = vmatpush2.msra.mxu0 0.0
    %887 = vmatprep.subr.mxu0 0.0
    %888 = vmatpush2.msra.mxu0 0.0
    %889 = vmatprep.subr.mxu0 0.0
    %890 = vmatpush2.msra.mxu0 0.0
    %891 = vmatprep.subr.mxu0 0.0
    %892 = vmatpush2.msra.mxu0 0.0
    %893 = vmatprep.subr.mxu0 0.0
    %894 = vmatpush2.msra.mxu0 0.0
    %895 = vmatprep.mubr.f32.mxu0 0.0
    %896 = vmatmul.mubr.f32.gmra.mxu0 %v829
    %v897 = vpop.f32.mrf.mxu0
    %v898 = vadd.f32 0.0, %v897
    %v899 = vpop.f32.mrf.mxu0
    %900 = vdwg.mxu0
    %v902 = vrot.slane %v898, 6
    %v904 = vadd.f32 %v722, %v902
    %v905 = vmul.f32 %v904, %v629
    %v906 = vtanh.pop %v905
    %v907 = vmul.f32 %v906, %v629
    %v908 = vadd.f32 %v907, %v630
    %v910 = vrot.slane %v819, 6
    %v912 = vmul.f32 %v908, %v910
    %914 = vrot.lane.b32.xlu0 %v908, 64
    %v915 = vpop.permute.xlu0 %914
    %v917 = vmul.f32 %v908, %v915
    %919 = vrot.lane.b32.xlu0 %v917, 32
    %v920 = vpop.permute.xlu0 %919
    %v922 = vadd.f32 %v912, %v920
    %v923 = vtanh.pop %v922
    %925 = vrot.lane.b32.xlu0 %v923, 64
    %v926 = vpop.permute.xlu0 %925
    %v928 = vmul.f32 %v908, %v926
    %v930 = vrot.slane %v928, 2
    %931 = vrot.lane.b32.xlu0 %v930, 32
    %v932 = vpop.permute.xlu0 %931
    %v933 = vsel %vm730, %v932, 0
    %935 = vmatprep.subr.mxu0 0.0
    %936 = vmatpush1.msra.mxu0 0.0
    %937 = vmatprep.subr.mxu0 0.0
    %938 = vmatpush1.msra.mxu0 0.0
    %939 = vmatprep.subr.mxu0 0.0
    %940 = vmatpush1.msra.mxu0 0.0
    %941 = vmatprep.subr.mxu0 0.0
    %942 = vmatpush1.msra.mxu0 0.0
    %943 = vmatprep.subr.mxu0 0.0
    %944 = vmatpush1.msra.mxu0 0.0
    %945 = vmatprep.subr.mxu0 0.0
    %946 = vmatpush1.msra.mxu0 0.0
    %947 = vmatprep.subr.mxu0 0.0
    %948 = vmatpush1.msra.mxu0 0.0
    %949 = vmatprep.subr.mxu0 0.0
    %950 = vmatpush1.msra.mxu0 0.0
    %951 = vmatprep.subr.mxu0 0.0
    %952 = vmatpush1.msra.mxu0 0.0
    %953 = vmatprep.subr.mxu0 0.0
    %954 = vmatpush1.msra.mxu0 0.0
    %955 = vmatprep.subr.mxu0 0.0
    %956 = vmatpush1.msra.mxu0 0.0
    %957 = vmatprep.subr.mxu0 0.0
    %958 = vmatpush1.msra.mxu0 0.0
    %959 = vmatprep.subr.mxu0 0.0
    %960 = vmatpush1.msra.mxu0 %v637
    %961 = vmatprep.subr.mxu0 0.0
    %962 = vmatpush1.msra.mxu0 %v636
    %963 = vmatprep.subr.mxu0 0.0
    %964 = vmatpush1.msra.mxu0 %v635
    %965 = vmatprep.subr.mxu0 0.0
    %966 = vmatpush1.msra.mxu0 %v634
    %967 = vmatprep.subr.mxu0 0.0
    %968 = vmatpush2.msra.mxu0 0.0
    %969 = vmatprep.subr.mxu0 0.0
    %970 = vmatpush2.msra.mxu0 0.0
    %971 = vmatprep.subr.mxu0 0.0
    %972 = vmatpush2.msra.mxu0 0.0
    %973 = vmatprep.subr.mxu0 0.0
    %974 = vmatpush2.msra.mxu0 0.0
    %975 = vmatprep.subr.mxu0 0.0
    %976 = vmatpush2.msra.mxu0 0.0
    %977 = vmatprep.subr.mxu0 0.0
    %978 = vmatpush2.msra.mxu0 0.0
    %979 = vmatprep.subr.mxu0 0.0
    %980 = vmatpush2.msra.mxu0 0.0
    %981 = vmatprep.subr.mxu0 0.0
    %982 = vmatpush2.msra.mxu0 0.0
    %983 = vmatprep.subr.mxu0 0.0
    %984 = vmatpush2.msra.mxu0 0.0
    %985 = vmatprep.subr.mxu0 0.0
    %986 = vmatpush2.msra.mxu0 0.0
    %987 = vmatprep.subr.mxu0 0.0
    %988 = vmatpush2.msra.mxu0 0.0
    %989 = vmatprep.subr.mxu0 0.0
    %990 = vmatpush2.msra.mxu0 0.0
    %991 = vmatprep.subr.mxu0 0.0
    %992 = vmatpush2.msra.mxu0 0.0
    %993 = vmatprep.subr.mxu0 0.0
    %994 = vmatpush2.msra.mxu0 0.0
    %995 = vmatprep.subr.mxu0 0.0
    %996 = vmatpush2.msra.mxu0 0.0
    %997 = vmatprep.subr.mxu0 0.0
    %998 = vmatpush2.msra.mxu0 0.0
    %999 = vmatprep.mubr.f32.mxu0 0.0
    %1000 = vmatmul.mubr.f32.gmra.mxu0 %v933
    %v1001 = vpop.f32.mrf.mxu0
    %v1002 = vadd.f32 0.0, %v1001
    %v1003 = vpop.f32.mrf.mxu0
    %1004 = vdwg.mxu0
    %v1006 = vrot.slane %v1002, 4
    %v1008 = vadd.f32 %v722, %v1006
    %v1009 = vmul.f32 %v1008, %v629
    %v1010 = vtanh.pop %v1009
    %v1011 = vmul.f32 %v1010, %v629
    %v1012 = vadd.f32 %v1011, %v630
    %v1014 = vrot.slane %v922, 6
    %v1016 = vmul.f32 %v1012, %v1014
    %1018 = vrot.lane.b32.xlu0 %v1012, 64
    %v1019 = vpop.permute.xlu0 %1018
    %v1021 = vmul.f32 %v1012, %v1019
    %1023 = vrot.lane.b32.xlu0 %v1021, 32
    %v1024 = vpop.permute.xlu0 %1023
    %v1026 = vadd.f32 %v1016, %v1024
    %v1027 = vtanh.pop %v1026
    %1029 = vrot.lane.b32.xlu0 %v1027, 64
    %v1030 = vpop.permute.xlu0 %1029
    %v1032 = vmul.f32 %v1012, %v1030
    %v1034 = vrot.slane %v1032, 4
    %1035 = vrot.lane.b32.xlu0 %v1034, 32
    %v1036 = vpop.permute.xlu0 %1035
    %v1037 = vsel %vm730, %v1036, 0
    %1039 = vmatprep.subr.mxu0 0.0
    %1040 = vmatpush1.msra.mxu0 0.0
    %1041 = vmatprep.subr.mxu0 0.0
    %1042 = vmatpush1.msra.mxu0 0.0
    %1043 = vmatprep.subr.mxu0 0.0
    %1044 = vmatpush1.msra.mxu0 0.0
    %1045 = vmatprep.subr.mxu0 0.0
    %1046 = vmatpush1.msra.mxu0 0.0
    %1047 = vmatprep.subr.mxu0 0.0
    %1048 = vmatpush1.msra.mxu0 0.0
    %1049 = vmatprep.subr.mxu0 0.0
    %1050 = vmatpush1.msra.mxu0 0.0
    %1051 = vmatprep.subr.mxu0 0.0
    %1052 = vmatpush1.msra.mxu0 0.0
    %1053 = vmatprep.subr.mxu0 0.0
    %1054 = vmatpush1.msra.mxu0 0.0
    %1055 = vmatprep.subr.mxu0 0.0
    %1056 = vmatpush1.msra.mxu0 0.0
    %1057 = vmatprep.subr.mxu0 0.0
    %1058 = vmatpush1.msra.mxu0 0.0
    %1059 = vmatprep.subr.mxu0 0.0
    %1060 = vmatpush1.msra.mxu0 0.0
    %1061 = vmatprep.subr.mxu0 0.0
    %1062 = vmatpush1.msra.mxu0 0.0
    %1063 = vmatprep.subr.mxu0 0.0
    %1064 = vmatpush1.msra.mxu0 %v637
    %1065 = vmatprep.subr.mxu0 0.0
    %1066 = vmatpush1.msra.mxu0 %v636
    %1067 = vmatprep.subr.mxu0 0.0
    %1068 = vmatpush1.msra.mxu0 %v635
    %1069 = vmatprep.subr.mxu0 0.0
    %1070 = vmatpush1.msra.mxu0 %v634
    %1071 = vmatprep.subr.mxu0 0.0
    %1072 = vmatpush2.msra.mxu0 0.0
    %1073 = vmatprep.subr.mxu0 0.0
    %1074 = vmatpush2.msra.mxu0 0.0
    %1075 = vmatprep.subr.mxu0 0.0
    %1076 = vmatpush2.msra.mxu0 0.0
    %1077 = vmatprep.subr.mxu0 0.0
    %1078 = vmatpush2.msra.mxu0 0.0
    %1079 = vmatprep.subr.mxu0 0.0
    %1080 = vmatpush2.msra.mxu0 0.0
    %1081 = vmatprep.subr.mxu0 0.0
    %1082 = vmatpush2.msra.mxu0 0.0
    %1083 = vmatprep.subr.mxu0 0.0
    %1084 = vmatpush2.msra.mxu0 0.0
    %1085 = vmatprep.subr.mxu0 0.0
    %1086 = vmatpush2.msra.mxu0 0.0
    %1087 = vmatprep.subr.mxu0 0.0
    %1088 = vmatpush2.msra.mxu0 0.0
    %1089 = vmatprep.subr.mxu0 0.0
    %1090 = vmatpush2.msra.mxu0 0.0
    %1091 = vmatprep.subr.mxu0 0.0
    %1092 = vmatpush2.msra.mxu0 0.0
    %1093 = vmatprep.subr.mxu0 0.0
    %1094 = vmatpush2.msra.mxu0 0.0
    %1095 = vmatprep.subr.mxu0 0.0
    %1096 = vmatpush2.msra.mxu0 0.0
    %1097 = vmatprep.subr.mxu0 0.0
    %1098 = vmatpush2.msra.mxu0 0.0
    %1099 = vmatprep.subr.mxu0 0.0
    %1100 = vmatpush2.msra.mxu0 0.0
    %1101 = vmatprep.subr.mxu0 0.0
    %1102 = vmatpush2.msra.mxu0 0.0
    %1103 = vmatprep.mubr.f32.mxu0 0.0
    %1104 = vmatmul.mubr.f32.gmra.mxu0 %v1037
    %v1105 = vpop.f32.mrf.mxu0
    %v1106 = vadd.f32 0.0, %v1105
    %v1107 = vpop.f32.mrf.mxu0
    %1108 = vdwg.mxu0
    %v1110 = vrot.slane %v1106, 2
    %v1112 = vadd.f32 %v722, %v1110
    %v1113 = vmul.f32 %v1112, %v629
    %v1114 = vtanh.pop %v1113
    %v1115 = vmul.f32 %v1114, %v629
    %v1116 = vadd.f32 %v1115, %v630
    %v1118 = vrot.slane %v1026, 6
    %v1120 = vmul.f32 %v1116, %v1118
    %1122 = vrot.lane.b32.xlu0 %v1116, 64
    %v1123 = vpop.permute.xlu0 %1122
    %v1125 = vmul.f32 %v1116, %v1123
    %1127 = vrot.lane.b32.xlu0 %v1125, 32
    %v1128 = vpop.permute.xlu0 %1127
    %v1130 = vadd.f32 %v1120, %v1128
    %v1131 = vtanh.pop %v1130
    %1133 = vrot.lane.b32.xlu0 %v1131, 64
    %v1134 = vpop.permute.xlu0 %1133
    %v1136 = vmul.f32 %v1116, %v1134
    %v1138 = vrot.slane %v1136, 6
    %1139 = vrot.lane.b32.xlu0 %v1138, 32
    %v1140 = vpop.permute.xlu0 %1139
    %v1141 = vsel %vm730, %v1140, 0
    %1143 = vmatprep.subr.mxu0 0.0
    %1144 = vmatpush1.msra.mxu0 0.0
    %1145 = vmatprep.subr.mxu0 0.0
    %1146 = vmatpush1.msra.mxu0 0.0
    %1147 = vmatprep.subr.mxu0 0.0
    %1148 = vmatpush1.msra.mxu0 0.0
    %1149 = vmatprep.subr.mxu0 0.0
    %1150 = vmatpush1.msra.mxu0 0.0
    %1151 = vmatprep.subr.mxu0 0.0
    %1152 = vmatpush1.msra.mxu0 0.0
    %1153 = vmatprep.subr.mxu0 0.0
    %1154 = vmatpush1.msra.mxu0 0.0
    %1155 = vmatprep.subr.mxu0 0.0
    %1156 = vmatpush1.msra.mxu0 0.0
    %1157 = vmatprep.subr.mxu0 0.0
    %1158 = vmatpush1.msra.mxu0 0.0
    %1159 = vmatprep.subr.mxu0 0.0
    %1160 = vmatpush1.msra.mxu0 0.0
    %1161 = vmatprep.subr.mxu0 0.0
    %1162 = vmatpush1.msra.mxu0 0.0
    %1163 = vmatprep.subr.mxu0 0.0
    %1164 = vmatpush1.msra.mxu0 0.0
    %1165 = vmatprep.subr.mxu0 0.0
    %1166 = vmatpush1.msra.mxu0 0.0
    %1167 = vmatprep.subr.mxu0 0.0
    %1168 = vmatpush1.msra.mxu0 %v637
    %1169 = vmatprep.subr.mxu0 0.0
    %1170 = vmatpush1.msra.mxu0 %v636
    %1171 = vmatprep.subr.mxu0 0.0
    %1172 = vmatpush1.msra.mxu0 %v635
    %1173 = vmatprep.subr.mxu0 0.0
    %1174 = vmatpush1.msra.mxu0 %v634
    %1175 = vmatprep.subr.mxu0 0.0
    %1176 = vmatpush2.msra.mxu0 0.0
    %1177 = vmatprep.subr.mxu0 0.0
    %1178 = vmatpush2.msra.mxu0 0.0
    %1179 = vmatprep.subr.mxu0 0.0
    %1180 = vmatpush2.msra.mxu0 0.0
    %1181 = vmatprep.subr.mxu0 0.0
    %1182 = vmatpush2.msra.mxu0 0.0
    %1183 = vmatprep.subr.mxu0 0.0
    %1184 = vmatpush2.msra.mxu0 0.0
    %1185 = vmatprep.subr.mxu0 0.0
    %1186 = vmatpush2.msra.mxu0 0.0
    %1187 = vmatprep.subr.mxu0 0.0
    %1188 = vmatpush2.msra.mxu0 0.0
    %1189 = vmatprep.subr.mxu0 0.0
    %1190 = vmatpush2.msra.mxu0 0.0
    %1191 = vmatprep.subr.mxu0 0.0
    %1192 = vmatpush2.msra.mxu0 0.0
    %1193 = vmatprep.subr.mxu0 0.0
    %1194 = vmatpush2.msra.mxu0 0.0
    %1195 = vmatprep.subr.mxu0 0.0
    %1196 = vmatpush2.msra.mxu0 0.0
    %1197 = vmatprep.subr.mxu0 0.0
    %1198 = vmatpush2.msra.mxu0 0.0
    %1199 = vmatprep.subr.mxu0 0.0
    %1200 = vmatpush2.msra.mxu0 0.0
    %1201 = vmatprep.subr.mxu0 0.0
    %1202 = vmatpush2.msra.mxu0 0.0
    %1203 = vmatprep.subr.mxu0 0.0
    %1204 = vmatpush2.msra.mxu0 0.0
    %1205 = vmatprep.subr.mxu0 0.0
    %1206 = vmatpush2.msra.mxu0 0.0
    %1207 = vmatprep.mubr.f32.mxu0 0.0
    %1208 = vmatmul.mubr.f32.gmra.mxu0 %v1141
    %v1209 = vpop.f32.mrf.mxu0
    %v1210 = vadd.f32 0.0, %v1209
    %v1211 = vpop.f32.mrf.mxu0
    %1212 = vdwg.mxu0
    %v1213 = vadd.f32 %v727, %v1210
    %v1214 = vmul.f32 %v1213, %v629
    %v1215 = vtanh.pop %v1214
    %v1216 = vmul.f32 %v1215, %v629
    %v1217 = vadd.f32 %v1216, %v630
    %v1219 = vrot.slane %v1130, 6
    %v1221 = vmul.f32 %v1217, %v1219
    %1223 = vrot.lane.b32.xlu0 %v1217, 64
    %v1224 = vpop.permute.xlu0 %1223
    %v1226 = vmul.f32 %v1217, %v1224
    %1228 = vrot.lane.b32.xlu0 %v1226, 32
    %v1229 = vpop.permute.xlu0 %1228
    %v1231 = vadd.f32 %v1221, %v1229
    %v1232 = vtanh.pop %v1231
    %1234 = vrot.lane.b32.xlu0 %v1232, 64
    %v1235 = vpop.permute.xlu0 %1234
    %v1237 = vmul.f32 %v1217, %v1235
    %1239 = vrot.lane.b32.xlu0 %v1237, 32
    %v1240 = vpop.permute.xlu0 %1239
    %v1241 = vsel %vm730, %v1240, 0
    %1243 = vmatprep.subr.mxu0 0.0
    %1244 = vmatpush1.msra.mxu0 0.0
    %1245 = vmatprep.subr.mxu0 0.0
    %1246 = vmatpush1.msra.mxu0 0.0
    %1247 = vmatprep.subr.mxu0 0.0
    %1248 = vmatpush1.msra.mxu0 0.0
    %1249 = vmatprep.subr.mxu0 0.0
    %1250 = vmatpush1.msra.mxu0 0.0
    %1251 = vmatprep.subr.mxu0 0.0
    %1252 = vmatpush1.msra.mxu0 0.0
    %1253 = vmatprep.subr.mxu0 0.0
    %1254 = vmatpush1.msra.mxu0 0.0
    %1255 = vmatprep.subr.mxu0 0.0
    %1256 = vmatpush1.msra.mxu0 0.0
    %1257 = vmatprep.subr.mxu0 0.0
    %1258 = vmatpush1.msra.mxu0 0.0
    %1259 = vmatprep.subr.mxu0 0.0
    %1260 = vmatpush1.msra.mxu0 0.0
    %1261 = vmatprep.subr.mxu0 0.0
    %1262 = vmatpush1.msra.mxu0 0.0
    %1263 = vmatprep.subr.mxu0 0.0
    %1264 = vmatpush1.msra.mxu0 0.0
    %1265 = vmatprep.subr.mxu0 0.0
    %1266 = vmatpush1.msra.mxu0 0.0
    %1267 = vmatprep.subr.mxu0 0.0
    %1268 = vmatpush1.msra.mxu0 %v637
    %1269 = vmatprep.subr.mxu0 0.0
    %1270 = vmatpush1.msra.mxu0 %v636
    %1271 = vmatprep.subr.mxu0 0.0
    %1272 = vmatpush1.msra.mxu0 %v635
    %1273 = vmatprep.subr.mxu0 0.0
    %1274 = vmatpush1.msra.mxu0 %v634
    %1275 = vmatprep.subr.mxu0 0.0
    %1276 = vmatpush2.msra.mxu0 0.0
    %1277 = vmatprep.subr.mxu0 0.0
    %1278 = vmatpush2.msra.mxu0 0.0
    %1279 = vmatprep.subr.mxu0 0.0
    %1280 = vmatpush2.msra.mxu0 0.0
    %1281 = vmatprep.subr.mxu0 0.0
    %1282 = vmatpush2.msra.mxu0 0.0
    %1283 = vmatprep.subr.mxu0 0.0
    %1284 = vmatpush2.msra.mxu0 0.0
    %1285 = vmatprep.subr.mxu0 0.0
    %1286 = vmatpush2.msra.mxu0 0.0
    %1287 = vmatprep.subr.mxu0 0.0
    %1288 = vmatpush2.msra.mxu0 0.0
    %1289 = vmatprep.subr.mxu0 0.0
    %1290 = vmatpush2.msra.mxu0 0.0
    %1291 = vmatprep.subr.mxu0 0.0
    %1292 = vmatpush2.msra.mxu0 0.0
    %1293 = vmatprep.subr.mxu0 0.0
    %1294 = vmatpush2.msra.mxu0 0.0
    %1295 = vmatprep.subr.mxu0 0.0
    %1296 = vmatpush2.msra.mxu0 0.0
    %1297 = vmatprep.subr.mxu0 0.0
    %1298 = vmatpush2.msra.mxu0 0.0
    %1299 = vmatprep.subr.mxu0 0.0
    %1300 = vmatpush2.msra.mxu0 0.0
    %1301 = vmatprep.subr.mxu0 0.0
    %1302 = vmatpush2.msra.mxu0 0.0
    %1303 = vmatprep.subr.mxu0 0.0
    %1304 = vmatpush2.msra.mxu0 0.0
    %1305 = vmatprep.subr.mxu0 0.0
    %1306 = vmatpush2.msra.mxu0 0.0
    %1307 = vmatprep.mubr.f32.mxu0 0.0
    %1308 = vmatmul.mubr.f32.gmra.mxu0 %v1241
    %v1309 = vpop.f32.mrf.mxu0
    %v1310 = vadd.f32 0.0, %v1309
    %v1311 = vpop.f32.mrf.mxu0
    %1312 = vdwg.mxu0
    %v1314 = vrot.slane %v1310, 6
    %v1316 = vadd.f32 %v727, %v1314
    %v1317 = vmul.f32 %v1316, %v629
    %v1318 = vtanh.pop %v1317
    %v1319 = vmul.f32 %v1318, %v629
    %v1320 = vadd.f32 %v1319, %v630
    %v1322 = vrot.slane %v1231, 6
    %v1324 = vmul.f32 %v1320, %v1322
    %1326 = vrot.lane.b32.xlu0 %v1320, 64
    %v1327 = vpop.permute.xlu0 %1326
    %v1329 = vmul.f32 %v1320, %v1327
    %1331 = vrot.lane.b32.xlu0 %v1329, 32
    %v1332 = vpop.permute.xlu0 %1331
    %v1334 = vadd.f32 %v1324, %v1332
    %v1335 = vtanh.pop %v1334
    %1337 = vrot.lane.b32.xlu0 %v1335, 64
    %v1338 = vpop.permute.xlu0 %1337
    %v1340 = vmul.f32 %v1320, %v1338
    %v1342 = vrot.slane %v1340, 2
    %1343 = vrot.lane.b32.xlu0 %v1342, 32
    %v1344 = vpop.permute.xlu0 %1343
    %v1345 = vsel %vm730, %v1344, 0
    %1347 = vmatprep.subr.mxu0 0.0
    %1348 = vmatpush1.msra.mxu0 0.0
    %1349 = vmatprep.subr.mxu0 0.0
    %1350 = vmatpush1.msra.mxu0 0.0
    %1351 = vmatprep.subr.mxu0 0.0
    %1352 = vmatpush1.msra.mxu0 0.0
    %1353 = vmatprep.subr.mxu0 0.0
    %1354 = vmatpush1.msra.mxu0 0.0
    %1355 = vmatprep.subr.mxu0 0.0
    %1356 = vmatpush1.msra.mxu0 0.0
    %1357 = vmatprep.subr.mxu0 0.0
    %1358 = vmatpush1.msra.mxu0 0.0
    %1359 = vmatprep.subr.mxu0 0.0
    %1360 = vmatpush1.msra.mxu0 0.0
    %1361 = vmatprep.subr.mxu0 0.0
    %1362 = vmatpush1.msra.mxu0 0.0
    %1363 = vmatprep.subr.mxu0 0.0
    %1364 = vmatpush1.msra.mxu0 0.0
    %1365 = vmatprep.subr.mxu0 0.0
    %1366 = vmatpush1.msra.mxu0 0.0
    %1367 = vmatprep.subr.mxu0 0.0
    %1368 = vmatpush1.msra.mxu0 0.0
    %1369 = vmatprep.subr.mxu0 0.0
    %1370 = vmatpush1.msra.mxu0 0.0
    %1371 = vmatprep.subr.mxu0 0.0
    %1372 = vmatpush1.msra.mxu0 %v637
    %1373 = vmatprep.subr.mxu0 0.0
    %1374 = vmatpush1.msra.mxu0 %v636
    %1375 = vmatprep.subr.mxu0 0.0
    %1376 = vmatpush1.msra.mxu0 %v635
    %1377 = vmatprep.subr.mxu0 0.0
    %1378 = vmatpush1.msra.mxu0 %v634
    %1379 = vmatprep.subr.mxu0 0.0
    %1380 = vmatpush2.msra.mxu0 0.0
    %1381 = vmatprep.subr.mxu0 0.0
    %1382 = vmatpush2.msra.mxu0 0.0
    %1383 = vmatprep.subr.mxu0 0.0
    %1384 = vmatpush2.msra.mxu0 0.0
    %1385 = vmatprep.subr.mxu0 0.0
    %1386 = vmatpush2.msra.mxu0 0.0
    %1387 = vmatprep.subr.mxu0 0.0
    %1388 = vmatpush2.msra.mxu0 0.0
    %1389 = vmatprep.subr.mxu0 0.0
    %1390 = vmatpush2.msra.mxu0 0.0
    %1391 = vmatprep.subr.mxu0 0.0
    %1392 = vmatpush2.msra.mxu0 0.0
    %1393 = vmatprep.subr.mxu0 0.0
    %1394 = vmatpush2.msra.mxu0 0.0
    %1395 = vmatprep.subr.mxu0 0.0
    %1396 = vmatpush2.msra.mxu0 0.0
    %1397 = vmatprep.subr.mxu0 0.0
    %1398 = vmatpush2.msra.mxu0 0.0
    %1399 = vmatprep.subr.mxu0 0.0
    %1400 = vmatpush2.msra.mxu0 0.0
    %1401 = vmatprep.subr.mxu0 0.0
    %1402 = vmatpush2.msra.mxu0 0.0
    %1403 = vmatprep.subr.mxu0 0.0
    %1404 = vmatpush2.msra.mxu0 0.0
    %1405 = vmatprep.subr.mxu0 0.0
    %1406 = vmatpush2.msra.mxu0 0.0
    %1407 = vmatprep.subr.mxu0 0.0
    %1408 = vmatpush2.msra.mxu0 0.0
    %1409 = vmatprep.subr.mxu0 0.0
    %1410 = vmatpush2.msra.mxu0 0.0
    %1411 = vmatprep.mubr.f32.mxu0 0.0
    %1412 = vmatmul.mubr.f32.gmra.mxu0 %v1345
    %v1413 = vpop.f32.mrf.mxu0
    %v1414 = vadd.f32 0.0, %v1413
    %v1415 = vpop.f32.mrf.mxu0
    %1416 = vdwg.mxu0
    %v1418 = vrot.slane %v1414, 4
    %v1420 = vadd.f32 %v727, %v1418
    %v1421 = vmul.f32 %v1420, %v629
    %v1422 = vtanh.pop %v1421
    %v1423 = vmul.f32 %v1422, %v629
    %v1424 = vadd.f32 %v1423, %v630
    %v1426 = vrot.slane %v1334, 6
    %v1428 = vmul.f32 %v1424, %v1426
    %1430 = vrot.lane.b32.xlu0 %v1424, 64
    %v1431 = vpop.permute.xlu0 %1430
    %v1433 = vmul.f32 %v1424, %v1431
    %1435 = vrot.lane.b32.xlu0 %v1433, 32
    %v1436 = vpop.permute.xlu0 %1435
    %v1438 = vadd.f32 %v1428, %v1436
    %v1439 = vtanh.pop %v1438
    %1441 = vrot.lane.b32.xlu0 %v1439, 64
    %v1442 = vpop.permute.xlu0 %1441
    %v1444 = vmul.f32 %v1424, %v1442
    %v1446 = vrot.slane %v1444, 4
    %1447 = vrot.lane.b32.xlu0 %v1446, 32
    %v1448 = vpop.permute.xlu0 %1447
    %v1449 = vsel %vm730, %v1448, 0
    %1451 = vmatprep.subr.mxu0 0.0
    %1452 = vmatpush1.msra.mxu0 0.0
    %1453 = vmatprep.subr.mxu0 0.0
    %1454 = vmatpush1.msra.mxu0 0.0
    %1455 = vmatprep.subr.mxu0 0.0
    %1456 = vmatpush1.msra.mxu0 0.0
    %1457 = vmatprep.subr.mxu0 0.0
    %1458 = vmatpush1.msra.mxu0 0.0
    %1459 = vmatprep.subr.mxu0 0.0
    %1460 = vmatpush1.msra.mxu0 0.0
    %1461 = vmatprep.subr.mxu0 0.0
    %1462 = vmatpush1.msra.mxu0 0.0
    %1463 = vmatprep.subr.mxu0 0.0
    %1464 = vmatpush1.msra.mxu0 0.0
    %1465 = vmatprep.subr.mxu0 0.0
    %1466 = vmatpush1.msra.mxu0 0.0
    %1467 = vmatprep.subr.mxu0 0.0
    %1468 = vmatpush1.msra.mxu0 0.0
    %1469 = vmatprep.subr.mxu0 0.0
    %1470 = vmatpush1.msra.mxu0 0.0
    %1471 = vmatprep.subr.mxu0 0.0
    %1472 = vmatpush1.msra.mxu0 0.0
    %1473 = vmatprep.subr.mxu0 0.0
    %1474 = vmatpush1.msra.mxu0 0.0
    %1475 = vmatprep.subr.mxu0 0.0
    %1476 = vmatpush1.msra.mxu0 %v637
    %1477 = vmatprep.subr.mxu0 0.0
    %1478 = vmatpush1.msra.mxu0 %v636
    %1479 = vmatprep.subr.mxu0 0.0
    %1480 = vmatpush1.msra.mxu0 %v635
    %1481 = vmatprep.subr.mxu0 0.0
    %1482 = vmatpush1.msra.mxu0 %v634
    %1483 = vmatprep.subr.mxu0 0.0
    %1484 = vmatpush2.msra.mxu0 0.0
    %1485 = vmatprep.subr.mxu0 0.0
    %1486 = vmatpush2.msra.mxu0 0.0
    %1487 = vmatprep.subr.mxu0 0.0
    %1488 = vmatpush2.msra.mxu0 0.0
    %1489 = vmatprep.subr.mxu0 0.0
    %1490 = vmatpush2.msra.mxu0 0.0
    %1491 = vmatprep.subr.mxu0 0.0
    %1492 = vmatpush2.msra.mxu0 0.0
    %1493 = vmatprep.subr.mxu0 0.0
    %1494 = vmatpush2.msra.mxu0 0.0
    %1495 = vmatprep.subr.mxu0 0.0
    %1496 = vmatpush2.msra.mxu0 0.0
    %1497 = vmatprep.subr.mxu0 0.0
    %1498 = vmatpush2.msra.mxu0 0.0
    %1499 = vmatprep.subr.mxu0 0.0
    %1500 = vmatpush2.msra.mxu0 0.0
    %1501 = vmatprep.subr.mxu0 0.0
    %1502 = vmatpush2.msra.mxu0 0.0
    %1503 = vmatprep.subr.mxu0 0.0
    %1504 = vmatpush2.msra.mxu0 0.0
    %1505 = vmatprep.subr.mxu0 0.0
    %1506 = vmatpush2.msra.mxu0 0.0
    %1507 = vmatprep.subr.mxu0 0.0
    %1508 = vmatpush2.msra.mxu0 0.0
    %1509 = vmatprep.subr.mxu0 0.0
    %1510 = vmatpush2.msra.mxu0 0.0
    %1511 = vmatprep.subr.mxu0 0.0
    %1512 = vmatpush2.msra.mxu0 0.0
    %1513 = vmatprep.subr.mxu0 0.0
    %1514 = vmatpush2.msra.mxu0 0.0
    %1515 = vmatprep.mubr.f32.mxu0 0.0
    %1516 = vmatmul.mubr.f32.gmra.mxu0 %v1449
    %v1517 = vpop.f32.mrf.mxu0
    %v1518 = vadd.f32 0.0, %v1517
    %v1519 = vpop.f32.mrf.mxu0
    %1520 = vdwg.mxu0
    %v1522 = vrot.slane %v1518, 2
    %v1524 = vadd.f32 %v727, %v1522
    %v1525 = vmul.f32 %v1524, %v629
    %v1526 = vtanh.pop %v1525
    %v1527 = vmul.f32 %v1526, %v629
    %v1528 = vadd.f32 %v1527, %v630
    %v1530 = vrot.slane %v1438, 6
    %v1532 = vmul.f32 %v1528, %v1530
    %1534 = vrot.lane.b32.xlu0 %v1528, 64
    %v1535 = vpop.permute.xlu0 %1534
    %v1537 = vmul.f32 %v1528, %v1535
    %1539 = vrot.lane.b32.xlu0 %v1537, 32
    %v1540 = vpop.permute.xlu0 %1539
    %v1542 = vadd.f32 %v1532, %v1540
    %v1543 = vtanh.pop %v1542
    %1545 = vrot.lane.b32.xlu0 %v1543, 64
    %v1546 = vpop.permute.xlu0 %1545
    %v1548 = vmul.f32 %v1528, %v1546
    %vm1549 = vcmask 1041408
    %v1550 = vsel %vm1549, %v825, %v928
    %v1551 = vsel %vm550, %v1550, %v1032
    %vm1552 = vcmask 1045504
    %v1553 = vsel %vm1552, %v1551, %v1136
    %v1554 = vsel %vm1549, %v1237, %v1340
    %v1555 = vsel %vm550, %v1554, %v1444
    %v1556 = vsel %vm1552, %v1555, %v1548
    %v1557 = vld [vmem:[%s14] sm:$0xff]
    %v1558 = vld [vmem:[%s14 + $0x8] sm:$0xff]
    %v1559 = vld [vmem:[%s14 + $0x10] sm:$0xff]
    %v1560 = vld [vmem:[%s14 + $0x18] sm:$0xff]
    %v1561 = vld [vmem:[%s15] sm:$0xff]
    %v1562 = vld [vmem:[%s15 + $0x8] sm:$0xff]
    %v1563 = vld [vmem:[%s15 + $0x10] sm:$0xff]
    %v1564 = vld [vmem:[%s15 + $0x18] sm:$0xff]
    %v1565 = vld [vmem:[%s16] sm:$0x1]
    %v1567 = vlaneseq
    %v1568 = vshrl.u32 %v1567, 7
    %v1569 = vsub.s32 0, %v1568
    %v1570 = vrot.slane %v1565, %v1569
    %1574 = vrot.lane.b32.xlu0 %v1553, 32
    %v1575 = vpop.permute.xlu0 %1574
    %1576 = vrot.lane.b32.xlu0 %v1556, 32
    %v1577 = vpop.permute.xlu0 %1576
    %v1578 = vsel %vm730, %v1575, 0
    %v1580 = vsel %vm730, %v1577, 0
    %1582 = vmatprep.subr.mxu0 0.0
    %1583 = vmatpush1.msra.mxu0 0.0
    %1584 = vmatprep.subr.mxu0 0.0
    %1585 = vmatpush1.msra.mxu0 0.0
    %1586 = vmatprep.subr.mxu0 0.0
    %1587 = vmatpush1.msra.mxu0 0.0
    %1588 = vmatprep.subr.mxu0 0.0
    %1589 = vmatpush1.msra.mxu0 0.0
    %1590 = vmatprep.subr.mxu0 0.0
    %1591 = vmatpush1.msra.mxu0 0.0
    %1592 = vmatprep.subr.mxu0 0.0
    %1593 = vmatpush1.msra.mxu0 0.0
    %1594 = vmatprep.subr.mxu0 0.0
    %1595 = vmatpush1.msra.mxu0 0.0
    %1596 = vmatprep.subr.mxu0 0.0
    %1597 = vmatpush1.msra.mxu0 0.0
    %1598 = vmatprep.subr.mxu0 0.0
    %1599 = vmatpush1.msra.mxu0 0.0
    %1600 = vmatprep.subr.mxu0 0.0
    %1601 = vmatpush1.msra.mxu0 0.0
    %1602 = vmatprep.subr.mxu0 0.0
    %1603 = vmatpush1.msra.mxu0 0.0
    %1604 = vmatprep.subr.mxu0 0.0
    %1605 = vmatpush1.msra.mxu0 0.0
    %1606 = vmatprep.subr.mxu0 0.0
    %1607 = vmatpush1.msra.mxu0 %v1560
    %1608 = vmatprep.subr.mxu0 0.0
    %1609 = vmatpush1.msra.mxu0 %v1559
    %1610 = vmatprep.subr.mxu0 0.0
    %1611 = vmatpush1.msra.mxu0 %v1558
    %1612 = vmatprep.subr.mxu0 0.0
    %1613 = vmatpush1.msra.mxu0 %v1557
    %1614 = vmatprep.subr.mxu0 0.0
    %1615 = vmatpush2.msra.mxu0 0.0
    %1616 = vmatprep.subr.mxu0 0.0
    %1617 = vmatpush2.msra.mxu0 0.0
    %1618 = vmatprep.subr.mxu0 0.0
    %1619 = vmatpush2.msra.mxu0 0.0
    %1620 = vmatprep.subr.mxu0 0.0
    %1621 = vmatpush2.msra.mxu0 0.0
    %1622 = vmatprep.subr.mxu0 0.0
    %1623 = vmatpush2.msra.mxu0 0.0
    %1624 = vmatprep.subr.mxu0 0.0
    %1625 = vmatpush2.msra.mxu0 0.0
    %1626 = vmatprep.subr.mxu0 0.0
    %1627 = vmatpush2.msra.mxu0 0.0
    %1628 = vmatprep.subr.mxu0 0.0
    %1629 = vmatpush2.msra.mxu0 0.0
    %1630 = vmatprep.subr.mxu0 0.0
    %1631 = vmatpush2.msra.mxu0 0.0
    %1632 = vmatprep.subr.mxu0 0.0
    %1633 = vmatpush2.msra.mxu0 0.0
    %1634 = vmatprep.subr.mxu0 0.0
    %1635 = vmatpush2.msra.mxu0 0.0
    %1636 = vmatprep.subr.mxu0 0.0
    %1637 = vmatpush2.msra.mxu0 0.0
    %1638 = vmatprep.subr.mxu0 0.0
    %1639 = vmatpush2.msra.mxu0 0.0
    %1640 = vmatprep.subr.mxu0 0.0
    %1641 = vmatpush2.msra.mxu0 0.0
    %1642 = vmatprep.subr.mxu0 0.0
    %1643 = vmatpush2.msra.mxu0 0.0
    %1644 = vmatprep.subr.mxu0 0.0
    %1645 = vmatpush2.msra.mxu0 0.0
    %1646 = vmatprep.mubr.f32.mxu0 0.0
    %1647 = vmatmul.mubr.f32.gmra.mxu0 %v1578
    %v1648 = vpop.f32.mrf.mxu0
    %v1649 = vadd.f32 %v1570, %v1648
    %v1650 = vpop.f32.mrf.mxu0
    %1651 = vmatprep.mubr.f32.mxu0 0.0
    %1652 = vmatmul.mubr.f32.gmra.mxu0 %v1580
    %v1653 = vpop.f32.mrf.mxu0
    %v1654 = vadd.f32 %v1570, %v1653
    %v1655 = vpop.f32.mrf.mxu0
    %1656 = vdwg.mxu0
    %1657 = vmatprep.subr.mxu0 0.0
    %1658 = vmatpush1.msra.mxu0 0.0
    %1659 = vmatprep.subr.mxu0 0.0
    %1660 = vmatpush1.msra.mxu0 0.0
    %1661 = vmatprep.subr.mxu0 0.0
    %1662 = vmatpush1.msra.mxu0 0.0
    %1663 = vmatprep.subr.mxu0 0.0
    %1664 = vmatpush1.msra.mxu0 0.0
    %1665 = vmatprep.subr.mxu0 0.0
    %1666 = vmatpush1.msra.mxu0 0.0
    %1667 = vmatprep.subr.mxu0 0.0
    %1668 = vmatpush1.msra.mxu0 0.0
    %1669 = vmatprep.subr.mxu0 0.0
    %1670 = vmatpush1.msra.mxu0 0.0
    %1671 = vmatprep.subr.mxu0 0.0
    %1672 = vmatpush1.msra.mxu0 0.0
    %1673 = vmatprep.subr.mxu0 0.0
    %1674 = vmatpush1.msra.mxu0 0.0
    %1675 = vmatprep.subr.mxu0 0.0
    %1676 = vmatpush1.msra.mxu0 0.0
    %1677 = vmatprep.subr.mxu0 0.0
    %1678 = vmatpush1.msra.mxu0 0.0
    %1679 = vmatprep.subr.mxu0 0.0
    %1680 = vmatpush1.msra.mxu0 0.0
    %1681 = vmatprep.subr.mxu0 0.0
    %1682 = vmatpush1.msra.mxu0 %v1564
    %1683 = vmatprep.subr.mxu0 0.0
    %1684 = vmatpush1.msra.mxu0 %v1563
    %1685 = vmatprep.subr.mxu0 0.0
    %1686 = vmatpush1.msra.mxu0 %v1562
    %1687 = vmatprep.subr.mxu0 0.0
    %1688 = vmatpush1.msra.mxu0 %v1561
    %1689 = vmatprep.subr.mxu0 0.0
    %1690 = vmatpush2.msra.mxu0 0.0
    %1691 = vmatprep.subr.mxu0 0.0
    %1692 = vmatpush2.msra.mxu0 0.0
    %1693 = vmatprep.subr.mxu0 0.0
    %1694 = vmatpush2.msra.mxu0 0.0
    %1695 = vmatprep.subr.mxu0 0.0
    %1696 = vmatpush2.msra.mxu0 0.0
    %1697 = vmatprep.subr.mxu0 0.0
    %1698 = vmatpush2.msra.mxu0 0.0
    %1699 = vmatprep.subr.mxu0 0.0
    %1700 = vmatpush2.msra.mxu0 0.0
    %1701 = vmatprep.subr.mxu0 0.0
    %1702 = vmatpush2.msra.mxu0 0.0
    %1703 = vmatprep.subr.mxu0 0.0
    %1704 = vmatpush2.msra.mxu0 0.0
    %1705 = vmatprep.subr.mxu0 0.0
    %1706 = vmatpush2.msra.mxu0 0.0
    %1707 = vmatprep.subr.mxu0 0.0
    %1708 = vmatpush2.msra.mxu0 0.0
    %1709 = vmatprep.subr.mxu0 0.0
    %1710 = vmatpush2.msra.mxu0 0.0
    %1711 = vmatprep.subr.mxu0 0.0
    %1712 = vmatpush2.msra.mxu0 0.0
    %1713 = vmatprep.subr.mxu0 0.0
    %1714 = vmatpush2.msra.mxu0 0.0
    %1715 = vmatprep.subr.mxu0 0.0
    %1716 = vmatpush2.msra.mxu0 0.0
    %1717 = vmatprep.subr.mxu0 0.0
    %1718 = vmatpush2.msra.mxu0 0.0
    %1719 = vmatprep.subr.mxu0 0.0
    %1720 = vmatpush2.msra.mxu0 0.0
    %1721 = vmatprep.mubr.f32.mxu0 0.0
    %1722 = vmatmul.mubr.f32.gmra.mxu0 %v732
    %v1723 = vpop.f32.mrf.mxu0
    %v1724 = vadd.f32 0.0, %v1723
    %v1725 = vpop.f32.mrf.mxu0
    %1726 = vdwg.mxu0
    %v1727 = vadd.f32 %v1649, %v1724
    %v1728 = vmul.f32 %v1727, %v629
    %v1729 = vtanh.pop %v1728
    %v1730 = vmul.f32 %v1729, %v629
    %v1731 = vadd.f32 %v1730, %v630
    %v1732 = vmul.f32 %v1731, 0.0
    %1734 = vrot.lane.b32.xlu0 %v1731, 64
    %v1735 = vpop.permute.xlu0 %1734
    %v1737 = vmul.f32 %v1731, %v1735
    %1739 = vrot.lane.b32.xlu0 %v1737, 32
    %v1740 = vpop.permute.xlu0 %1739
    %v1742 = vadd.f32 %v1732, %v1740
    %v1743 = vtanh.pop %v1742
    %1745 = vrot.lane.b32.xlu0 %v1743, 64
    %v1746 = vpop.permute.xlu0 %1745
    %v1748 = vmul.f32 %v1731, %v1746
    %1750 = vrot.lane.b32.xlu0 %v1748, 32
    %v1751 = vpop.permute.xlu0 %1750
    %v1752 = vsel %vm730, %v1751, 0
    %1754 = vmatprep.subr.mxu0 0.0
    %1755 = vmatpush1.msra.mxu0 0.0
    %1756 = vmatprep.subr.mxu0 0.0
    %1757 = vmatpush1.msra.mxu0 0.0
    %1758 = vmatprep.subr.mxu0 0.0
    %1759 = vmatpush1.msra.mxu0 0.0
    %1760 = vmatprep.subr.mxu0 0.0
    %1761 = vmatpush1.msra.mxu0 0.0
    %1762 = vmatprep.subr.mxu0 0.0
    %1763 = vmatpush1.msra.mxu0 0.0
    %1764 = vmatprep.subr.mxu0 0.0
    %1765 = vmatpush1.msra.mxu0 0.0
    %1766 = vmatprep.subr.mxu0 0.0
    %1767 = vmatpush1.msra.mxu0 0.0
    %1768 = vmatprep.subr.mxu0 0.0
    %1769 = vmatpush1.msra.mxu0 0.0
    %1770 = vmatprep.subr.mxu0 0.0
    %1771 = vmatpush1.msra.mxu0 0.0
    %1772 = vmatprep.subr.mxu0 0.0
    %1773 = vmatpush1.msra.mxu0 0.0
    %1774 = vmatprep.subr.mxu0 0.0
    %1775 = vmatpush1.msra.mxu0 0.0
    %1776 = vmatprep.subr.mxu0 0.0
    %1777 = vmatpush1.msra.mxu0 0.0
    %1778 = vmatprep.subr.mxu0 0.0
    %1779 = vmatpush1.msra.mxu0 %v1564
    %1780 = vmatprep.subr.mxu0 0.0
    %1781 = vmatpush1.msra.mxu0 %v1563
    %1782 = vmatprep.subr.mxu0 0.0
    %1783 = vmatpush1.msra.mxu0 %v1562
    %1784 = vmatprep.subr.mxu0 0.0
    %1785 = vmatpush1.msra.mxu0 %v1561
    %1786 = vmatprep.subr.mxu0 0.0
    %1787 = vmatpush2.msra.mxu0 0.0
    %1788 = vmatprep.subr.mxu0 0.0
    %1789 = vmatpush2.msra.mxu0 0.0
    %1790 = vmatprep.subr.mxu0 0.0
    %1791 = vmatpush2.msra.mxu0 0.0
    %1792 = vmatprep.subr.mxu0 0.0
    %1793 = vmatpush2.msra.mxu0 0.0
    %1794 = vmatprep.subr.mxu0 0.0
    %1795 = vmatpush2.msra.mxu0 0.0
    %1796 = vmatprep.subr.mxu0 0.0
    %1797 = vmatpush2.msra.mxu0 0.0
    %1798 = vmatprep.subr.mxu0 0.0
    %1799 = vmatpush2.msra.mxu0 0.0
    %1800 = vmatprep.subr.mxu0 0.0
    %1801 = vmatpush2.msra.mxu0 0.0
    %1802 = vmatprep.subr.mxu0 0.0
    %1803 = vmatpush2.msra.mxu0 0.0
    %1804 = vmatprep.subr.mxu0 0.0
    %1805 = vmatpush2.msra.mxu0 0.0
    %1806 = vmatprep.subr.mxu0 0.0
    %1807 = vmatpush2.msra.mxu0 0.0
    %1808 = vmatprep.subr.mxu0 0.0
    %1809 = vmatpush2.msra.mxu0 0.0
    %1810 = vmatprep.subr.mxu0 0.0
    %1811 = vmatpush2.msra.mxu0 0.0
    %1812 = vmatprep.subr.mxu0 0.0
    %1813 = vmatpush2.msra.mxu0 0.0
    %1814 = vmatprep.subr.mxu0 0.0
    %1815 = vmatpush2.msra.mxu0 0.0
    %1816 = vmatprep.subr.mxu0 0.0
    %1817 = vmatpush2.msra.mxu0 0.0
    %1818 = vmatprep.mubr.f32.mxu0 0.0
    %1819 = vmatmul.mubr.f32.gmra.mxu0 %v1752
    %v1820 = vpop.f32.mrf.mxu0
    %v1821 = vadd.f32 0.0, %v1820
    %v1822 = vpop.f32.mrf.mxu0
    %1823 = vdwg.mxu0
    %v1825 = vrot.slane %v1821, 6
    %v1827 = vadd.f32 %v1649, %v1825
    %v1828 = vmul.f32 %v1827, %v629
    %v1829 = vtanh.pop %v1828
    %v1830 = vmul.f32 %v1829, %v629
    %v1831 = vadd.f32 %v1830, %v630
    %v1833 = vrot.slane %v1742, 6
    %v1835 = vmul.f32 %v1831, %v1833
    %1837 = vrot.lane.b32.xlu0 %v1831, 64
    %v1838 = vpop.permute.xlu0 %1837
    %v1840 = vmul.f32 %v1831, %v1838
    %1842 = vrot.lane.b32.xlu0 %v1840, 32
    %v1843 = vpop.permute.xlu0 %1842
    %v1845 = vadd.f32 %v1835, %v1843
    %v1846 = vtanh.pop %v1845
    %1848 = vrot.lane.b32.xlu0 %v1846, 64
    %v1849 = vpop.permute.xlu0 %1848
    %v1851 = vmul.f32 %v1831, %v1849
    %v1853 = vrot.slane %v1851, 2
    %1854 = vrot.lane.b32.xlu0 %v1853, 32
    %v1855 = vpop.permute.xlu0 %1854
    %v1856 = vsel %vm730, %v1855, 0
    %1858 = vmatprep.subr.mxu0 0.0
    %1859 = vmatpush1.msra.mxu0 0.0
    %1860 = vmatprep.subr.mxu0 0.0
    %1861 = vmatpush1.msra.mxu0 0.0
    %1862 = vmatprep.subr.mxu0 0.0
    %1863 = vmatpush1.msra.mxu0 0.0
    %1864 = vmatprep.subr.mxu0 0.0
    %1865 = vmatpush1.msra.mxu0 0.0
    %1866 = vmatprep.subr.mxu0 0.0
    %1867 = vmatpush1.msra.mxu0 0.0
    %1868 = vmatprep.subr.mxu0 0.0
    %1869 = vmatpush1.msra.mxu0 0.0
    %1870 = vmatprep.subr.mxu0 0.0
    %1871 = vmatpush1.msra.mxu0 0.0
    %1872 = vmatprep.subr.mxu0 0.0
    %1873 = vmatpush1.msra.mxu0 0.0
    %1874 = vmatprep.subr.mxu0 0.0
    %1875 = vmatpush1.msra.mxu0 0.0
    %1876 = vmatprep.subr.mxu0 0.0
    %1877 = vmatpush1.msra.mxu0 0.0
    %1878 = vmatprep.subr.mxu0 0.0
    %1879 = vmatpush1.msra.mxu0 0.0
    %1880 = vmatprep.subr.mxu0 0.0
    %1881 = vmatpush1.msra.mxu0 0.0
    %1882 = vmatprep.subr.mxu0 0.0
    %1883 = vmatpush1.msra.mxu0 %v1564
    %1884 = vmatprep.subr.mxu0 0.0
    %1885 = vmatpush1.msra.mxu0 %v1563
    %1886 = vmatprep.subr.mxu0 0.0
    %1887 = vmatpush1.msra.mxu0 %v1562
    %1888 = vmatprep.subr.mxu0 0.0
    %1889 = vmatpush1.msra.mxu0 %v1561
    %1890 = vmatprep.subr.mxu0 0.0
    %1891 = vmatpush2.msra.mxu0 0.0
    %1892 = vmatprep.subr.mxu0 0.0
    %1893 = vmatpush2.msra.mxu0 0.0
    %1894 = vmatprep.subr.mxu0 0.0
    %1895 = vmatpush2.msra.mxu0 0.0
    %1896 = vmatprep.subr.mxu0 0.0
    %1897 = vmatpush2.msra.mxu0 0.0
    %1898 = vmatprep.subr.mxu0 0.0
    %1899 = vmatpush2.msra.mxu0 0.0
    %1900 = vmatprep.subr.mxu0 0.0
    %1901 = vmatpush2.msra.mxu0 0.0
    %1902 = vmatprep.subr.mxu0 0.0
    %1903 = vmatpush2.msra.mxu0 0.0
    %1904 = vmatprep.subr.mxu0 0.0
    %1905 = vmatpush2.msra.mxu0 0.0
    %1906 = vmatprep.subr.mxu0 0.0
    %1907 = vmatpush2.msra.mxu0 0.0
    %1908 = vmatprep.subr.mxu0 0.0
    %1909 = vmatpush2.msra.mxu0 0.0
    %1910 = vmatprep.subr.mxu0 0.0
    %1911 = vmatpush2.msra.mxu0 0.0
    %1912 = vmatprep.subr.mxu0 0.0
    %1913 = vmatpush2.msra.mxu0 0.0
    %1914 = vmatprep.subr.mxu0 0.0
    %1915 = vmatpush2.msra.mxu0 0.0
    %1916 = vmatprep.subr.mxu0 0.0
    %1917 = vmatpush2.msra.mxu0 0.0
    %1918 = vmatprep.subr.mxu0 0.0
    %1919 = vmatpush2.msra.mxu0 0.0
    %1920 = vmatprep.subr.mxu0 0.0
    %1921 = vmatpush2.msra.mxu0 0.0
    %1922 = vmatprep.mubr.f32.mxu0 0.0
    %1923 = vmatmul.mubr.f32.gmra.mxu0 %v1856
    %v1924 = vpop.f32.mrf.mxu0
    %v1925 = vadd.f32 0.0, %v1924
    %v1926 = vpop.f32.mrf.mxu0
    %1927 = vdwg.mxu0
    %v1929 = vrot.slane %v1925, 4
    %v1931 = vadd.f32 %v1649, %v1929
    %v1932 = vmul.f32 %v1931, %v629
    %v1933 = vtanh.pop %v1932
    %v1934 = vmul.f32 %v1933, %v629
    %v1935 = vadd.f32 %v1934, %v630
    %v1937 = vrot.slane %v1845, 6
    %v1939 = vmul.f32 %v1935, %v1937
    %1941 = vrot.lane.b32.xlu0 %v1935, 64
    %v1942 = vpop.permute.xlu0 %1941
    %v1944 = vmul.f32 %v1935, %v1942
    %1946 = vrot.lane.b32.xlu0 %v1944, 32
    %v1947 = vpop.permute.xlu0 %1946
    %v1949 = vadd.f32 %v1939, %v1947
    %v1950 = vtanh.pop %v1949
    %1952 = vrot.lane.b32.xlu0 %v1950, 64
    %v1953 = vpop.permute.xlu0 %1952
    %v1955 = vmul.f32 %v1935, %v1953
    %v1957 = vrot.slane %v1955, 4
    %1958 = vrot.lane.b32.xlu0 %v1957, 32
    %v1959 = vpop.permute.xlu0 %1958
    %v1960 = vsel %vm730, %v1959, 0
    %1962 = vmatprep.subr.mxu0 0.0
    %1963 = vmatpush1.msra.mxu0 0.0
    %1964 = vmatprep.subr.mxu0 0.0
    %1965 = vmatpush1.msra.mxu0 0.0
    %1966 = vmatprep.subr.mxu0 0.0
    %1967 = vmatpush1.msra.mxu0 0.0
    %1968 = vmatprep.subr.mxu0 0.0
    %1969 = vmatpush1.msra.mxu0 0.0
    %1970 = vmatprep.subr.mxu0 0.0
    %1971 = vmatpush1.msra.mxu0 0.0
    %1972 = vmatprep.subr.mxu0 0.0
    %1973 = vmatpush1.msra.mxu0 0.0
    %1974 = vmatprep.subr.mxu0 0.0
    %1975 = vmatpush1.msra.mxu0 0.0
    %1976 = vmatprep.subr.mxu0 0.0
    %1977 = vmatpush1.msra.mxu0 0.0
    %1978 = vmatprep.subr.mxu0 0.0
    %1979 = vmatpush1.msra.mxu0 0.0
    %1980 = vmatprep.subr.mxu0 0.0
    %1981 = vmatpush1.msra.mxu0 0.0
    %1982 = vmatprep.subr.mxu0 0.0
    %1983 = vmatpush1.msra.mxu0 0.0
    %1984 = vmatprep.subr.mxu0 0.0
    %1985 = vmatpush1.msra.mxu0 0.0
    %1986 = vmatprep.subr.mxu0 0.0
    %1987 = vmatpush1.msra.mxu0 %v1564
    %1988 = vmatprep.subr.mxu0 0.0
    %1989 = vmatpush1.msra.mxu0 %v1563
    %1990 = vmatprep.subr.mxu0 0.0
    %1991 = vmatpush1.msra.mxu0 %v1562
    %1992 = vmatprep.subr.mxu0 0.0
    %1993 = vmatpush1.msra.mxu0 %v1561
    %1994 = vmatprep.subr.mxu0 0.0
    %1995 = vmatpush2.msra.mxu0 0.0
    %1996 = vmatprep.subr.mxu0 0.0
    %1997 = vmatpush2.msra.mxu0 0.0
    %1998 = vmatprep.subr.mxu0 0.0
    %1999 = vmatpush2.msra.mxu0 0.0
    %2000 = vmatprep.subr.mxu0 0.0
    %2001 = vmatpush2.msra.mxu0 0.0
    %2002 = vmatprep.subr.mxu0 0.0
    %2003 = vmatpush2.msra.mxu0 0.0
    %2004 = vmatprep.subr.mxu0 0.0
    %2005 = vmatpush2.msra.mxu0 0.0
    %2006 = vmatprep.subr.mxu0 0.0
    %2007 = vmatpush2.msra.mxu0 0.0
    %2008 = vmatprep.subr.mxu0 0.0
    %2009 = vmatpush2.msra.mxu0 0.0
    %2010 = vmatprep.subr.mxu0 0.0
    %2011 = vmatpush2.msra.mxu0 0.0
    %2012 = vmatprep.subr.mxu0 0.0
    %2013 = vmatpush2.msra.mxu0 0.0
    %2014 = vmatprep.subr.mxu0 0.0
    %2015 = vmatpush2.msra.mxu0 0.0
    %2016 = vmatprep.subr.mxu0 0.0
    %2017 = vmatpush2.msra.mxu0 0.0
    %2018 = vmatprep.subr.mxu0 0.0
    %2019 = vmatpush2.msra.mxu0 0.0
    %2020 = vmatprep.subr.mxu0 0.0
    %2021 = vmatpush2.msra.mxu0 0.0
    %2022 = vmatprep.subr.mxu0 0.0
    %2023 = vmatpush2.msra.mxu0 0.0
    %2024 = vmatprep.subr.mxu0 0.0
    %2025 = vmatpush2.msra.mxu0 0.0
    %2026 = vmatprep.mubr.f32.mxu0 0.0
    %2027 = vmatmul.mubr.f32.gmra.mxu0 %v1960
    %v2028 = vpop.f32.mrf.mxu0
    %v2029 = vadd.f32 0.0, %v2028
    %v2030 = vpop.f32.mrf.mxu0
    %2031 = vdwg.mxu0
    %v2033 = vrot.slane %v2029, 2
    %v2035 = vadd.f32 %v1649, %v2033
    %v2036 = vmul.f32 %v2035, %v629
    %v2037 = vtanh.pop %v2036
    %v2038 = vmul.f32 %v2037, %v629
    %v2039 = vadd.f32 %v2038, %v630
    %v2041 = vrot.slane %v1949, 6
    %v2043 = vmul.f32 %v2039, %v2041
    %2045 = vrot.lane.b32.xlu0 %v2039, 64
    %v2046 = vpop.permute.xlu0 %2045
    %v2048 = vmul.f32 %v2039, %v2046
    %2050 = vrot.lane.b32.xlu0 %v2048, 32
    %v2051 = vpop.permute.xlu0 %2050
    %v2053 = vadd.f32 %v2043, %v2051
    %v2054 = vtanh.pop %v2053
    %2056 = vrot.lane.b32.xlu0 %v2054, 64
    %v2057 = vpop.permute.xlu0 %2056
    %v2059 = vmul.f32 %v2039, %v2057
    %v2061 = vrot.slane %v2059, 6
    %2062 = vrot.lane.b32.xlu0 %v2061, 32
    %v2063 = vpop.permute.xlu0 %2062
    %v2064 = vsel %vm730, %v2063, 0
    %2066 = vmatprep.subr.mxu0 0.0
    %2067 = vmatpush1.msra.mxu0 0.0
    %2068 = vmatprep.subr.mxu0 0.0
    %2069 = vmatpush1.msra.mxu0 0.0
    %2070 = vmatprep.subr.mxu0 0.0
    %2071 = vmatpush1.msra.mxu0 0.0
    %2072 = vmatprep.subr.mxu0 0.0
    %2073 = vmatpush1.msra.mxu0 0.0
    %2074 = vmatprep.subr.mxu0 0.0
    %2075 = vmatpush1.msra.mxu0 0.0
    %2076 = vmatprep.subr.mxu0 0.0
    %2077 = vmatpush1.msra.mxu0 0.0
    %2078 = vmatprep.subr.mxu0 0.0
    %2079 = vmatpush1.msra.mxu0 0.0
    %2080 = vmatprep.subr.mxu0 0.0
    %2081 = vmatpush1.msra.mxu0 0.0
    %2082 = vmatprep.subr.mxu0 0.0
    %2083 = vmatpush1.msra.mxu0 0.0
    %2084 = vmatprep.subr.mxu0 0.0
    %2085 = vmatpush1.msra.mxu0 0.0
    %2086 = vmatprep.subr.mxu0 0.0
    %2087 = vmatpush1.msra.mxu0 0.0
    %2088 = vmatprep.subr.mxu0 0.0
    %2089 = vmatpush1.msra.mxu0 0.0
    %2090 = vmatprep.subr.mxu0 0.0
    %2091 = vmatpush1.msra.mxu0 %v1564
    %2092 = vmatprep.subr.mxu0 0.0
    %2093 = vmatpush1.msra.mxu0 %v1563
    %2094 = vmatprep.subr.mxu0 0.0
    %2095 = vmatpush1.msra.mxu0 %v1562
    %2096 = vmatprep.subr.mxu0 0.0
    %2097 = vmatpush1.msra.mxu0 %v1561
    %2098 = vmatprep.subr.mxu0 0.0
    %2099 = vmatpush2.msra.mxu0 0.0
    %2100 = vmatprep.subr.mxu0 0.0
    %2101 = vmatpush2.msra.mxu0 0.0
    %2102 = vmatprep.subr.mxu0 0.0
    %2103 = vmatpush2.msra.mxu0 0.0
    %2104 = vmatprep.subr.mxu0 0.0
    %2105 = vmatpush2.msra.mxu0 0.0
    %2106 = vmatprep.subr.mxu0 0.0
    %2107 = vmatpush2.msra.mxu0 0.0
    %2108 = vmatprep.subr.mxu0 0.0
    %2109 = vmatpush2.msra.mxu0 0.0
    %2110 = vmatprep.subr.mxu0 0.0
    %2111 = vmatpush2.msra.mxu0 0.0
    %2112 = vmatprep.subr.mxu0 0.0
    %2113 = vmatpush2.msra.mxu0 0.0
    %2114 = vmatprep.subr.mxu0 0.0
    %2115 = vmatpush2.msra.mxu0 0.0
    %2116 = vmatprep.subr.mxu0 0.0
    %2117 = vmatpush2.msra.mxu0 0.0
    %2118 = vmatprep.subr.mxu0 0.0
    %2119 = vmatpush2.msra.mxu0 0.0
    %2120 = vmatprep.subr.mxu0 0.0
    %2121 = vmatpush2.msra.mxu0 0.0
    %2122 = vmatprep.subr.mxu0 0.0
    %2123 = vmatpush2.msra.mxu0 0.0
    %2124 = vmatprep.subr.mxu0 0.0
    %2125 = vmatpush2.msra.mxu0 0.0
    %2126 = vmatprep.subr.mxu0 0.0
    %2127 = vmatpush2.msra.mxu0 0.0
    %2128 = vmatprep.subr.mxu0 0.0
    %2129 = vmatpush2.msra.mxu0 0.0
    %2130 = vmatprep.mubr.f32.mxu0 0.0
    %2131 = vmatmul.mubr.f32.gmra.mxu0 %v2064
    %v2132 = vpop.f32.mrf.mxu0
    %v2133 = vadd.f32 0.0, %v2132
    %v2134 = vpop.f32.mrf.mxu0
    %2135 = vdwg.mxu0
    %v2136 = vadd.f32 %v1654, %v2133
    %v2137 = vmul.f32 %v2136, %v629
    %v2138 = vtanh.pop %v2137
    %v2139 = vmul.f32 %v2138, %v629
    %v2140 = vadd.f32 %v2139, %v630
    %v2142 = vrot.slane %v2053, 6
    %v2144 = vmul.f32 %v2140, %v2142
    %2146 = vrot.lane.b32.xlu0 %v2140, 64
    %v2147 = vpop.permute.xlu0 %2146
    %v2149 = vmul.f32 %v2140, %v2147
    %2151 = vrot.lane.b32.xlu0 %v2149, 32
    %v2152 = vpop.permute.xlu0 %2151
    %v2154 = vadd.f32 %v2144, %v2152
    %v2155 = vtanh.pop %v2154
    %2157 = vrot.lane.b32.xlu0 %v2155, 64
    %v2158 = vpop.permute.xlu0 %2157
    %v2160 = vmul.f32 %v2140, %v2158
    %2162 = vrot.lane.b32.xlu0 %v2160, 32
    %v2163 = vpop.permute.xlu0 %2162
    %v2164 = vsel %vm730, %v2163, 0
    %2166 = vmatprep.subr.mxu0 0.0
    %2167 = vmatpush1.msra.mxu0 0.0
    %2168 = vmatprep.subr.mxu0 0.0
    %2169 = vmatpush1.msra.mxu0 0.0
    %2170 = vmatprep.subr.mxu0 0.0
    %2171 = vmatpush1.msra.mxu0 0.0
    %2172 = vmatprep.subr.mxu0 0.0
    %2173 = vmatpush1.msra.mxu0 0.0
    %2174 = vmatprep.subr.mxu0 0.0
    %2175 = vmatpush1.msra.mxu0 0.0
    %2176 = vmatprep.subr.mxu0 0.0
    %2177 = vmatpush1.msra.mxu0 0.0
    %2178 = vmatprep.subr.mxu0 0.0
    %2179 = vmatpush1.msra.mxu0 0.0
    %2180 = vmatprep.subr.mxu0 0.0
    %2181 = vmatpush1.msra.mxu0 0.0
    %2182 = vmatprep.subr.mxu0 0.0
    %2183 = vmatpush1.msra.mxu0 0.0
    %2184 = vmatprep.subr.mxu0 0.0
    %2185 = vmatpush1.msra.mxu0 0.0
    %2186 = vmatprep.subr.mxu0 0.0
    %2187 = vmatpush1.msra.mxu0 0.0
    %2188 = vmatprep.subr.mxu0 0.0
    %2189 = vmatpush1.msra.mxu0 0.0
    %2190 = vmatprep.subr.mxu0 0.0
    %2191 = vmatpush1.msra.mxu0 %v1564
    %2192 = vmatprep.subr.mxu0 0.0
    %2193 = vmatpush1.msra.mxu0 %v1563
    %2194 = vmatprep.subr.mxu0 0.0
    %2195 = vmatpush1.msra.mxu0 %v1562
    %2196 = vmatprep.subr.mxu0 0.0
    %2197 = vmatpush1.msra.mxu0 %v1561
    %2198 = vmatprep.subr.mxu0 0.0
    %2199 = vmatpush2.msra.mxu0 0.0
    %2200 = vmatprep.subr.mxu0 0.0
    %2201 = vmatpush2.msra.mxu0 0.0
    %2202 = vmatprep.subr.mxu0 0.0
    %2203 = vmatpush2.msra.mxu0 0.0
    %2204 = vmatprep.subr.mxu0 0.0
    %2205 = vmatpush2.msra.mxu0 0.0
    %2206 = vmatprep.subr.mxu0 0.0
    %2207 = vmatpush2.msra.mxu0 0.0
    %2208 = vmatprep.subr.mxu0 0.0
    %2209 = vmatpush2.msra.mxu0 0.0
    %2210 = vmatprep.subr.mxu0 0.0
    %2211 = vmatpush2.msra.mxu0 0.0
    %2212 = vmatprep.subr.mxu0 0.0
    %2213 = vmatpush2.msra.mxu0 0.0
    %2214 = vmatprep.subr.mxu0 0.0
    %2215 = vmatpush2.msra.mxu0 0.0
    %2216 = vmatprep.subr.mxu0 0.0
    %2217 = vmatpush2.msra.mxu0 0.0
    %2218 = vmatprep.subr.mxu0 0.0
    %2219 = vmatpush2.msra.mxu0 0.0
    %2220 = vmatprep.subr.mxu0 0.0
    %2221 = vmatpush2.msra.mxu0 0.0
    %2222 = vmatprep.subr.mxu0 0.0
    %2223 = vmatpush2.msra.mxu0 0.0
    %2224 = vmatprep.subr.mxu0 0.0
    %2225 = vmatpush2.msra.mxu0 0.0
    %2226 = vmatprep.subr.mxu0 0.0
    %2227 = vmatpush2.msra.mxu0 0.0
    %2228 = vmatprep.subr.mxu0 0.0
    %2229 = vmatpush2.msra.mxu0 0.0
    %2230 = vmatprep.mubr.f32.mxu0 0.0
    %2231 = vmatmul.mubr.f32.gmra.mxu0 %v2164
    %v2232 = vpop.f32.mrf.mxu0
    %v2233 = vadd.f32 0.0, %v2232
    %v2234 = vpop.f32.mrf.mxu0
    %2235 = vdwg.mxu0
    %v2237 = vrot.slane %v2233, 6
    %v2239 = vadd.f32 %v1654, %v2237
    %v2240 = vmul.f32 %v2239, %v629
    %v2241 = vtanh.pop %v2240
    %v2242 = vmul.f32 %v2241, %v629
    %v2243 = vadd.f32 %v2242, %v630
    %v2245 = vrot.slane %v2154, 6
    %v2247 = vmul.f32 %v2243, %v2245
    %2249 = vrot.lane.b32.xlu0 %v2243, 64
    %v2250 = vpop.permute.xlu0 %2249
    %v2252 = vmul.f32 %v2243, %v2250
    %2254 = vrot.lane.b32.xlu0 %v2252, 32
    %v2255 = vpop.permute.xlu0 %2254
    %v2257 = vadd.f32 %v2247, %v2255
    %v2258 = vtanh.pop %v2257
    %2260 = vrot.lane.b32.xlu0 %v2258, 64
    %v2261 = vpop.permute.xlu0 %2260
    %v2263 = vmul.f32 %v2243, %v2261
    %v2265 = vrot.slane %v2263, 2
    %2266 = vrot.lane.b32.xlu0 %v2265, 32
    %v2267 = vpop.permute.xlu0 %2266
    %v2268 = vsel %vm730, %v2267, 0
    %2270 = vmatprep.subr.mxu0 0.0
    %2271 = vmatpush1.msra.mxu0 0.0
    %2272 = vmatprep.subr.mxu0 0.0
    %2273 = vmatpush1.msra.mxu0 0.0
    %2274 = vmatprep.subr.mxu0 0.0
    %2275 = vmatpush1.msra.mxu0 0.0
    %2276 = vmatprep.subr.mxu0 0.0
    %2277 = vmatpush1.msra.mxu0 0.0
    %2278 = vmatprep.subr.mxu0 0.0
    %2279 = vmatpush1.msra.mxu0 0.0
    %2280 = vmatprep.subr.mxu0 0.0
    %2281 = vmatpush1.msra.mxu0 0.0
    %2282 = vmatprep.subr.mxu0 0.0
    %2283 = vmatpush1.msra.mxu0 0.0
    %2284 = vmatprep.subr.mxu0 0.0
    %2285 = vmatpush1.msra.mxu0 0.0
    %2286 = vmatprep.subr.mxu0 0.0
    %2287 = vmatpush1.msra.mxu0 0.0
    %2288 = vmatprep.subr.mxu0 0.0
    %2289 = vmatpush1.msra.mxu0 0.0
    %2290 = vmatprep.subr.mxu0 0.0
    %2291 = vmatpush1.msra.mxu0 0.0
    %2292 = vmatprep.subr.mxu0 0.0
    %2293 = vmatpush1.msra.mxu0 0.0
    %2294 = vmatprep.subr.mxu0 0.0
    %2295 = vmatpush1.msra.mxu0 %v1564
    %2296 = vmatprep.subr.mxu0 0.0
    %2297 = vmatpush1.msra.mxu0 %v1563
    %2298 = vmatprep.subr.mxu0 0.0
    %2299 = vmatpush1.msra.mxu0 %v1562
    %2300 = vmatprep.subr.mxu0 0.0
    %2301 = vmatpush1.msra.mxu0 %v1561
    %2302 = vmatprep.subr.mxu0 0.0
    %2303 = vmatpush2.msra.mxu0 0.0
    %2304 = vmatprep.subr.mxu0 0.0
    %2305 = vmatpush2.msra.mxu0 0.0
    %2306 = vmatprep.subr.mxu0 0.0
    %2307 = vmatpush2.msra.mxu0 0.0
    %2308 = vmatprep.subr.mxu0 0.0
    %2309 = vmatpush2.msra.mxu0 0.0
    %2310 = vmatprep.subr.mxu0 0.0
    %2311 = vmatpush2.msra.mxu0 0.0
    %2312 = vmatprep.subr.mxu0 0.0
    %2313 = vmatpush2.msra.mxu0 0.0
    %2314 = vmatprep.subr.mxu0 0.0
    %2315 = vmatpush2.msra.mxu0 0.0
    %2316 = vmatprep.subr.mxu0 0.0
    %2317 = vmatpush2.msra.mxu0 0.0
    %2318 = vmatprep.subr.mxu0 0.0
    %2319 = vmatpush2.msra.mxu0 0.0
    %2320 = vmatprep.subr.mxu0 0.0
    %2321 = vmatpush2.msra.mxu0 0.0
    %2322 = vmatprep.subr.mxu0 0.0
    %2323 = vmatpush2.msra.mxu0 0.0
    %2324 = vmatprep.subr.mxu0 0.0
    %2325 = vmatpush2.msra.mxu0 0.0
    %2326 = vmatprep.subr.mxu0 0.0
    %2327 = vmatpush2.msra.mxu0 0.0
    %2328 = vmatprep.subr.mxu0 0.0
    %2329 = vmatpush2.msra.mxu0 0.0
    %2330 = vmatprep.subr.mxu0 0.0
    %2331 = vmatpush2.msra.mxu0 0.0
    %2332 = vmatprep.subr.mxu0 0.0
    %2333 = vmatpush2.msra.mxu0 0.0
    %2334 = vmatprep.mubr.f32.mxu0 0.0
    %2335 = vmatmul.mubr.f32.gmra.mxu0 %v2268
    %v2336 = vpop.f32.mrf.mxu0
    %v2337 = vadd.f32 0.0, %v2336
    %v2338 = vpop.f32.mrf.mxu0
    %2339 = vdwg.mxu0
    %v2341 = vrot.slane %v2337, 4
    %v2343 = vadd.f32 %v1654, %v2341
    %v2344 = vmul.f32 %v2343, %v629
    %v2345 = vtanh.pop %v2344
    %v2346 = vmul.f32 %v2345, %v629
    %v2347 = vadd.f32 %v2346, %v630
    %v2349 = vrot.slane %v2257, 6
    %v2351 = vmul.f32 %v2347, %v2349
    %2353 = vrot.lane.b32.xlu0 %v2347, 64
    %v2354 = vpop.permute.xlu0 %2353
    %v2356 = vmul.f32 %v2347, %v2354
    %2358 = vrot.lane.b32.xlu0 %v2356, 32
    %v2359 = vpop.permute.xlu0 %2358
    %v2361 = vadd.f32 %v2351, %v2359
    %v2362 = vtanh.pop %v2361
    %2364 = vrot.lane.b32.xlu0 %v2362, 64
    %v2365 = vpop.permute.xlu0 %2364
    %v2367 = vmul.f32 %v2347, %v2365
    %v2369 = vrot.slane %v2367, 4
    %2370 = vrot.lane.b32.xlu0 %v2369, 32
    %v2371 = vpop.permute.xlu0 %2370
    %v2372 = vsel %vm730, %v2371, 0
    %2374 = vmatprep.subr.mxu0 0.0
    %2375 = vmatpush1.msra.mxu0 0.0
    %2376 = vmatprep.subr.mxu0 0.0
    %2377 = vmatpush1.msra.mxu0 0.0
    %2378 = vmatprep.subr.mxu0 0.0
    %2379 = vmatpush1.msra.mxu0 0.0
    %2380 = vmatprep.subr.mxu0 0.0
    %2381 = vmatpush1.msra.mxu0 0.0
    %2382 = vmatprep.subr.mxu0 0.0
    %2383 = vmatpush1.msra.mxu0 0.0
    %2384 = vmatprep.subr.mxu0 0.0
    %2385 = vmatpush1.msra.mxu0 0.0
    %2386 = vmatprep.subr.mxu0 0.0
    %2387 = vmatpush1.msra.mxu0 0.0
    %2388 = vmatprep.subr.mxu0 0.0
    %2389 = vmatpush1.msra.mxu0 0.0
    %2390 = vmatprep.subr.mxu0 0.0
    %2391 = vmatpush1.msra.mxu0 0.0
    %2392 = vmatprep.subr.mxu0 0.0
    %2393 = vmatpush1.msra.mxu0 0.0
    %2394 = vmatprep.subr.mxu0 0.0
    %2395 = vmatpush1.msra.mxu0 0.0
    %2396 = vmatprep.subr.mxu0 0.0
    %2397 = vmatpush1.msra.mxu0 0.0
    %2398 = vmatprep.subr.mxu0 0.0
    %2399 = vmatpush1.msra.mxu0 %v1564
    %2400 = vmatprep.subr.mxu0 0.0
    %2401 = vmatpush1.msra.mxu0 %v1563
    %2402 = vmatprep.subr.mxu0 0.0
    %2403 = vmatpush1.msra.mxu0 %v1562
    %2404 = vmatprep.subr.mxu0 0.0
    %2405 = vmatpush1.msra.mxu0 %v1561
    %2406 = vmatprep.subr.mxu0 0.0
    %2407 = vmatpush2.msra.mxu0 0.0
    %2408 = vmatprep.subr.mxu0 0.0
    %2409 = vmatpush2.msra.mxu0 0.0
    %2410 = vmatprep.subr.mxu0 0.0
    %2411 = vmatpush2.msra.mxu0 0.0
    %2412 = vmatprep.subr.mxu0 0.0
    %2413 = vmatpush2.msra.mxu0 0.0
    %2414 = vmatprep.subr.mxu0 0.0
    %2415 = vmatpush2.msra.mxu0 0.0
    %2416 = vmatprep.subr.mxu0 0.0
    %2417 = vmatpush2.msra.mxu0 0.0
    %2418 = vmatprep.subr.mxu0 0.0
    %2419 = vmatpush2.msra.mxu0 0.0
    %2420 = vmatprep.subr.mxu0 0.0
    %2421 = vmatpush2.msra.mxu0 0.0
    %2422 = vmatprep.subr.mxu0 0.0
    %2423 = vmatpush2.msra.mxu0 0.0
    %2424 = vmatprep.subr.mxu0 0.0
    %2425 = vmatpush2.msra.mxu0 0.0
    %2426 = vmatprep.subr.mxu0 0.0
    %2427 = vmatpush2.msra.mxu0 0.0
    %2428 = vmatprep.subr.mxu0 0.0
    %2429 = vmatpush2.msra.mxu0 0.0
    %2430 = vmatprep.subr.mxu0 0.0
    %2431 = vmatpush2.msra.mxu0 0.0
    %2432 = vmatprep.subr.mxu0 0.0
    %2433 = vmatpush2.msra.mxu0 0.0
    %2434 = vmatprep.subr.mxu0 0.0
    %2435 = vmatpush2.msra.mxu0 0.0
    %2436 = vmatprep.subr.mxu0 0.0
    %2437 = vmatpush2.msra.mxu0 0.0
    %2438 = vmatprep.mubr.f32.mxu0 0.0
    %2439 = vmatmul.mubr.f32.gmra.mxu0 %v2372
    %v2440 = vpop.f32.mrf.mxu0
    %v2441 = vadd.f32 0.0, %v2440
    %v2442 = vpop.f32.mrf.mxu0
    %2443 = vdwg.mxu0
    %v2445 = vrot.slane %v2441, 2
    %v2447 = vadd.f32 %v1654, %v2445
    %v2448 = vmul.f32 %v2447, %v629
    %v2449 = vtanh.pop %v2448
    %v2450 = vmul.f32 %v2449, %v629
    %v2451 = vadd.f32 %v2450, %v630
    %v2453 = vrot.slane %v2361, 6
    %v2455 = vmul.f32 %v2451, %v2453
    %2457 = vrot.lane.b32.xlu0 %v2451, 64
    %v2458 = vpop.permute.xlu0 %2457
    %v2460 = vmul.f32 %v2451, %v2458
    %2462 = vrot.lane.b32.xlu0 %v2460, 32
    %v2463 = vpop.permute.xlu0 %2462
    %v2465 = vadd.f32 %v2455, %v2463
    %v2466 = vtanh.pop %v2465
    %2468 = vrot.lane.b32.xlu0 %v2466, 64
    %v2469 = vpop.permute.xlu0 %2468
    %v2471 = vmul.f32 %v2451, %v2469
    %2473 = vrot.lane.b32.xlu0 %v1853, 64
    %v2474 = vpop.permute.xlu0 %2473
    %2476 = vrot.lane.b32.xlu0 %v1957, 96
    %v2477 = vpop.permute.xlu0 %2476
    %2481 = vrot.lane.b32.xlu0 %v2265, 64
    %v2482 = vpop.permute.xlu0 %2481
    %2484 = vrot.lane.b32.xlu0 %v2369, 96
    %v2485 = vpop.permute.xlu0 %2484
    %v2488 = vrot.slane %v2471, 6
    %v2490 = vsel %vm730, %v1751, %v2474
    %vm2491 = vcmask 523264
    %v2492 = vsel %vm2491, %v2490, %v2477
    %v2493 = vsel %vm363, %v2492, %v2061
    %v2494 = vsel %vm730, %v2163, %v2482
    %v2495 = vsel %vm2491, %v2494, %v2485
    %v2496 = vsel %vm363, %v2495, %v2488
    %v2497 = vld [vmem:[%s17] sm:$0xff]
    %v2498 = vld [vmem:[%s17 + $0x8] sm:$0xff]
    %v2499 = vld [vmem:[%s17 + $0x10] sm:$0xff]
    %v2500 = vld [vmem:[%s17 + $0x18] sm:$0xff]
    %v2501 = vld [vmem:[%s17 + $0x20] sm:$0xff]
    %v2502 = vld [vmem:[%s17 + $0x28] sm:$0xff]
    %v2503 = vld [vmem:[%s17 + $0x30] sm:$0xff]
    %v2504 = vld [vmem:[%s17 + $0x38] sm:$0xff]
    %v2505 = vld [vmem:[%s17 + $0x40] sm:$0xff]
    %v2506 = vld [vmem:[%s17 + $0x48] sm:$0xff]
    %v2507 = vld [vmem:[%s17 + $0x50] sm:$0xff]
    %v2508 = vld [vmem:[%s17 + $0x58] sm:$0xff]
    %v2509 = vld [vmem:[%s17 + $0x60] sm:$0xff]
    %v2510 = vld [vmem:[%s17 + $0x68] sm:$0xff]
    %v2511 = vld [vmem:[%s17 + $0x70] sm:$0xff]
    %v2512 = vld [vmem:[%s17 + $0x78] sm:$0xff]
    %v2513 = vld [vmem:[%s17 + $0x80] sm:$0xff]
    %v2514 = vld [vmem:[%s17 + $0x88] sm:$0xff]
    %v2515 = vld [vmem:[%s17 + $0x90] sm:$0xff]
    %v2516 = vld [vmem:[%s17 + $0x98] sm:$0xff]
    %v2517 = vld [vmem:[%s17 + $0xa0] sm:$0xff]
    %v2518 = vld [vmem:[%s17 + $0xa8] sm:$0xff]
    %v2519 = vld [vmem:[%s17 + $0xb0] sm:$0xff]
    %v2520 = vld [vmem:[%s17 + $0xb8] sm:$0xff]
    %v2521 = vld [vmem:[%s17 + $0xc0] sm:$0xff]
    %v2522 = vld [vmem:[%s17 + $0xc8] sm:$0xff]
    %v2523 = vld [vmem:[%s17 + $0xd0] sm:$0xff]
    %v2524 = vld [vmem:[%s17 + $0xd8] sm:$0xff]
    %v2525 = vld [vmem:[%s17 + $0xe0] sm:$0xff]
    %v2526 = vld [vmem:[%s17 + $0xe8] sm:$0xff]
    %v2527 = vld [vmem:[%s17 + $0xf0] sm:$0xff]
    %v2528 = vld [vmem:[%s17 + $0xf8] sm:$0xff]
    %2529 = vmatprep.subr.mxu0 0.0
    %2530 = vmatpush1.msra.mxu0 %v2512
    %2531 = vmatprep.subr.mxu0 0.0
    %2532 = vmatpush1.msra.mxu0 %v2511
    %2533 = vmatprep.subr.mxu0 0.0
    %2534 = vmatpush1.msra.mxu0 %v2510
    %2535 = vmatprep.subr.mxu0 0.0
    %2536 = vmatpush1.msra.mxu0 %v2509
    %2537 = vmatprep.subr.mxu0 0.0
    %2538 = vmatpush1.msra.mxu0 %v2508
    %2539 = vmatprep.subr.mxu0 0.0
    %2540 = vmatpush1.msra.mxu0 %v2507
    %2541 = vmatprep.subr.mxu0 0.0
    %2542 = vmatpush1.msra.mxu0 %v2506
    %2543 = vmatprep.subr.mxu0 0.0
    %2544 = vmatpush1.msra.mxu0 %v2505
    %2545 = vmatprep.subr.mxu0 0.0
    %2546 = vmatpush1.msra.mxu0 %v2504
    %2547 = vmatprep.subr.mxu0 0.0
    %2548 = vmatpush1.msra.mxu0 %v2503
    %2549 = vmatprep.subr.mxu0 0.0
    %2550 = vmatpush1.msra.mxu0 %v2502
    %2551 = vmatprep.subr.mxu0 0.0
    %2552 = vmatpush1.msra.mxu0 %v2501
    %2553 = vmatprep.subr.mxu0 0.0
    %2554 = vmatpush1.msra.mxu0 %v2500
    %2555 = vmatprep.subr.mxu0 0.0
    %2556 = vmatpush1.msra.mxu0 %v2499
    %2557 = vmatprep.subr.mxu0 0.0
    %2558 = vmatpush1.msra.mxu0 %v2498
    %2559 = vmatprep.subr.mxu0 0.0
    %2560 = vmatpush1.msra.mxu0 %v2497
    %2561 = vmatprep.subr.mxu0 0.0
    %2562 = vmatpush2.msra.mxu0 %v2528
    %2563 = vmatprep.subr.mxu0 0.0
    %2564 = vmatpush2.msra.mxu0 %v2527
    %2565 = vmatprep.subr.mxu0 0.0
    %2566 = vmatpush2.msra.mxu0 %v2526
    %2567 = vmatprep.subr.mxu0 0.0
    %2568 = vmatpush2.msra.mxu0 %v2525
    %2569 = vmatprep.subr.mxu0 0.0
    %2570 = vmatpush2.msra.mxu0 %v2524
    %2571 = vmatprep.subr.mxu0 0.0
    %2572 = vmatpush2.msra.mxu0 %v2523
    %2573 = vmatprep.subr.mxu0 0.0
    %2574 = vmatpush2.msra.mxu0 %v2522
    %2575 = vmatprep.subr.mxu0 0.0
    %2576 = vmatpush2.msra.mxu0 %v2521
    %2577 = vmatprep.subr.mxu0 0.0
    %2578 = vmatpush2.msra.mxu0 %v2520
    %2579 = vmatprep.subr.mxu0 0.0
    %2580 = vmatpush2.msra.mxu0 %v2519
    %2581 = vmatprep.subr.mxu0 0.0
    %2582 = vmatpush2.msra.mxu0 %v2518
    %2583 = vmatprep.subr.mxu0 0.0
    %2584 = vmatpush2.msra.mxu0 %v2517
    %2585 = vmatprep.subr.mxu0 0.0
    %2586 = vmatpush2.msra.mxu0 %v2516
    %2587 = vmatprep.subr.mxu0 0.0
    %2588 = vmatpush2.msra.mxu0 %v2515
    %2589 = vmatprep.subr.mxu0 0.0
    %2590 = vmatpush2.msra.mxu0 %v2514
    %2591 = vmatprep.subr.mxu0 0.0
    %2592 = vmatpush2.msra.mxu0 %v2513
    %2593 = vmatprep.mubr.f32.mxu0 %v2496
    %2594 = vmatmul.mubr.f32.gmra.mxu0 %v2493
    %v2595 = vpop.f32.mrf.mxu0
    %v2596 = vadd.f32 0.0, %v2595
    %v2597 = vpop.f32.mrf.mxu0
    %2598 = vdwg.mxu0
    %v2599 = vadd.f32 %v621, %v2596
    %vm2600 = vcmask 58368
    %2601 = vst.msk [vmem:[#allocation13] sm:$0x3] %vm2600, %v2599
    %v2602 = vsub.f32 0.0, %v2599
    %v2603 = vmul.f32 %v2602, 1.442695
    %v2604 = vpow.pop %v2603
    %v2605 = vadd.f32 %v2604, 1.0
    %v2606 = vrcp.pop %v2605
    %v2607 = vmul.f32 1.0, %v2606
    %2608 = vst.msk [vmem:[#allocation14] sm:$0x3] %vm2600, %v2607
    // Predicated region
    $region106: #{tpu_custom_call.1} parent=1 // pred_check
      _
    $region107: #{tpu_custom_call.1} parent=1 // pred_check_branch
      %2610 = sbr.rel (0) target = $region109
    $region108: #{tpu_custom_call.1} parent=1 // pred_region
      %s2612 = ssub.s32 32, 32
      %2613 = vsyncadd [#allocation4], %s2612
      %s2615 = sshll.u32 [#allocation13], 4
      %s2616 = int_to_ptr.vmem [resolvable:$true] %s2615
      %2618 = dma.vmem_to_hbm [thread:$0]  %s2616, 32, %s20, [#allocation4]
    $region109: #{tpu_custom_call.1} parent=1 // pred_fallthru
      _
    // Predicated region
    $region110: #{tpu_custom_call.1} parent=1 // pred_check
      _
    $region111: #{tpu_custom_call.1} parent=1 // pred_check_branch
      %2620 = sbr.rel (0) target = $region113
    $region112: #{tpu_custom_call.1} parent=1 // pred_region
      %s2622 = ssub.s32 32, 32
      %2623 = vsyncadd [#allocation15], %s2622
      %s2625 = sshll.u32 [#allocation14], 4
      %s2626 = int_to_ptr.vmem [resolvable:$true] %s2625
      %2628 = dma.vmem_to_hbm [thread:$0]  %s2626, 32, %s21, [#allocation15]
    $region113: #{tpu_custom_call.1} parent=1 // pred_fallthru
      _
    // Predicated region
    $region114: #{tpu_custom_call.1} parent=1 // pred_check
      _
    $region115: #{tpu_custom_call.1} parent=1 // pred_check_branch
      %2630 = sbr.rel (0) target = $region117
    $region116: #{tpu_custom_call.1} parent=1 // pred_region
      %2631 = dma.done [#allocation4], 32
    $region117: #{tpu_custom_call.1} parent=1 // pred_fallthru
      _
    // Predicated region
    $region118: #{tpu_custom_call.1} parent=1 // pred_check
      _
    $region119: #{tpu_custom_call.1} parent=1 // pred_check_branch
      %2633 = sbr.rel (0) target = $region121
    $region120: #{tpu_custom_call.1} parent=1 // pred_region
      %2634 = dma.done [#allocation15], 32
    $region121: #{tpu_custom_call.1} parent=1 // pred_fallthru
      _
    %2635 = vsyncpa [#allocation3], 1
    %2636 = vsyncpa [#allocation6], 1
    %2637 = vsyncpa [#allocation9], 1
    %2638 = vsyncpa [#allocation12], 1
    %2639 = vsyncpa [#allocation4], 1
    %2640 = vsyncpa [#allocation15], 1

</llo_original>
